<compile_context>
chip_gen: v6e
topology: v6e:2x2x1
jax: 0.10.0
libtpu: 0.0.40
codegen_flags: <defaults>
</compile_context>

<pallas_src>
import math

import jax
import jax.numpy as jnp
from jax import lax
from jax.experimental import pallas as pl
from jax.experimental.pallas import tpu as pltpu

K = 3      # conv kernel size
PAD = 128  # lane padding on each side of the flat image in the staging buffer


def sample_cnn_forward(x_nchw, w1, b1, w2, b2):
    """x_nchw: (N, Cin, H, W) f32. w*: PyTorch layout (Cout, Cin, 3, 3), b*: (Cout,)."""
    N, Cin, H, W = x_nchw.shape
    Cout = w1.shape[0]
    assert Cin == Cout, "staging scratch is shared between the two convs"
    HW = H * W
    assert HW % 128 == 0, "lane-aligned flat image assumed"
    assert PAD >= W + 1

    # ---- glue (all free / tiny): contiguous reshape, weight re-layout, masks
    x_flat = x_nchw.reshape(N, Cin, HW)

    def to_taps(w):
        # (Cout, Cin, 3, 3) -> (9, Cout, Cin), tap index t = dy*3 + dx
        return jnp.transpose(w, (2, 3, 0, 1)).reshape(K * K, w.shape[0], w.shape[1])

    w1_t, w2_t = to_taps(w1), to_taps(w2)
    b1c, b2c = b1.reshape(Cout, 1), b2.reshape(Cout, 1)

    # Column masks over the flat OUTPUT lanes: row 0 kills c == 0 (the dx == 0
    # tap group reads column -1), row 1 kills c == W-1 (dx == 2 reads column W).
    col = jnp.arange(HW) % W
    masks = jnp.stack([(col != 0), (col != W - 1)]).astype(x_nchw.dtype)  # (2, HW)

    L_ext = 2 * PAD + HW

    def kernel(x_ref, w1_ref, b1_ref, w2_ref, b2_ref, m_ref, o_ref, ext_ref):
        # Zero the pad stripes (vertical out-of-range tap reads land here).
        # Interior is fully overwritten below; pads are never written, but with
        # a parallel grid each core must establish its own zeros every step.
        ext_ref[:, :PAD] = jnp.zeros((Cout, PAD), jnp.float32)
        ext_ref[:, PAD + HW:] = jnp.zeros((Cout, PAD), jnp.float32)

        m_left = m_ref[0:1, :]
        m_right = m_ref[1:2, :]

        def conv3x3(w_ref, b_ref):
            out = None
            for dx in range(K):
                g = None
                for dy in range(K):
                    t = dy * K + dx
                    s = PAD + (dy - 1) * W + (dx - 1)
                    d = jnp.dot(w_ref[t], ext_ref[:, s:s + HW],
                                preferred_element_type=jnp.float32)
                    g = d if g is None else g + d
                if dx == 0:
                    g = g * m_left        # kill wrapped reads of column -1
                elif dx == K - 1:
                    g = g * m_right       # kill wrapped reads of column W
                out = g if out is None else out + g
            return out + b_ref[...]

        # ---- conv1 + ReLU ----
        ext_ref[:, PAD:PAD + HW] = x_ref[0].astype(jnp.float32)
        y1 = jnp.maximum(conv3x3(w1_ref, b1_ref), 0.0)

        # ---- conv2 (reuse staging buffer; pad stripes are still zero) ----
        ext_ref[:, PAD:PAD + HW] = y1
        o_ref[0] = conv3x3(w2_ref, b2_ref).astype(o_ref.dtype)

    out_flat = pl.pallas_call(
        kernel,
        out_shape=jax.ShapeDtypeStruct((N, Cout, HW), x_nchw.dtype),
        grid_spec=pltpu.PrefetchScalarGridSpec(
            num_scalar_prefetch=0,
            grid=(N,),
            in_specs=[
                pl.BlockSpec((1, Cin, HW), lambda n: (n, 0, 0)),
                pl.BlockSpec((K * K, Cout, Cin), lambda n: (0, 0, 0)),
                pl.BlockSpec((Cout, 1), lambda n: (0, 0)),
                pl.BlockSpec((K * K, Cout, Cout), lambda n: (0, 0, 0)),
                pl.BlockSpec((Cout, 1), lambda n: (0, 0)),
                pl.BlockSpec((2, HW), lambda n: (0, 0)),
            ],
            out_specs=pl.BlockSpec((1, Cout, HW), lambda n: (n, 0, 0)),
            scratch_shapes=[pltpu.VMEM((Cout, L_ext), jnp.float32)],
        ),
        compiler_params=pltpu.CompilerParams(
            dimension_semantics=("parallel",)),
    )(x_flat, w1_t, b1c, w2_t, b2c, masks)

    # Free contiguous un-flatten; output is already interior-only NCHW.
    return out_flat.reshape(N, Cout, H, W)


if __name__ == "__main__":
    key = jax.random.PRNGKey(0)
    kx, k1, kb1, k2, kb2 = jax.random.split(key, 5)

    N, Cin, H, W = 2, 32, 16, 16   # Cin fixed at 32 by the module
    Cout = 32

    x = jax.random.normal(kx, (N, Cin, H, W), jnp.float32)

    # Deterministic init mirroring PyTorch Conv2d parameter shapes / scale.
    fan_in = Cin * K * K
    bound = 1.0 / math.sqrt(fan_in)
    w1 = jax.random.uniform(k1, (Cout, Cin, K, K), jnp.float32, -bound, bound)
    b1 = jax.random.uniform(kb1, (Cout,), jnp.float32, -bound, bound)
    w2 = jax.random.uniform(k2, (Cout, Cout, K, K), jnp.float32, -bound, bound)
    b2 = jax.random.uniform(kb2, (Cout,), jnp.float32, -bound, bound)

    out = jax.block_until_ready(sample_cnn_forward(x, w1, b1, w2, b2))

    # Pure-JAX reference (lax.conv) for correctness.
    def ref(x, w1, b1, w2, b2):
        dn = ("NCHW", "OIHW", "NCHW")
        y = lax.conv_general_dilated(x, w1, (1, 1), ((1, 1), (1, 1)),
                                     dimension_numbers=dn)
        y = jnp.maximum(y + b1[None, :, None, None], 0.0)
        y = lax.conv_general_dilated(y, w2, (1, 1), ((1, 1), (1, 1)),
                                     dimension_numbers=dn)
        return y + b2[None, :, None, None]

    expected = ref(x, w1, b1, w2, b2)
    assert out.shape == (N, Cout, H, W), out.shape
    assert jnp.allclose(out, expected, atol=1e-3, rtol=1e-3)
    print("KERNEL_OK")
</pallas_src>

<mosaic_0001>
module attributes {stable_mosaic.version = 11 : i64} {
  func.func @kernel(%arg0: i32, %arg1: memref<1x32x256xf32, #tpu.memory_space<vmem>>, %arg2: memref<9x32x32xf32, #tpu.memory_space<vmem>>, %arg3: memref<32x1xf32, #tpu.memory_space<vmem>>, %arg4: memref<9x32x32xf32, #tpu.memory_space<vmem>>, %arg5: memref<32x1xf32, #tpu.memory_space<vmem>>, %arg6: memref<2x256xf32, #tpu.memory_space<vmem>>, %arg7: memref<1x32x256xf32, #tpu.memory_space<vmem>>, %arg8: memref<32x512xf32, #tpu.memory_space<vmem>>) attributes {dimension_semantics = [#tpu.dimension_semantics<parallel>], iteration_bounds = array<i64: 2>, scalar_prefetch = 0 : i64, scratch_operands = 1 : i64, tpu.core_type = #tpu.core_type<tc>, window_params = [{transform_indices = @transform_0, window_bounds = array<i64: 1, 32, 256>}, {pipeline_mode = #tpu.pipeline_mode<synchronous>, transform_indices = @transform_1, window_bounds = array<i64: 9, 32, 32>}, {pipeline_mode = #tpu.pipeline_mode<synchronous>, transform_indices = @transform_2, window_bounds = array<i64: 32, 1>}, {pipeline_mode = #tpu.pipeline_mode<synchronous>, transform_indices = @transform_3, window_bounds = array<i64: 9, 32, 32>}, {pipeline_mode = #tpu.pipeline_mode<synchronous>, transform_indices = @transform_4, window_bounds = array<i64: 32, 1>}, {pipeline_mode = #tpu.pipeline_mode<synchronous>, transform_indices = @transform_5, window_bounds = array<i64: 2, 256>}, {transform_indices = @transform_6, window_bounds = array<i64: 1, 32, 256>}]} {
    %cst = arith.constant 0.000000e+00 : f32
    %0 = vector.broadcast %cst : f32 to vector<32x128xf32>
    %c0 = arith.constant 0 : index
    %c0_0 = arith.constant 0 : index
    %1 = vector.load %arg8[%c0, %c0_0] : memref<32x512xf32, #tpu.memory_space<vmem>>, vector<32x128xf32>
    tpu.vector_store %arg8[%c0, %c0_0], %0 {strides = array<i32>} : memref<32x512xf32, #tpu.memory_space<vmem>>, vector<32x128xf32>,
    %cst_1 = arith.constant 0.000000e+00 : f32
    %2 = vector.broadcast %cst_1 : f32 to vector<32x128xf32>
    %c0_2 = arith.constant 0 : index
    %c384 = arith.constant 384 : index
    %3 = vector.load %arg8[%c0_2, %c384] : memref<32x512xf32, #tpu.memory_space<vmem>>, vector<32x128xf32>
    tpu.vector_store %arg8[%c0_2, %c384], %2 {strides = array<i32>} : memref<32x512xf32, #tpu.memory_space<vmem>>, vector<32x128xf32>,
    %c0_3 = arith.constant 0 : index
    %c0_4 = arith.constant 0 : index
    %4 = vector.load %arg6[%c0_3, %c0_4] : memref<2x256xf32, #tpu.memory_space<vmem>>, vector<1x256xf32>
    %c1 = arith.constant 1 : index
    %c0_5 = arith.constant 0 : index
    %5 = vector.load %arg6[%c1, %c0_5] : memref<2x256xf32, #tpu.memory_space<vmem>>, vector<1x256xf32>
    %c0_6 = arith.constant 0 : index
    %c0_7 = arith.constant 0 : index
    %c0_8 = arith.constant 0 : index
    %6 = vector.load %arg1[%c0_6, %c0_7, %c0_8] : memref<1x32x256xf32, #tpu.memory_space<vmem>>, vector<1x32x256xf32>
    %7 = vector.shape_cast %6 : vector<1x32x256xf32> to vector<32x256xf32>
    %c0_9 = arith.constant 0 : index
    %c128 = arith.constant 128 : index
    %8 = vector.load %arg8[%c0_9, %c128] : memref<32x512xf32, #tpu.memory_space<vmem>>, vector<32x256xf32>
    tpu.vector_store %arg8[%c0_9, %c128], %7 {strides = array<i32>} : memref<32x512xf32, #tpu.memory_space<vmem>>, vector<32x256xf32>,
    %c0_10 = arith.constant 0 : index
    %c0_11 = arith.constant 0 : index
    %c0_12 = arith.constant 0 : index
    %9 = vector.load %arg2[%c0_10, %c0_11, %c0_12] : memref<9x32x32xf32, #tpu.memory_space<vmem>>, vector<1x32x32xf32>
    %10 = vector.shape_cast %9 : vector<1x32x32xf32> to vector<32x32xf32>
    %c0_13 = arith.constant 0 : index
    %c111 = arith.constant 111 : index
    %11 = vector.load %arg8[%c0_13, %c111] : memref<32x512xf32, #tpu.memory_space<vmem>>, vector<32x256xf32>
    %cst_14 = arith.constant dense<0.000000e+00> : vector<32x256xf32>
    %12 = tpu.matmul %10, %11, %cst_14 {dimension_numbers = #tpu.dot_dimension_numbers<[1], [0], [0], [1], [0, 0, 1, 1], [], []>} : vector<32x32xf32>, vector<32x256xf32>, vector<32x256xf32> -> vector<32x256xf32>
    %c3 = arith.constant 3 : index
    %c0_15 = arith.constant 0 : index
    %c0_16 = arith.constant 0 : index
    %13 = vector.load %arg2[%c3, %c0_15, %c0_16] : memref<9x32x32xf32, #tpu.memory_space<vmem>>, vector<1x32x32xf32>
    %14 = vector.shape_cast %13 : vector<1x32x32xf32> to vector<32x32xf32>
    %c0_17 = arith.constant 0 : index
    %c127 = arith.constant 127 : index
    %15 = vector.load %arg8[%c0_17, %c127] : memref<32x512xf32, #tpu.memory_space<vmem>>, vector<32x256xf32>
    %cst_18 = arith.constant dense<0.000000e+00> : vector<32x256xf32>
    %16 = tpu.matmul %14, %15, %cst_18 {dimension_numbers = #tpu.dot_dimension_numbers<[1], [0], [0], [1], [0, 0, 1, 1], [], []>} : vector<32x32xf32>, vector<32x256xf32>, vector<32x256xf32> -> vector<32x256xf32>
    %17 = arith.addf %12, %16 : vector<32x256xf32>
    %c6 = arith.constant 6 : index
    %c0_19 = arith.constant 0 : index
    %c0_20 = arith.constant 0 : index
    %18 = vector.load %arg2[%c6, %c0_19, %c0_20] : memref<9x32x32xf32, #tpu.memory_space<vmem>>, vector<1x32x32xf32>
    %19 = vector.shape_cast %18 : vector<1x32x32xf32> to vector<32x32xf32>
    %c0_21 = arith.constant 0 : index
    %c143 = arith.constant 143 : index
    %20 = vector.load %arg8[%c0_21, %c143] : memref<32x512xf32, #tpu.memory_space<vmem>>, vector<32x256xf32>
    %cst_22 = arith.constant dense<0.000000e+00> : vector<32x256xf32>
    %21 = tpu.matmul %19, %20, %cst_22 {dimension_numbers = #tpu.dot_dimension_numbers<[1], [0], [0], [1], [0, 0, 1, 1], [], []>} : vector<32x32xf32>, vector<32x256xf32>, vector<32x256xf32> -> vector<32x256xf32>
    %22 = arith.addf %17, %21 : vector<32x256xf32>
    %23 = vector.broadcast %4 : vector<1x256xf32> to vector<32x256xf32>
    %24 = arith.mulf %22, %23 : vector<32x256xf32>
    %c1_23 = arith.constant 1 : index
    %c0_24 = arith.constant 0 : index
    %c0_25 = arith.constant 0 : index
    %25 = vector.load %arg2[%c1_23, %c0_24, %c0_25] : memref<9x32x32xf32, #tpu.memory_space<vmem>>, vector<1x32x32xf32>
    %26 = vector.shape_cast %25 : vector<1x32x32xf32> to vector<32x32xf32>
    %c0_26 = arith.constant 0 : index
    %c112 = arith.constant 112 : index
    %27 = vector.load %arg8[%c0_26, %c112] : memref<32x512xf32, #tpu.memory_space<vmem>>, vector<32x256xf32>
    %cst_27 = arith.constant dense<0.000000e+00> : vector<32x256xf32>
    %28 = tpu.matmul %26, %27, %cst_27 {dimension_numbers = #tpu.dot_dimension_numbers<[1], [0], [0], [1], [0, 0, 1, 1], [], []>} : vector<32x32xf32>, vector<32x256xf32>, vector<32x256xf32> -> vector<32x256xf32>
    %c4 = arith.constant 4 : index
    %c0_28 = arith.constant 0 : index
    %c0_29 = arith.constant 0 : index
    %29 = vector.load %arg2[%c4, %c0_28, %c0_29] : memref<9x32x32xf32, #tpu.memory_space<vmem>>, vector<1x32x32xf32>
    %30 = vector.shape_cast %29 : vector<1x32x32xf32> to vector<32x32xf32>
    %c0_30 = arith.constant 0 : index
    %c128_31 = arith.constant 128 : index
    %31 = vector.load %arg8[%c0_30, %c128_31] : memref<32x512xf32, #tpu.memory_space<vmem>>, vector<32x256xf32>
    %cst_32 = arith.constant dense<0.000000e+00> : vector<32x256xf32>
    %32 = tpu.matmul %30, %31, %cst_32 {dimension_numbers = #tpu.dot_dimension_numbers<[1], [0], [0], [1], [0, 0, 1, 1], [], []>} : vector<32x32xf32>, vector<32x256xf32>, vector<32x256xf32> -> vector<32x256xf32>
    %33 = arith.addf %28, %32 : vector<32x256xf32>
    %c7 = arith.constant 7 : index
    %c0_33 = arith.constant 0 : index
    %c0_34 = arith.constant 0 : index
    %34 = vector.load %arg2[%c7, %c0_33, %c0_34] : memref<9x32x32xf32, #tpu.memory_space<vmem>>, vector<1x32x32xf32>
    %35 = vector.shape_cast %34 : vector<1x32x32xf32> to vector<32x32xf32>
    %c0_35 = arith.constant 0 : index
    %c144 = arith.constant 144 : index
    %36 = vector.load %arg8[%c0_35, %c144] : memref<32x512xf32, #tpu.memory_space<vmem>>, vector<32x256xf32>
    %cst_36 = arith.constant dense<0.000000e+00> : vector<32x256xf32>
    %37 = tpu.matmul %35, %36, %cst_36 {dimension_numbers = #tpu.dot_dimension_numbers<[1], [0], [0], [1], [0, 0, 1, 1], [], []>} : vector<32x32xf32>, vector<32x256xf32>, vector<32x256xf32> -> vector<32x256xf32>
    %38 = arith.addf %33, %37 : vector<32x256xf32>
    %39 = arith.addf %24, %38 : vector<32x256xf32>
    %c2 = arith.constant 2 : index
    %c0_37 = arith.constant 0 : index
    %c0_38 = arith.constant 0 : index
    %40 = vector.load %arg2[%c2, %c0_37, %c0_38] : memref<9x32x32xf32, #tpu.memory_space<vmem>>, vector<1x32x32xf32>
    %41 = vector.shape_cast %40 : vector<1x32x32xf32> to vector<32x32xf32>
    %c0_39 = arith.constant 0 : index
    %c113 = arith.constant 113 : index
    %42 = vector.load %arg8[%c0_39, %c113] : memref<32x512xf32, #tpu.memory_space<vmem>>, vector<32x256xf32>
    %cst_40 = arith.constant dense<0.000000e+00> : vector<32x256xf32>
    %43 = tpu.matmul %41, %42, %cst_40 {dimension_numbers = #tpu.dot_dimension_numbers<[1], [0], [0], [1], [0, 0, 1, 1], [], []>} : vector<32x32xf32>, vector<32x256xf32>, vector<32x256xf32> -> vector<32x256xf32>
    %c5 = arith.constant 5 : index
    %c0_41 = arith.constant 0 : index
    %c0_42 = arith.constant 0 : index
    %44 = vector.load %arg2[%c5, %c0_41, %c0_42] : memref<9x32x32xf32, #tpu.memory_space<vmem>>, vector<1x32x32xf32>
    %45 = vector.shape_cast %44 : vector<1x32x32xf32> to vector<32x32xf32>
    %c0_43 = arith.constant 0 : index
    %c129 = arith.constant 129 : index
    %46 = vector.load %arg8[%c0_43, %c129] : memref<32x512xf32, #tpu.memory_space<vmem>>, vector<32x256xf32>
    %cst_44 = arith.constant dense<0.000000e+00> : vector<32x256xf32>
    %47 = tpu.matmul %45, %46, %cst_44 {dimension_numbers = #tpu.dot_dimension_numbers<[1], [0], [0], [1], [0, 0, 1, 1], [], []>} : vector<32x32xf32>, vector<32x256xf32>, vector<32x256xf32> -> vector<32x256xf32>
    %48 = arith.addf %43, %47 : vector<32x256xf32>
    %c8 = arith.constant 8 : index
    %c0_45 = arith.constant 0 : index
    %c0_46 = arith.constant 0 : index
    %49 = vector.load %arg2[%c8, %c0_45, %c0_46] : memref<9x32x32xf32, #tpu.memory_space<vmem>>, vector<1x32x32xf32>
    %50 = vector.shape_cast %49 : vector<1x32x32xf32> to vector<32x32xf32>
    %c0_47 = arith.constant 0 : index
    %c145 = arith.constant 145 : index
    %51 = vector.load %arg8[%c0_47, %c145] : memref<32x512xf32, #tpu.memory_space<vmem>>, vector<32x256xf32>
    %cst_48 = arith.constant dense<0.000000e+00> : vector<32x256xf32>
    %52 = tpu.matmul %50, %51, %cst_48 {dimension_numbers = #tpu.dot_dimension_numbers<[1], [0], [0], [1], [0, 0, 1, 1], [], []>} : vector<32x32xf32>, vector<32x256xf32>, vector<32x256xf32> -> vector<32x256xf32>
    %53 = arith.addf %48, %52 : vector<32x256xf32>
    %54 = vector.broadcast %5 : vector<1x256xf32> to vector<32x256xf32>
    %55 = arith.mulf %53, %54 : vector<32x256xf32>
    %56 = arith.addf %39, %55 : vector<32x256xf32>
    %c0_49 = arith.constant 0 : index
    %c0_50 = arith.constant 0 : index
    %57 = vector.load %arg3[%c0_49, %c0_50] : memref<32x1xf32, #tpu.memory_space<vmem>>, vector<32x1xf32>
    %58 = vector.broadcast %57 : vector<32x1xf32> to vector<32x256xf32>
    %59 = arith.addf %56, %58 : vector<32x256xf32>
    %cst_51 = arith.constant 0.000000e+00 : f32
    %60 = vector.broadcast %cst_51 : f32 to vector<32x256xf32>
    %61 = arith.maximumf %59, %60 : vector<32x256xf32>
    %c0_52 = arith.constant 0 : index
    %c128_53 = arith.constant 128 : index
    %62 = vector.load %arg8[%c0_52, %c128_53] : memref<32x512xf32, #tpu.memory_space<vmem>>, vector<32x256xf32>
    tpu.vector_store %arg8[%c0_52, %c128_53], %61 {strides = array<i32>} : memref<32x512xf32, #tpu.memory_space<vmem>>, vector<32x256xf32>,
    %c0_54 = arith.constant 0 : index
    %c0_55 = arith.constant 0 : index
    %c0_56 = arith.constant 0 : index
    %63 = vector.load %arg4[%c0_54, %c0_55, %c0_56] : memref<9x32x32xf32, #tpu.memory_space<vmem>>, vector<1x32x32xf32>
    %64 = vector.shape_cast %63 : vector<1x32x32xf32> to vector<32x32xf32>
    %c0_57 = arith.constant 0 : index
    %c111_58 = arith.constant 111 : index
    %65 = vector.load %arg8[%c0_57, %c111_58] : memref<32x512xf32, #tpu.memory_space<vmem>>, vector<32x256xf32>
    %cst_59 = arith.constant dense<0.000000e+00> : vector<32x256xf32>
    %66 = tpu.matmul %64, %65, %cst_59 {dimension_numbers = #tpu.dot_dimension_numbers<[1], [0], [0], [1], [0, 0, 1, 1], [], []>} : vector<32x32xf32>, vector<32x256xf32>, vector<32x256xf32> -> vector<32x256xf32>
    %c3_60 = arith.constant 3 : index
    %c0_61 = arith.constant 0 : index
    %c0_62 = arith.constant 0 : index
    %67 = vector.load %arg4[%c3_60, %c0_61, %c0_62] : memref<9x32x32xf32, #tpu.memory_space<vmem>>, vector<1x32x32xf32>
    %68 = vector.shape_cast %67 : vector<1x32x32xf32> to vector<32x32xf32>
    %c0_63 = arith.constant 0 : index
    %c127_64 = arith.constant 127 : index
    %69 = vector.load %arg8[%c0_63, %c127_64] : memref<32x512xf32, #tpu.memory_space<vmem>>, vector<32x256xf32>
    %cst_65 = arith.constant dense<0.000000e+00> : vector<32x256xf32>
    %70 = tpu.matmul %68, %69, %cst_65 {dimension_numbers = #tpu.dot_dimension_numbers<[1], [0], [0], [1], [0, 0, 1, 1], [], []>} : vector<32x32xf32>, vector<32x256xf32>, vector<32x256xf32> -> vector<32x256xf32>
    %71 = arith.addf %66, %70 : vector<32x256xf32>
    %c6_66 = arith.constant 6 : index
    %c0_67 = arith.constant 0 : index
    %c0_68 = arith.constant 0 : index
    %72 = vector.load %arg4[%c6_66, %c0_67, %c0_68] : memref<9x32x32xf32, #tpu.memory_space<vmem>>, vector<1x32x32xf32>
    %73 = vector.shape_cast %72 : vector<1x32x32xf32> to vector<32x32xf32>
    %c0_69 = arith.constant 0 : index
    %c143_70 = arith.constant 143 : index
    %74 = vector.load %arg8[%c0_69, %c143_70] : memref<32x512xf32, #tpu.memory_space<vmem>>, vector<32x256xf32>
    %cst_71 = arith.constant dense<0.000000e+00> : vector<32x256xf32>
    %75 = tpu.matmul %73, %74, %cst_71 {dimension_numbers = #tpu.dot_dimension_numbers<[1], [0], [0], [1], [0, 0, 1, 1], [], []>} : vector<32x32xf32>, vector<32x256xf32>, vector<32x256xf32> -> vector<32x256xf32>
    %76 = arith.addf %71, %75 : vector<32x256xf32>
    %77 = vector.broadcast %4 : vector<1x256xf32> to vector<32x256xf32>
    %78 = arith.mulf %76, %77 : vector<32x256xf32>
    %c1_72 = arith.constant 1 : index
    %c0_73 = arith.constant 0 : index
    %c0_74 = arith.constant 0 : index
    %79 = vector.load %arg4[%c1_72, %c0_73, %c0_74] : memref<9x32x32xf32, #tpu.memory_space<vmem>>, vector<1x32x32xf32>
    %80 = vector.shape_cast %79 : vector<1x32x32xf32> to vector<32x32xf32>
    %c0_75 = arith.constant 0 : index
    %c112_76 = arith.constant 112 : index
    %81 = vector.load %arg8[%c0_75, %c112_76] : memref<32x512xf32, #tpu.memory_space<vmem>>, vector<32x256xf32>
    %cst_77 = arith.constant dense<0.000000e+00> : vector<32x256xf32>
    %82 = tpu.matmul %80, %81, %cst_77 {dimension_numbers = #tpu.dot_dimension_numbers<[1], [0], [0], [1], [0, 0, 1, 1], [], []>} : vector<32x32xf32>, vector<32x256xf32>, vector<32x256xf32> -> vector<32x256xf32>
    %c4_78 = arith.constant 4 : index
    %c0_79 = arith.constant 0 : index
    %c0_80 = arith.constant 0 : index
    %83 = vector.load %arg4[%c4_78, %c0_79, %c0_80] : memref<9x32x32xf32, #tpu.memory_space<vmem>>, vector<1x32x32xf32>
    %84 = vector.shape_cast %83 : vector<1x32x32xf32> to vector<32x32xf32>
    %c0_81 = arith.constant 0 : index
    %c128_82 = arith.constant 128 : index
    %85 = vector.load %arg8[%c0_81, %c128_82] : memref<32x512xf32, #tpu.memory_space<vmem>>, vector<32x256xf32>
    %cst_83 = arith.constant dense<0.000000e+00> : vector<32x256xf32>
    %86 = tpu.matmul %84, %85, %cst_83 {dimension_numbers = #tpu.dot_dimension_numbers<[1], [0], [0], [1], [0, 0, 1, 1], [], []>} : vector<32x32xf32>, vector<32x256xf32>, vector<32x256xf32> -> vector<32x256xf32>
    %87 = arith.addf %82, %86 : vector<32x256xf32>
    %c7_84 = arith.constant 7 : index
    %c0_85 = arith.constant 0 : index
    %c0_86 = arith.constant 0 : index
    %88 = vector.load %arg4[%c7_84, %c0_85, %c0_86] : memref<9x32x32xf32, #tpu.memory_space<vmem>>, vector<1x32x32xf32>
    %89 = vector.shape_cast %88 : vector<1x32x32xf32> to vector<32x32xf32>
    %c0_87 = arith.constant 0 : index
    %c144_88 = arith.constant 144 : index
    %90 = vector.load %arg8[%c0_87, %c144_88] : memref<32x512xf32, #tpu.memory_space<vmem>>, vector<32x256xf32>
    %cst_89 = arith.constant dense<0.000000e+00> : vector<32x256xf32>
    %91 = tpu.matmul %89, %90, %cst_89 {dimension_numbers = #tpu.dot_dimension_numbers<[1], [0], [0], [1], [0, 0, 1, 1], [], []>} : vector<32x32xf32>, vector<32x256xf32>, vector<32x256xf32> -> vector<32x256xf32>
    %92 = arith.addf %87, %91 : vector<32x256xf32>
    %93 = arith.addf %78, %92 : vector<32x256xf32>
    %c2_90 = arith.constant 2 : index
    %c0_91 = arith.constant 0 : index
    %c0_92 = arith.constant 0 : index
    %94 = vector.load %arg4[%c2_90, %c0_91, %c0_92] : memref<9x32x32xf32, #tpu.memory_space<vmem>>, vector<1x32x32xf32>
    %95 = vector.shape_cast %94 : vector<1x32x32xf32> to vector<32x32xf32>
    %c0_93 = arith.constant 0 : index
    %c113_94 = arith.constant 113 : index
    %96 = vector.load %arg8[%c0_93, %c113_94] : memref<32x512xf32, #tpu.memory_space<vmem>>, vector<32x256xf32>
    %cst_95 = arith.constant dense<0.000000e+00> : vector<32x256xf32>
    %97 = tpu.matmul %95, %96, %cst_95 {dimension_numbers = #tpu.dot_dimension_numbers<[1], [0], [0], [1], [0, 0, 1, 1], [], []>} : vector<32x32xf32>, vector<32x256xf32>, vector<32x256xf32> -> vector<32x256xf32>
    %c5_96 = arith.constant 5 : index
    %c0_97 = arith.constant 0 : index
    %c0_98 = arith.constant 0 : index
    %98 = vector.load %arg4[%c5_96, %c0_97, %c0_98] : memref<9x32x32xf32, #tpu.memory_space<vmem>>, vector<1x32x32xf32>
    %99 = vector.shape_cast %98 : vector<1x32x32xf32> to vector<32x32xf32>
    %c0_99 = arith.constant 0 : index
    %c129_100 = arith.constant 129 : index
    %100 = vector.load %arg8[%c0_99, %c129_100] : memref<32x512xf32, #tpu.memory_space<vmem>>, vector<32x256xf32>
    %cst_101 = arith.constant dense<0.000000e+00> : vector<32x256xf32>
    %101 = tpu.matmul %99, %100, %cst_101 {dimension_numbers = #tpu.dot_dimension_numbers<[1], [0], [0], [1], [0, 0, 1, 1], [], []>} : vector<32x32xf32>, vector<32x256xf32>, vector<32x256xf32> -> vector<32x256xf32>
    %102 = arith.addf %97, %101 : vector<32x256xf32>
    %c8_102 = arith.constant 8 : index
    %c0_103 = arith.constant 0 : index
    %c0_104 = arith.constant 0 : index
    %103 = vector.load %arg4[%c8_102, %c0_103, %c0_104] : memref<9x32x32xf32, #tpu.memory_space<vmem>>, vector<1x32x32xf32>
    %104 = vector.shape_cast %103 : vector<1x32x32xf32> to vector<32x32xf32>
    %c0_105 = arith.constant 0 : index
    %c145_106 = arith.constant 145 : index
    %105 = vector.load %arg8[%c0_105, %c145_106] : memref<32x512xf32, #tpu.memory_space<vmem>>, vector<32x256xf32>
    %cst_107 = arith.constant dense<0.000000e+00> : vector<32x256xf32>
    %106 = tpu.matmul %104, %105, %cst_107 {dimension_numbers = #tpu.dot_dimension_numbers<[1], [0], [0], [1], [0, 0, 1, 1], [], []>} : vector<32x32xf32>, vector<32x256xf32>, vector<32x256xf32> -> vector<32x256xf32>
    %107 = arith.addf %102, %106 : vector<32x256xf32>
    %108 = vector.broadcast %5 : vector<1x256xf32> to vector<32x256xf32>
    %109 = arith.mulf %107, %108 : vector<32x256xf32>
    %110 = arith.addf %93, %109 : vector<32x256xf32>
    %c0_108 = arith.constant 0 : index
    %c0_109 = arith.constant 0 : index
    %111 = vector.load %arg5[%c0_108, %c0_109] : memref<32x1xf32, #tpu.memory_space<vmem>>, vector<32x1xf32>
    %112 = vector.broadcast %111 : vector<32x1xf32> to vector<32x256xf32>
    %113 = arith.addf %110, %112 : vector<32x256xf32>
    %c0_110 = arith.constant 0 : index
    %c0_111 = arith.constant 0 : index
    %c0_112 = arith.constant 0 : index
    %114 = vector.load %arg7[%c0_110, %c0_111, %c0_112] : memref<1x32x256xf32, #tpu.memory_space<vmem>>, vector<1x32x256xf32>
    %115 = vector.shape_cast %114 : vector<1x32x256xf32> to vector<32x256xf32>
    %116 = vector.shape_cast %113 : vector<32x256xf32> to vector<1x32x256xf32>
    tpu.vector_store %arg7[%c0_110, %c0_111, %c0_112], %116 {strides = array<i32>} : memref<1x32x256xf32, #tpu.memory_space<vmem>>, vector<1x32x256xf32>,
    return
  }
  func.func @transform_0(%arg0: i32) -> (i32, i32, i32) {
    %c0_i32 = arith.constant 0 : i32
    %c0_i32_0 = arith.constant 0 : i32
    %c0_i32_1 = arith.constant 0 : i32
    return %arg0, %c0_i32, %c0_i32_0 : i32, i32, i32
  }
  func.func @transform_1(%arg0: i32) -> (i32, i32, i32) {
    %c0_i32 = arith.constant 0 : i32
    %c0_i32_0 = arith.constant 0 : i32
    %c0_i32_1 = arith.constant 0 : i32
    %c0_i32_2 = arith.constant 0 : i32
    return %c0_i32, %c0_i32_0, %c0_i32_1 : i32, i32, i32
  }
  func.func @transform_2(%arg0: i32) -> (i32, i32) {
    %c0_i32 = arith.constant 0 : i32
    %c0_i32_0 = arith.constant 0 : i32
    %c0_i32_1 = arith.constant 0 : i32
    return %c0_i32, %c0_i32_0 : i32, i32
  }
  func.func @transform_3(%arg0: i32) -> (i32, i32, i32) {
    %c0_i32 = arith.constant 0 : i32
    %c0_i32_0 = arith.constant 0 : i32
    %c0_i32_1 = arith.constant 0 : i32
    %c0_i32_2 = arith.constant 0 : i32
    return %c0_i32, %c0_i32_0, %c0_i32_1 : i32, i32, i32
  }
  func.func @transform_4(%arg0: i32) -> (i32, i32) {
    %c0_i32 = arith.constant 0 : i32
    %c0_i32_0 = arith.constant 0 : i32
    %c0_i32_1 = arith.constant 0 : i32
    return %c0_i32, %c0_i32_0 : i32, i32
  }
  func.func @transform_5(%arg0: i32) -> (i32, i32) {
    %c0_i32 = arith.constant 0 : i32
    %c0_i32_0 = arith.constant 0 : i32
    %c0_i32_1 = arith.constant 0 : i32
    return %c0_i32, %c0_i32_0 : i32, i32
  }
  func.func @transform_6(%arg0: i32) -> (i32, i32, i32) {
    %c0_i32 = arith.constant 0 : i32
    %c0_i32_0 = arith.constant 0 : i32
    %c0_i32_1 = arith.constant 0 : i32
    return %arg0, %c0_i32, %c0_i32_0 : i32, i32, i32
  }
}

</mosaic_0001>

<llo_original>
// kernel: tpu_custom_call.1
$region0: #{tpu_custom_call.1}
  #allocation0 [shape = 'u32[]', space=smem, size = 0x4, offset = 0x4, fixed_abs, tag = 'smem constant byte address 0x4 - core index']
  #allocation1 [shape = 'u32[144,128]{1,0:T(1,128)}', space=vmem, size = 0x12000, scoped, tag = 'internal scratch']
  #allocation2 [shape = 'f32[32,512]{1,0:T(8,128)}', space=vmem, size = 0x10000, scoped, tag = 'scratch operand']
  %s0 = inlined_call_operand.hbm [shape: f32[2,32,256], index: 0, kind: input, shape index: {}]
  %s1 = inlined_call_operand.hbm [shape: f32[9,32,32], index: 1, kind: input, shape index: {}]
  %s2 = inlined_call_operand.vmem [shape: f32[32,1], index: 2, kind: input, shape index: {}]
  %s3 = inlined_call_operand.hbm [shape: f32[9,32,32], index: 3, kind: input, shape index: {}]
  %s4 = inlined_call_operand.vmem [shape: f32[32,1], index: 4, kind: input, shape index: {}]
  %s5 = inlined_call_operand.vmem [shape: f32[2,256], index: 5, kind: input, shape index: {}]
  %s6 = inlined_call_operand.hbm [shape: f32[2,32,256], index: 6, kind: output, shape index: {}]
  %s7 = sld [smem:[#allocation0]]
  $region69: #{tpu_custom_call.1} parent=0
    _
  %s9 = ssub.s32 1, %s7
  %s10 = scalar_select 0, %s9, %s7
  $region1: #{tpu_custom_call.1} parent=0
    #allocation3 [shape = 'u8[65536]{0}', space=vmem, size = 0x10000, scoped, tag = 'input window, operand 0']
    #allocation4 [shape = 's32[2]{0}', space=sflag, size = 0x8, scoped, tag = 'scoped memory for tpu_custom_call.1']
    #allocation5 [shape = 's32[2]{0}', space=sflag, size = 0x8, scoped, tag = 'scoped memory for tpu_custom_call.1']
    #allocation6 [shape = 'u8[147456]{0}', space=vmem, size = 0x24000, scoped, tag = 'input window, operand 1, single buffered']
    #allocation7 [shape = 's32[1]{0}', space=sflag, size = 0x4, scoped, tag = 'scoped memory for tpu_custom_call.1']
    #allocation8 [shape = 'u8[147456]{0}', space=vmem, size = 0x24000, scoped, tag = 'input window, operand 3, single buffered']
    #allocation9 [shape = 'u8[65536]{0}', space=vmem, size = 0x10000, scoped, tag = 'output window, operand 0']
    %11 = vsyncpa [#allocation4], 0
    %s12 = scalar_lea.sflag [#allocation4], 1
    %13 = vsyncpa %s12, 0
    %14 = vsyncpa [#allocation7], 0
    %15 = vsyncpa [#allocation5], 0
    %s16 = scalar_lea.sflag [#allocation5], 1
    %17 = vsyncpa %s16, 0
    loop: start=0, step=1, limit=4
    $region2: #{tpu_custom_call.1} parent=1 // loop_pre_header
      _
    $region3: #{tpu_custom_call.1} parent=1 // loop_header
      %s19 = sphi 0, %s23
      %p20 = scmp.ge.s32.totalorder %s19, 4
      %s29 = sphi 0, %s31
      %s32 = sphi 0, %s29
      %s33 = sphi 0, %s32
      %s49 = sphi 0, %s33
      %s53 = sphi 0, %s53
      %s55 = sphi 0, %s53
      %s56 = sphi 0, %s55
      %s70 = sphi 0, %s56
      %s74 = sphi 0, %s74
      %s76 = sphi 0, %s74
      %s77 = sphi 0, %s76
      %s91 = sphi 0, %s77
      %s95 = sphi 0, %s95
      %s97 = sphi 0, %s95
      %s98 = sphi 0, %s97
      %s112 = sphi 0, %s98
      %s116 = sphi 0, %s116
      %s118 = sphi 0, %s116
      %s119 = sphi 0, %s118
      %s133 = sphi 0, %s119
      %s137 = sphi 0, %s137
      %s139 = sphi 0, %s137
      %s140 = sphi 0, %s139
      %s154 = sphi 0, %s140
      %s160 = sphi 0, %s162
      %s163 = sphi 0, %s160
      %s164 = sphi 0, %s163
      %s180 = sphi 0, %s164
    $region4: #{tpu_custom_call.1} parent=1 // loop_header_branch
      %22 = sbr.rel (%p20) target = $region8
    $region5: #{tpu_custom_call.1} parent=1 // loop_body
      %s24 = ssub.s32 %s19, 1
      %s25 = ssub.s32 %s19, 2
      %s26 = sadd.s32 %s19, 1
      %s27 = ssub.s32 %s19, %s26
      %p28 = scmp.eq.s32.totalorder %s27, 0
      %s30 = sadd.s32 %s29, 1
      %s31 = scalar_select %p28, %s29, %s30
      %p34 = pneg %p28
      %p35 = scmp.eq.s32.totalorder %s19, 1
      %p36 = por %p34, %p35
      %p37 = scmp.ne.s32.totalorder %s29, %s32
      %p38 = scmp.eq.s32.totalorder %s19, 0
      %p39 = por %p37, %p38
      %p40 = scmp.ne.s32.totalorder %s29, %s32
      %p41 = scmp.eq.s32.totalorder %s24, 1
      %p42 = por %p40, %p41
      %p43 = scmp.ne.s32.totalorder %s32, %s33
      %p44 = scmp.eq.s32.totalorder %s24, 0
      %p45 = por %p43, %p44
      %p46 = scmp.ne.s32.totalorder %s32, %s33
      %p47 = scmp.eq.s32.totalorder %s25, 1
      %p48 = por %p46, %p47
      %p50 = scmp.ne.s32.totalorder %s33, %s49
      %p51 = scmp.eq.s32.totalorder %s25, 0
      %p52 = por %p50, %p51
      %s54 = sadd.s32 %s53, 1
      %p57 = scmp.eq.s32.totalorder %s19, 1
      %p58 = scmp.ne.s32.totalorder %s53, %s55
      %p59 = scmp.eq.s32.totalorder %s19, 0
      %p60 = por %p58, %p59
      %p61 = scmp.ne.s32.totalorder %s53, %s55
      %p62 = scmp.eq.s32.totalorder %s24, 1
      %p63 = por %p61, %p62
      %p64 = scmp.ne.s32.totalorder %s55, %s56
      %p65 = scmp.eq.s32.totalorder %s24, 0
      %p66 = por %p64, %p65
      %p67 = scmp.ne.s32.totalorder %s55, %s56
      %p68 = scmp.eq.s32.totalorder %s25, 1
      %p69 = por %p67, %p68
      %p71 = scmp.ne.s32.totalorder %s56, %s70
      %p72 = scmp.eq.s32.totalorder %s25, 0
      %p73 = por %p71, %p72
      %s75 = sadd.s32 %s74, 1
      %p78 = scmp.eq.s32.totalorder %s19, 1
      %p79 = scmp.ne.s32.totalorder %s74, %s76
      %p80 = scmp.eq.s32.totalorder %s19, 0
      %p81 = por %p79, %p80
      %p82 = scmp.ne.s32.totalorder %s74, %s76
      %p83 = scmp.eq.s32.totalorder %s24, 1
      %p84 = por %p82, %p83
      %p85 = scmp.ne.s32.totalorder %s76, %s77
      %p86 = scmp.eq.s32.totalorder %s24, 0
      %p87 = por %p85, %p86
      %p88 = scmp.ne.s32.totalorder %s76, %s77
      %p89 = scmp.eq.s32.totalorder %s25, 1
      %p90 = por %p88, %p89
      %p92 = scmp.ne.s32.totalorder %s77, %s91
      %p93 = scmp.eq.s32.totalorder %s25, 0
      %p94 = por %p92, %p93
      %s96 = sadd.s32 %s95, 1
      %p99 = scmp.eq.s32.totalorder %s19, 1
      %p100 = scmp.ne.s32.totalorder %s95, %s97
      %p101 = scmp.eq.s32.totalorder %s19, 0
      %p102 = por %p100, %p101
      %p103 = scmp.ne.s32.totalorder %s95, %s97
      %p104 = scmp.eq.s32.totalorder %s24, 1
      %p105 = por %p103, %p104
      %p106 = scmp.ne.s32.totalorder %s97, %s98
      %p107 = scmp.eq.s32.totalorder %s24, 0
      %p108 = por %p106, %p107
      %p109 = scmp.ne.s32.totalorder %s97, %s98
      %p110 = scmp.eq.s32.totalorder %s25, 1
      %p111 = por %p109, %p110
      %p113 = scmp.ne.s32.totalorder %s98, %s112
      %p114 = scmp.eq.s32.totalorder %s25, 0
      %p115 = por %p113, %p114
      %s117 = sadd.s32 %s116, 1
      %p120 = scmp.eq.s32.totalorder %s19, 1
      %p121 = scmp.ne.s32.totalorder %s116, %s118
      %p122 = scmp.eq.s32.totalorder %s19, 0
      %p123 = por %p121, %p122
      %p124 = scmp.ne.s32.totalorder %s116, %s118
      %p125 = scmp.eq.s32.totalorder %s24, 1
      %p126 = por %p124, %p125
      %p127 = scmp.ne.s32.totalorder %s118, %s119
      %p128 = scmp.eq.s32.totalorder %s24, 0
      %p129 = por %p127, %p128
      %p130 = scmp.ne.s32.totalorder %s118, %s119
      %p131 = scmp.eq.s32.totalorder %s25, 1
      %p132 = por %p130, %p131
      %p134 = scmp.ne.s32.totalorder %s119, %s133
      %p135 = scmp.eq.s32.totalorder %s25, 0
      %p136 = por %p134, %p135
      %s138 = sadd.s32 %s137, 1
      %p141 = scmp.eq.s32.totalorder %s19, 1
      %p142 = scmp.ne.s32.totalorder %s137, %s139
      %p143 = scmp.eq.s32.totalorder %s19, 0
      %p144 = por %p142, %p143
      %p145 = scmp.ne.s32.totalorder %s137, %s139
      %p146 = scmp.eq.s32.totalorder %s24, 1
      %p147 = por %p145, %p146
      %p148 = scmp.ne.s32.totalorder %s139, %s140
      %p149 = scmp.eq.s32.totalorder %s24, 0
      %p150 = por %p148, %p149
      %p151 = scmp.ne.s32.totalorder %s139, %s140
      %p152 = scmp.eq.s32.totalorder %s25, 1
      %p153 = por %p151, %p152
      %p155 = scmp.ne.s32.totalorder %s140, %s154
      %p156 = scmp.eq.s32.totalorder %s25, 0
      %p157 = por %p155, %p156
      %s158 = ssub.s32 %s19, %s26
      %p159 = scmp.eq.s32.totalorder %s158, 0
      %s161 = sadd.s32 %s160, 1
      %s162 = scalar_select %p159, %s160, %s161
      %p165 = pneg %p159
      %p166 = scmp.eq.s32.totalorder %s19, 1
      %p167 = por %p165, %p166
      %p168 = scmp.ne.s32.totalorder %s160, %s163
      %p169 = scmp.eq.s32.totalorder %s19, 0
      %p170 = por %p168, %p169
      %p171 = scmp.ne.s32.totalorder %s160, %s163
      %p172 = scmp.eq.s32.totalorder %s24, 1
      %p173 = por %p171, %p172
      %p174 = scmp.ne.s32.totalorder %s163, %s164
      %p175 = scmp.eq.s32.totalorder %s24, 0
      %p176 = por %p174, %p175
      %p177 = scmp.ne.s32.totalorder %s163, %s164
      %p178 = scmp.eq.s32.totalorder %s25, 1
      %p179 = por %p177, %p178
      %p181 = scmp.ne.s32.totalorder %s164, %s180
      %p182 = scmp.eq.s32.totalorder %s25, 0
      %p183 = por %p181, %p182
      %p184 = scmp.le.s32.totalorder 1, %s19
      %p185 = scmp.lt.s32.totalorder %s19, 3
      %p186 = pnand %p184, %p185
      %p187 = pneg %p186
      // Predicated region
      $region9: #{tpu_custom_call.1} parent=5 // pred_check
        _
      $region10: #{tpu_custom_call.1} parent=5 // pred_check_branch
        %189 = sbr.rel (%p186) target = $region12
      $region11: #{tpu_custom_call.1} parent=5 // pred_region
        %s190 = ssub.s32 %s19, 1
        // Predicated region
        $region13: #{tpu_custom_call.1} parent=11 // pred_check
          %p191 = pneg %p66
        $region14: #{tpu_custom_call.1} parent=11 // pred_check_branch
          %193 = sbr.rel (%p191) target = $region16
        $region15: #{tpu_custom_call.1} parent=11 // pred_region
          %s195 = ssub.s32 4608, 4608
          %196 = vsyncadd [#allocation7], %s195
          %s197 = sshll.u32 [#allocation6], 4
          %s198 = int_to_ptr.vmem [resolvable:$true] %s197
          %203 = dma.hbm_to_vmem [thread:$0]  %s1, 4608, %s198, [#allocation7], 128, 128, 8
        $region16: #{tpu_custom_call.1} parent=11 // pred_fallthru
          _
        // Predicated region
        $region17: #{tpu_custom_call.1} parent=11 // pred_check
          %p204 = pneg %p87
        $region18: #{tpu_custom_call.1} parent=11 // pred_check_branch
          %206 = sbr.rel (%p204) target = $region20
        $region19: #{tpu_custom_call.1} parent=11 // pred_region
          _
        $region20: #{tpu_custom_call.1} parent=11 // pred_fallthru
          _
        // Predicated region
        $region21: #{tpu_custom_call.1} parent=11 // pred_check
          %p207 = pneg %p108
        $region22: #{tpu_custom_call.1} parent=11 // pred_check_branch
          %209 = sbr.rel (%p207) target = $region24
        $region23: #{tpu_custom_call.1} parent=11 // pred_region
          %s211 = ssub.s32 4608, 4608
          %212 = vsyncadd [#allocation7], %s211
          %s213 = sshll.u32 [#allocation8], 4
          %s214 = int_to_ptr.vmem [resolvable:$true] %s213
          %219 = dma.hbm_to_vmem [thread:$0]  %s3, 4608, %s214, [#allocation7], 128, 128, 8
        $region24: #{tpu_custom_call.1} parent=11 // pred_fallthru
          _
        // Predicated region
        $region25: #{tpu_custom_call.1} parent=11 // pred_check
          %p220 = pneg %p129
        $region26: #{tpu_custom_call.1} parent=11 // pred_check_branch
          %222 = sbr.rel (%p220) target = $region28
        $region27: #{tpu_custom_call.1} parent=11 // pred_region
          _
        $region28: #{tpu_custom_call.1} parent=11 // pred_fallthru
          _
        // Predicated region
        $region29: #{tpu_custom_call.1} parent=11 // pred_check
          %p223 = pneg %p150
        $region30: #{tpu_custom_call.1} parent=11 // pred_check_branch
          %225 = sbr.rel (%p223) target = $region32
        $region31: #{tpu_custom_call.1} parent=11 // pred_region
          _
        $region32: #{tpu_custom_call.1} parent=11 // pred_fallthru
          _
      $region12: #{tpu_custom_call.1} parent=5 // pred_fallthru
        _
      %p226 = scmp.lt.s32.totalorder %s19, 2
      // Predicated region
      $region33: #{tpu_custom_call.1} parent=5 // pred_check
        %p227 = pneg %p226
      $region34: #{tpu_custom_call.1} parent=5 // pred_check_branch
        %229 = sbr.rel (%p227) target = $region36
      $region35: #{tpu_custom_call.1} parent=5 // pred_region
        // Predicated region
        $region37: #{tpu_custom_call.1} parent=35 // pred_check
          %p230 = pneg %p39
        $region38: #{tpu_custom_call.1} parent=35 // pred_check_branch
          %232 = sbr.rel (%p230) target = $region40
        $region39: #{tpu_custom_call.1} parent=35 // pred_region
          %s233 = sand.u32 %s29, 1
          %s234 = scalar_lea.sflag [#allocation4], %s233
          %s235 = sand.u32 %s29, 1
          %s236 = smul.addr %s235, 64
          %s237 = scalar_lea.vmem [#allocation3], %s236
          %s239 = ssub.s32 1024, 1024
          %240 = vsyncadd %s234, %s239
          %s241 = smul.addr %s19, 8
          %s242 = smul.addr %s241, 128
          %s243 = scalar_lea.hbm %s0, %s242
          %s244 = sshll.u32 %s237, 4
          %s245 = int_to_ptr.vmem [resolvable:$true] %s244
          %250 = dma.hbm_to_vmem [thread:$0]  %s243, 1024, %s245, %s234, 256, 256, 16
        $region40: #{tpu_custom_call.1} parent=35 // pred_fallthru
          _
      $region36: #{tpu_custom_call.1} parent=5 // pred_fallthru
        _
      %p251 = scmp.le.s32.totalorder 1, %s19
      %p252 = scmp.lt.s32.totalorder %s19, 3
      %p253 = pnand %p251, %p252
      %p254 = pneg %p253
      // Predicated region
      $region41: #{tpu_custom_call.1} parent=5 // pred_check
        _
      $region42: #{tpu_custom_call.1} parent=5 // pred_check_branch
        %256 = sbr.rel (%p253) target = $region44
      $region43: #{tpu_custom_call.1} parent=5 // pred_region
        %s257 = ssub.s32 %s19, 1
        %s258 = sand.u32 %s32, 1
        %s259 = scalar_lea.sflag [#allocation4], %s258
        %s260 = sand.u32 %s32, 1
        %s261 = smul.addr %s260, 64
        %s262 = scalar_lea.vmem [#allocation3], %s261
        // Predicated region
        $region45: #{tpu_custom_call.1} parent=43 // pred_check
          %p263 = pneg %p45
        $region46: #{tpu_custom_call.1} parent=43 // pred_check_branch
          %265 = sbr.rel (%p263) target = $region48
        $region47: #{tpu_custom_call.1} parent=43 // pred_region
          %266 = dma.done %s259, 1024
        $region48: #{tpu_custom_call.1} parent=43 // pred_fallthru
          _
        // Predicated region
        $region49: #{tpu_custom_call.1} parent=43 // pred_check
          %p267 = pneg %p66
        $region50: #{tpu_custom_call.1} parent=43 // pred_check_branch
          %269 = sbr.rel (%p267) target = $region52
        $region51: #{tpu_custom_call.1} parent=43 // pred_region
          %270 = dma.done [#allocation7], 4608
        $region52: #{tpu_custom_call.1} parent=43 // pred_fallthru
          _
        // Predicated region
        $region53: #{tpu_custom_call.1} parent=43 // pred_check
          %p271 = pneg %p108
        $region54: #{tpu_custom_call.1} parent=43 // pred_check_branch
          %273 = sbr.rel (%p271) target = $region56
        $region55: #{tpu_custom_call.1} parent=43 // pred_region
          %274 = dma.done [#allocation7], 4608
        $region56: #{tpu_custom_call.1} parent=43 // pred_fallthru
          _
        %s275 = sand.u32 %s32, 1
        %s276 = scalar_lea.sflag [#allocation4], %s275
        %s277 = sand.u32 %s32, 1
        %s278 = smul.addr %s277, 64
        %s279 = scalar_lea.vmem [#allocation3], %s278
        %p280 = pneg %p45
        %p281 = pneg %p42
        %p282 = pneg %p66
        %p283 = pneg %p63
        %p284 = pneg %p87
        %p285 = pneg %p84
        %p286 = pneg %p108
        %p287 = pneg %p105
        %p288 = pneg %p129
        %p289 = pneg %p126
        %p290 = pneg %p150
        %p291 = pneg %p147
        %p292 = pneg %p176
        %p293 = pneg %p173
        %s294 = sand.u32 %s163, 1
        %s295 = scalar_lea.sflag [#allocation5], %s294
        %s296 = sand.u32 %s163, 1
        %s297 = smul.addr %s296, 64
        %s298 = scalar_lea.vmem [#allocation9], %s297
        %299 = vst [vmem:[#allocation2] sm:$0xff] 0.0
        %300 = vst [vmem:[#allocation2 + $0x20] sm:$0xff] 0.0
        %301 = vst [vmem:[#allocation2 + $0x40] sm:$0xff] 0.0
        %302 = vst [vmem:[#allocation2 + $0x60] sm:$0xff] 0.0
        %303 = vst [vmem:[#allocation2 + $0x18] sm:$0xff] 0.0
        %304 = vst [vmem:[#allocation2 + $0x38] sm:$0xff] 0.0
        %305 = vst [vmem:[#allocation2 + $0x58] sm:$0xff] 0.0
        %306 = vst [vmem:[#allocation2 + $0x78] sm:$0xff] 0.0
        %v307 = vld [vmem:[%s5] ss:$2 sm:$0x3]
        %s308 = scalar_lea.vmem %s5, 1
        %v309 = vld [vmem:[%s308] ss:$2 sm:$0x3]
        %v310 = vld [vmem:[%s262] sm:$0xff]
        %v311 = vld [vmem:[%s262 + $0x8] sm:$0xff]
        %v312 = vld [vmem:[%s262 + $0x10] sm:$0xff]
        %v313 = vld [vmem:[%s262 + $0x18] sm:$0xff]
        %v314 = vld [vmem:[%s262 + $0x20] sm:$0xff]
        %v315 = vld [vmem:[%s262 + $0x28] sm:$0xff]
        %v316 = vld [vmem:[%s262 + $0x30] sm:$0xff]
        %v317 = vld [vmem:[%s262 + $0x38] sm:$0xff]
        %318 = vst [vmem:[#allocation2 + $0x8] sm:$0xff] %v310
        %319 = vst [vmem:[#allocation2 + $0x10] sm:$0xff] %v311
        %320 = vst [vmem:[#allocation2 + $0x28] sm:$0xff] %v312
        %321 = vst [vmem:[#allocation2 + $0x30] sm:$0xff] %v313
        %322 = vst [vmem:[#allocation2 + $0x48] sm:$0xff] %v314
        %323 = vst [vmem:[#allocation2 + $0x50] sm:$0xff] %v315
        %324 = vst [vmem:[#allocation2 + $0x68] sm:$0xff] %v316
        %325 = vst [vmem:[#allocation2 + $0x70] sm:$0xff] %v317
        %v326 = vld [vmem:[#allocation6] sm:$0xff]
        %v327 = vld [vmem:[#allocation6 + $0x8] sm:$0xff]
        %v328 = vld [vmem:[#allocation6 + $0x10] sm:$0xff]
        %v329 = vld [vmem:[#allocation6 + $0x18] sm:$0xff]
        %v330 = vld [vmem:[#allocation2] sm:$0xff]
        %v331 = vld [vmem:[#allocation2 + $0x8] sm:$0xff]
        %v332 = vld [vmem:[#allocation2 + $0x10] sm:$0xff]
        %v333 = vld [vmem:[#allocation2 + $0x20] sm:$0xff]
        %v334 = vld [vmem:[#allocation2 + $0x28] sm:$0xff]
        %v335 = vld [vmem:[#allocation2 + $0x30] sm:$0xff]
        %v336 = vld [vmem:[#allocation2 + $0x40] sm:$0xff]
        %v337 = vld [vmem:[#allocation2 + $0x48] sm:$0xff]
        %v338 = vld [vmem:[#allocation2 + $0x50] sm:$0xff]
        %v339 = vld [vmem:[#allocation2 + $0x60] sm:$0xff]
        %v340 = vld [vmem:[#allocation2 + $0x68] sm:$0xff]
        %v341 = vld [vmem:[#allocation2 + $0x70] sm:$0xff]
        %s342 = scalar_lea.vmem [#allocation6], 96
        %v343 = vld [vmem:[%s342] sm:$0xff]
        %v344 = vld [vmem:[%s342 + $0x8] sm:$0xff]
        %v345 = vld [vmem:[%s342 + $0x10] sm:$0xff]
        %v346 = vld [vmem:[%s342 + $0x18] sm:$0xff]
        %359 = vrot.lane.b32.xlu0 %v330, 1
        %v360 = vpop.permute.xlu0 %359
        %361 = vrot.lane.b32.xlu0 %v331, 1
        %v362 = vpop.permute.xlu0 %361
        %363 = vrot.lane.b32.xlu0 %v332, 1
        %v364 = vpop.permute.xlu0 %363
        %365 = vrot.lane.b32.xlu0 %v333, 1
        %v366 = vpop.permute.xlu0 %365
        %367 = vrot.lane.b32.xlu0 %v334, 1
        %v368 = vpop.permute.xlu0 %367
        %369 = vrot.lane.b32.xlu0 %v335, 1
        %v370 = vpop.permute.xlu0 %369
        %371 = vrot.lane.b32.xlu0 %v336, 1
        %v372 = vpop.permute.xlu0 %371
        %373 = vrot.lane.b32.xlu0 %v337, 1
        %v374 = vpop.permute.xlu0 %373
        %375 = vrot.lane.b32.xlu0 %v338, 1
        %v376 = vpop.permute.xlu0 %375
        %377 = vrot.lane.b32.xlu0 %v339, 1
        %v378 = vpop.permute.xlu0 %377
        %379 = vrot.lane.b32.xlu0 %v340, 1
        %v380 = vpop.permute.xlu0 %379
        %381 = vrot.lane.b32.xlu0 %v341, 1
        %v382 = vpop.permute.xlu0 %381
        %vm383 = vcmask 7168
        %v384 = vsel %vm383, %v360, %v362
        %v385 = vsel %vm383, %v362, %v364
        %v386 = vsel %vm383, %v366, %v368
        %v387 = vsel %vm383, %v368, %v370
        %v388 = vsel %vm383, %v372, %v374
        %v389 = vsel %vm383, %v374, %v376
        %v390 = vsel %vm383, %v378, %v380
        %v391 = vsel %vm383, %v380, %v382
        %vm400 = vcmask 261120
        %v402 = vsel %vm400, %v343, 0
        %v405 = vsel %vm400, %v344, 0
        %v408 = vsel %vm400, %v345, 0
        %v411 = vsel %vm400, %v346, 0
        %413 = vmatprep.subr.mxu0 0.0
        %414 = vmatpush1.msra.mxu0 0.0
        %415 = vmatprep.subr.mxu0 0.0
        %416 = vmatpush1.msra.mxu0 0.0
        %417 = vmatprep.subr.mxu0 0.0
        %418 = vmatpush1.msra.mxu0 0.0
        %419 = vmatprep.subr.mxu0 0.0
        %420 = vmatpush1.msra.mxu0 0.0
        %421 = vmatprep.subr.mxu0 0.0
        %422 = vmatpush1.msra.mxu0 0.0
        %423 = vmatprep.subr.mxu0 0.0
        %424 = vmatpush1.msra.mxu0 0.0
        %425 = vmatprep.subr.mxu0 0.0
        %426 = vmatpush1.msra.mxu0 0.0
        %427 = vmatprep.subr.mxu0 0.0
        %428 = vmatpush1.msra.mxu0 0.0
        %429 = vmatprep.subr.mxu0 0.0
        %430 = vmatpush1.msra.mxu0 0.0
        %431 = vmatprep.subr.mxu0 0.0
        %432 = vmatpush1.msra.mxu0 0.0
        %433 = vmatprep.subr.mxu0 0.0
        %434 = vmatpush1.msra.mxu0 0.0
        %435 = vmatprep.subr.mxu0 0.0
        %436 = vmatpush1.msra.mxu0 0.0
        %437 = vmatprep.subr.mxu0 %v391
        %438 = vmatpush1.msra.mxu0 %v390
        %439 = vmatprep.subr.mxu0 %v389
        %440 = vmatpush1.msra.mxu0 %v388
        %441 = vmatprep.subr.mxu0 %v387
        %442 = vmatpush1.msra.mxu0 %v386
        %443 = vmatprep.subr.mxu0 %v385
        %444 = vmatpush1.msra.mxu0 %v384
        %445 = vmatprep.subr.mxu0 0.0
        %446 = vmatpush2.msra.mxu0 0.0
        %447 = vmatprep.subr.mxu0 0.0
        %448 = vmatpush2.msra.mxu0 0.0
        %449 = vmatprep.subr.mxu0 0.0
        %450 = vmatpush2.msra.mxu0 0.0
        %451 = vmatprep.subr.mxu0 0.0
        %452 = vmatpush2.msra.mxu0 0.0
        %453 = vmatprep.subr.mxu0 0.0
        %454 = vmatpush2.msra.mxu0 0.0
        %455 = vmatprep.subr.mxu0 0.0
        %456 = vmatpush2.msra.mxu0 0.0
        %457 = vmatprep.subr.mxu0 0.0
        %458 = vmatpush2.msra.mxu0 0.0
        %459 = vmatprep.subr.mxu0 0.0
        %460 = vmatpush2.msra.mxu0 0.0
        %461 = vmatprep.subr.mxu0 0.0
        %462 = vmatpush2.msra.mxu0 0.0
        %463 = vmatprep.subr.mxu0 0.0
        %464 = vmatpush2.msra.mxu0 0.0
        %465 = vmatprep.subr.mxu0 0.0
        %466 = vmatpush2.msra.mxu0 0.0
        %467 = vmatprep.subr.mxu0 0.0
        %468 = vmatpush2.msra.mxu0 0.0
        %469 = vmatprep.subr.mxu0 0.0
        %470 = vmatpush2.msra.mxu0 0.0
        %471 = vmatprep.subr.mxu0 0.0
        %472 = vmatpush2.msra.mxu0 0.0
        %473 = vmatprep.subr.mxu0 0.0
        %474 = vmatpush2.msra.mxu0 0.0
        %475 = vmatprep.subr.mxu0 0.0
        %476 = vmatpush2.msra.mxu0 0.0
        %477 = vmatprep.mubr.f32.mxu0 0.0
        %478 = vmatmul.mubr.f32.gmra.mxu0 %v402
        %v479 = vpop.f32.mrf.mxu0
        %v480 = vadd.f32 0.0, %v479
        %v481 = vpop.f32.mrf.mxu0
        %v482 = vadd.f32 0.0, %v481
        %483 = vmatprep.mubr.f32.mxu0 0.0
        %484 = vmatmul.mubr.f32.gmra.mxu0 %v405
        %v485 = vpop.f32.mrf.mxu0
        %v486 = vadd.f32 0.0, %v485
        %v487 = vpop.f32.mrf.mxu0
        %v488 = vadd.f32 0.0, %v487
        %489 = vmatprep.mubr.f32.mxu0 0.0
        %490 = vmatmul.mubr.f32.gmra.mxu0 %v408
        %v491 = vpop.f32.mrf.mxu0
        %v492 = vadd.f32 0.0, %v491
        %v493 = vpop.f32.mrf.mxu0
        %v494 = vadd.f32 0.0, %v493
        %495 = vmatprep.mubr.f32.mxu0 0.0
        %496 = vmatmul.mubr.f32.gmra.mxu0 %v411
        %v497 = vpop.f32.mrf.mxu0
        %v498 = vadd.f32 0.0, %v497
        %v499 = vpop.f32.mrf.mxu0
        %v500 = vadd.f32 0.0, %v499
        %501 = vdwg.mxu0
        %502 = vrot.lane.b32.xlu0 %v330, 17
        %v503 = vpop.permute.xlu0 %502
        %504 = vrot.lane.b32.xlu0 %v331, 17
        %v505 = vpop.permute.xlu0 %504
        %506 = vrot.lane.b32.xlu0 %v332, 17
        %v507 = vpop.permute.xlu0 %506
        %508 = vrot.lane.b32.xlu0 %v333, 17
        %v509 = vpop.permute.xlu0 %508
        %510 = vrot.lane.b32.xlu0 %v334, 17
        %v511 = vpop.permute.xlu0 %510
        %512 = vrot.lane.b32.xlu0 %v335, 17
        %v513 = vpop.permute.xlu0 %512
        %514 = vrot.lane.b32.xlu0 %v336, 17
        %v515 = vpop.permute.xlu0 %514
        %516 = vrot.lane.b32.xlu0 %v337, 17
        %v517 = vpop.permute.xlu0 %516
        %518 = vrot.lane.b32.xlu0 %v338, 17
        %v519 = vpop.permute.xlu0 %518
        %520 = vrot.lane.b32.xlu0 %v339, 17
        %v521 = vpop.permute.xlu0 %520
        %522 = vrot.lane.b32.xlu0 %v340, 17
        %v523 = vpop.permute.xlu0 %522
        %524 = vrot.lane.b32.xlu0 %v341, 17
        %v525 = vpop.permute.xlu0 %524
        %vm526 = vcmask 138240
        %v527 = vsel %vm526, %v503, %v505
        %v528 = vsel %vm526, %v505, %v507
        %v529 = vsel %vm526, %v509, %v511
        %v530 = vsel %vm526, %v511, %v513
        %v531 = vsel %vm526, %v515, %v517
        %v532 = vsel %vm526, %v517, %v519
        %v533 = vsel %vm526, %v521, %v523
        %v534 = vsel %vm526, %v523, %v525
        %v544 = vsel %vm400, %v326, 0
        %v547 = vsel %vm400, %v327, 0
        %v550 = vsel %vm400, %v328, 0
        %v553 = vsel %vm400, %v329, 0
        %555 = vmatprep.subr.mxu0 0.0
        %556 = vmatpush1.msra.mxu0 0.0
        %557 = vmatprep.subr.mxu0 0.0
        %558 = vmatpush1.msra.mxu0 0.0
        %559 = vmatprep.subr.mxu0 0.0
        %560 = vmatpush1.msra.mxu0 0.0
        %561 = vmatprep.subr.mxu0 0.0
        %562 = vmatpush1.msra.mxu0 0.0
        %563 = vmatprep.subr.mxu0 0.0
        %564 = vmatpush1.msra.mxu0 0.0
        %565 = vmatprep.subr.mxu0 0.0
        %566 = vmatpush1.msra.mxu0 0.0
        %567 = vmatprep.subr.mxu0 0.0
        %568 = vmatpush1.msra.mxu0 0.0
        %569 = vmatprep.subr.mxu0 0.0
        %570 = vmatpush1.msra.mxu0 0.0
        %571 = vmatprep.subr.mxu0 0.0
        %572 = vmatpush1.msra.mxu0 0.0
        %573 = vmatprep.subr.mxu0 0.0
        %574 = vmatpush1.msra.mxu0 0.0
        %575 = vmatprep.subr.mxu0 0.0
        %576 = vmatpush1.msra.mxu0 0.0
        %577 = vmatprep.subr.mxu0 0.0
        %578 = vmatpush1.msra.mxu0 0.0
        %579 = vmatprep.subr.mxu0 %v534
        %580 = vmatpush1.msra.mxu0 %v533
        %581 = vmatprep.subr.mxu0 %v532
        %582 = vmatpush1.msra.mxu0 %v531
        %583 = vmatprep.subr.mxu0 %v530
        %584 = vmatpush1.msra.mxu0 %v529
        %585 = vmatprep.subr.mxu0 %v528
        %586 = vmatpush1.msra.mxu0 %v527
        %587 = vmatprep.subr.mxu0 0.0
        %588 = vmatpush2.msra.mxu0 0.0
        %589 = vmatprep.subr.mxu0 0.0
        %590 = vmatpush2.msra.mxu0 0.0
        %591 = vmatprep.subr.mxu0 0.0
        %592 = vmatpush2.msra.mxu0 0.0
        %593 = vmatprep.subr.mxu0 0.0
        %594 = vmatpush2.msra.mxu0 0.0
        %595 = vmatprep.subr.mxu0 0.0
        %596 = vmatpush2.msra.mxu0 0.0
        %597 = vmatprep.subr.mxu0 0.0
        %598 = vmatpush2.msra.mxu0 0.0
        %599 = vmatprep.subr.mxu0 0.0
        %600 = vmatpush2.msra.mxu0 0.0
        %601 = vmatprep.subr.mxu0 0.0
        %602 = vmatpush2.msra.mxu0 0.0
        %603 = vmatprep.subr.mxu0 0.0
        %604 = vmatpush2.msra.mxu0 0.0
        %605 = vmatprep.subr.mxu0 0.0
        %606 = vmatpush2.msra.mxu0 0.0
        %607 = vmatprep.subr.mxu0 0.0
        %608 = vmatpush2.msra.mxu0 0.0
        %609 = vmatprep.subr.mxu0 0.0
        %610 = vmatpush2.msra.mxu0 0.0
        %611 = vmatprep.subr.mxu0 0.0
        %612 = vmatpush2.msra.mxu0 0.0
        %613 = vmatprep.subr.mxu0 0.0
        %614 = vmatpush2.msra.mxu0 0.0
        %615 = vmatprep.subr.mxu0 0.0
        %616 = vmatpush2.msra.mxu0 0.0
        %617 = vmatprep.subr.mxu0 0.0
        %618 = vmatpush2.msra.mxu0 0.0
        %619 = vmatprep.mubr.f32.mxu0 0.0
        %620 = vmatmul.mubr.f32.gmra.mxu0 %v544
        %v621 = vpop.f32.mrf.mxu0
        %v622 = vadd.f32 %v480, %v621
        %v623 = vpop.f32.mrf.mxu0
        %v624 = vadd.f32 %v482, %v623
        %625 = vmatprep.mubr.f32.mxu0 0.0
        %626 = vmatmul.mubr.f32.gmra.mxu0 %v547
        %v627 = vpop.f32.mrf.mxu0
        %v628 = vadd.f32 %v486, %v627
        %v629 = vpop.f32.mrf.mxu0
        %v630 = vadd.f32 %v488, %v629
        %631 = vmatprep.mubr.f32.mxu0 0.0
        %632 = vmatmul.mubr.f32.gmra.mxu0 %v550
        %v633 = vpop.f32.mrf.mxu0
        %v634 = vadd.f32 %v492, %v633
        %v635 = vpop.f32.mrf.mxu0
        %v636 = vadd.f32 %v494, %v635
        %637 = vmatprep.mubr.f32.mxu0 0.0
        %638 = vmatmul.mubr.f32.gmra.mxu0 %v553
        %v639 = vpop.f32.mrf.mxu0
        %v640 = vadd.f32 %v498, %v639
        %v641 = vpop.f32.mrf.mxu0
        %v642 = vadd.f32 %v500, %v641
        %643 = vdwg.mxu0
        %s644 = scalar_lea.vmem [#allocation6], 192
        %v645 = vld [vmem:[%s644] sm:$0xff]
        %v646 = vld [vmem:[%s644 + $0x8] sm:$0xff]
        %v647 = vld [vmem:[%s644 + $0x10] sm:$0xff]
        %v648 = vld [vmem:[%s644 + $0x18] sm:$0xff]
        %v649 = vld [vmem:[#allocation2 + $0x8] sm:$0xff]
        %v650 = vld [vmem:[#allocation2 + $0x10] sm:$0xff]
        %v651 = vld [vmem:[#allocation2 + $0x18] sm:$0xff]
        %v652 = vld [vmem:[#allocation2 + $0x28] sm:$0xff]
        %v653 = vld [vmem:[#allocation2 + $0x30] sm:$0xff]
        %v654 = vld [vmem:[#allocation2 + $0x38] sm:$0xff]
        %v655 = vld [vmem:[#allocation2 + $0x48] sm:$0xff]
        %v656 = vld [vmem:[#allocation2 + $0x50] sm:$0xff]
        %v657 = vld [vmem:[#allocation2 + $0x58] sm:$0xff]
        %v658 = vld [vmem:[#allocation2 + $0x68] sm:$0xff]
        %v659 = vld [vmem:[#allocation2 + $0x70] sm:$0xff]
        %v660 = vld [vmem:[#allocation2 + $0x78] sm:$0xff]
        %673 = vrot.lane.b32.xlu0 %v649, 113
        %v674 = vpop.permute.xlu0 %673
        %675 = vrot.lane.b32.xlu0 %v650, 113
        %v676 = vpop.permute.xlu0 %675
        %677 = vrot.lane.b32.xlu0 %v651, 113
        %v678 = vpop.permute.xlu0 %677
        %679 = vrot.lane.b32.xlu0 %v652, 113
        %v680 = vpop.permute.xlu0 %679
        %681 = vrot.lane.b32.xlu0 %v653, 113
        %v682 = vpop.permute.xlu0 %681
        %683 = vrot.lane.b32.xlu0 %v654, 113
        %v684 = vpop.permute.xlu0 %683
        %685 = vrot.lane.b32.xlu0 %v655, 113
        %v686 = vpop.permute.xlu0 %685
        %687 = vrot.lane.b32.xlu0 %v656, 113
        %v688 = vpop.permute.xlu0 %687
        %689 = vrot.lane.b32.xlu0 %v657, 113
        %v690 = vpop.permute.xlu0 %689
        %691 = vrot.lane.b32.xlu0 %v658, 113
        %v692 = vpop.permute.xlu0 %691
        %693 = vrot.lane.b32.xlu0 %v659, 113
        %v694 = vpop.permute.xlu0 %693
        %695 = vrot.lane.b32.xlu0 %v660, 113
        %v696 = vpop.permute.xlu0 %695
        %vm697 = vcmask 924672
        %v698 = vsel %vm697, %v674, %v676
        %v699 = vsel %vm697, %v676, %v678
        %v700 = vsel %vm697, %v680, %v682
        %v701 = vsel %vm697, %v682, %v684
        %v702 = vsel %vm697, %v686, %v688
        %v703 = vsel %vm697, %v688, %v690
        %v704 = vsel %vm697, %v692, %v694
        %v705 = vsel %vm697, %v694, %v696
        %v715 = vsel %vm400, %v645, 0
        %v718 = vsel %vm400, %v646, 0
        %v721 = vsel %vm400, %v647, 0
        %v724 = vsel %vm400, %v648, 0
        %726 = vmatprep.subr.mxu0 0.0
        %727 = vmatpush1.msra.mxu0 0.0
        %728 = vmatprep.subr.mxu0 0.0
        %729 = vmatpush1.msra.mxu0 0.0
        %730 = vmatprep.subr.mxu0 0.0
        %731 = vmatpush1.msra.mxu0 0.0
        %732 = vmatprep.subr.mxu0 0.0
        %733 = vmatpush1.msra.mxu0 0.0
        %734 = vmatprep.subr.mxu0 0.0
        %735 = vmatpush1.msra.mxu0 0.0
        %736 = vmatprep.subr.mxu0 0.0
        %737 = vmatpush1.msra.mxu0 0.0
        %738 = vmatprep.subr.mxu0 0.0
        %739 = vmatpush1.msra.mxu0 0.0
        %740 = vmatprep.subr.mxu0 0.0
        %741 = vmatpush1.msra.mxu0 0.0
        %742 = vmatprep.subr.mxu0 0.0
        %743 = vmatpush1.msra.mxu0 0.0
        %744 = vmatprep.subr.mxu0 0.0
        %745 = vmatpush1.msra.mxu0 0.0
        %746 = vmatprep.subr.mxu0 0.0
        %747 = vmatpush1.msra.mxu0 0.0
        %748 = vmatprep.subr.mxu0 0.0
        %749 = vmatpush1.msra.mxu0 0.0
        %750 = vmatprep.subr.mxu0 %v705
        %751 = vmatpush1.msra.mxu0 %v704
        %752 = vmatprep.subr.mxu0 %v703
        %753 = vmatpush1.msra.mxu0 %v702
        %754 = vmatprep.subr.mxu0 %v701
        %755 = vmatpush1.msra.mxu0 %v700
        %756 = vmatprep.subr.mxu0 %v699
        %757 = vmatpush1.msra.mxu0 %v698
        %758 = vmatprep.subr.mxu0 0.0
        %759 = vmatpush2.msra.mxu0 0.0
        %760 = vmatprep.subr.mxu0 0.0
        %761 = vmatpush2.msra.mxu0 0.0
        %762 = vmatprep.subr.mxu0 0.0
        %763 = vmatpush2.msra.mxu0 0.0
        %764 = vmatprep.subr.mxu0 0.0
        %765 = vmatpush2.msra.mxu0 0.0
        %766 = vmatprep.subr.mxu0 0.0
        %767 = vmatpush2.msra.mxu0 0.0
        %768 = vmatprep.subr.mxu0 0.0
        %769 = vmatpush2.msra.mxu0 0.0
        %770 = vmatprep.subr.mxu0 0.0
        %771 = vmatpush2.msra.mxu0 0.0
        %772 = vmatprep.subr.mxu0 0.0
        %773 = vmatpush2.msra.mxu0 0.0
        %774 = vmatprep.subr.mxu0 0.0
        %775 = vmatpush2.msra.mxu0 0.0
        %776 = vmatprep.subr.mxu0 0.0
        %777 = vmatpush2.msra.mxu0 0.0
        %778 = vmatprep.subr.mxu0 0.0
        %779 = vmatpush2.msra.mxu0 0.0
        %780 = vmatprep.subr.mxu0 0.0
        %781 = vmatpush2.msra.mxu0 0.0
        %782 = vmatprep.subr.mxu0 0.0
        %783 = vmatpush2.msra.mxu0 0.0
        %784 = vmatprep.subr.mxu0 0.0
        %785 = vmatpush2.msra.mxu0 0.0
        %786 = vmatprep.subr.mxu0 0.0
        %787 = vmatpush2.msra.mxu0 0.0
        %788 = vmatprep.subr.mxu0 0.0
        %789 = vmatpush2.msra.mxu0 0.0
        %790 = vmatprep.mubr.f32.mxu0 0.0
        %791 = vmatmul.mubr.f32.gmra.mxu0 %v715
        %v792 = vpop.f32.mrf.mxu0
        %v793 = vadd.f32 0.0, %v792
        %v794 = vpop.f32.mrf.mxu0
        %v795 = vadd.f32 0.0, %v794
        %796 = vmatprep.mubr.f32.mxu0 0.0
        %797 = vmatmul.mubr.f32.gmra.mxu0 %v718
        %v798 = vpop.f32.mrf.mxu0
        %v799 = vadd.f32 0.0, %v798
        %v800 = vpop.f32.mrf.mxu0
        %v801 = vadd.f32 0.0, %v800
        %802 = vmatprep.mubr.f32.mxu0 0.0
        %803 = vmatmul.mubr.f32.gmra.mxu0 %v721
        %v804 = vpop.f32.mrf.mxu0
        %v805 = vadd.f32 0.0, %v804
        %v806 = vpop.f32.mrf.mxu0
        %v807 = vadd.f32 0.0, %v806
        %808 = vmatprep.mubr.f32.mxu0 0.0
        %809 = vmatmul.mubr.f32.gmra.mxu0 %v724
        %v810 = vpop.f32.mrf.mxu0
        %v811 = vadd.f32 0.0, %v810
        %v812 = vpop.f32.mrf.mxu0
        %v813 = vadd.f32 0.0, %v812
        %814 = vdwg.mxu0
        %v815 = vadd.f32 %v622, %v793
        %v816 = vadd.f32 %v624, %v795
        %v817 = vadd.f32 %v628, %v799
        %v818 = vadd.f32 %v630, %v801
        %v819 = vadd.f32 %v634, %v805
        %v820 = vadd.f32 %v636, %v807
        %v821 = vadd.f32 %v640, %v811
        %v822 = vadd.f32 %v642, %v813
        %v824 = vlaneseq
        %v825 = vshrl.u32 %v824, 7
        %v826 = vsub.s32 0, %v825
        %v827 = vrot.slane %v307, %v826
        %v828 = vlaneseq
        %v829 = vshrl.u32 %v828, 7
        %v830 = vsub.s32 1, %v829
        %v831 = vrot.slane %v307, %v830
        %v834 = vmul.f32 %v815, %v827
        %v835 = vmul.f32 %v816, %v831
        %v836 = vmul.f32 %v817, %v827
        %v837 = vmul.f32 %v818, %v831
        %v838 = vmul.f32 %v819, %v827
        %v839 = vmul.f32 %v820, %v831
        %v840 = vmul.f32 %v821, %v827
        %v841 = vmul.f32 %v822, %v831
        %s842 = scalar_lea.vmem [#allocation6], 32
        %v843 = vld [vmem:[%s842] sm:$0xff]
        %v844 = vld [vmem:[%s842 + $0x8] sm:$0xff]
        %v845 = vld [vmem:[%s842 + $0x10] sm:$0xff]
        %v846 = vld [vmem:[%s842 + $0x18] sm:$0xff]
        %s847 = scalar_lea.vmem [#allocation6], 128
        %v848 = vld [vmem:[%s847] sm:$0xff]
        %v849 = vld [vmem:[%s847 + $0x8] sm:$0xff]
        %v850 = vld [vmem:[%s847 + $0x10] sm:$0xff]
        %v851 = vld [vmem:[%s847 + $0x18] sm:$0xff]
        %v853 = vsel %vm400, %v848, 0
        %v856 = vsel %vm400, %v849, 0
        %v859 = vsel %vm400, %v850, 0
        %v862 = vsel %vm400, %v851, 0
        %864 = vmatprep.subr.mxu0 0.0
        %865 = vmatpush1.msra.mxu0 0.0
        %866 = vmatprep.subr.mxu0 0.0
        %867 = vmatpush1.msra.mxu0 0.0
        %868 = vmatprep.subr.mxu0 0.0
        %869 = vmatpush1.msra.mxu0 0.0
        %870 = vmatprep.subr.mxu0 0.0
        %871 = vmatpush1.msra.mxu0 0.0
        %872 = vmatprep.subr.mxu0 0.0
        %873 = vmatpush1.msra.mxu0 0.0
        %874 = vmatprep.subr.mxu0 0.0
        %875 = vmatpush1.msra.mxu0 0.0
        %876 = vmatprep.subr.mxu0 0.0
        %877 = vmatpush1.msra.mxu0 0.0
        %878 = vmatprep.subr.mxu0 0.0
        %879 = vmatpush1.msra.mxu0 0.0
        %880 = vmatprep.subr.mxu0 0.0
        %881 = vmatpush1.msra.mxu0 0.0
        %882 = vmatprep.subr.mxu0 0.0
        %883 = vmatpush1.msra.mxu0 0.0
        %884 = vmatprep.subr.mxu0 0.0
        %885 = vmatpush1.msra.mxu0 0.0
        %886 = vmatprep.subr.mxu0 0.0
        %887 = vmatpush1.msra.mxu0 0.0
        %888 = vmatprep.subr.mxu0 %v341
        %889 = vmatpush1.msra.mxu0 %v340
        %890 = vmatprep.subr.mxu0 %v338
        %891 = vmatpush1.msra.mxu0 %v337
        %892 = vmatprep.subr.mxu0 %v335
        %893 = vmatpush1.msra.mxu0 %v334
        %894 = vmatprep.subr.mxu0 %v332
        %895 = vmatpush1.msra.mxu0 %v331
        %896 = vmatprep.subr.mxu0 0.0
        %897 = vmatpush2.msra.mxu0 0.0
        %898 = vmatprep.subr.mxu0 0.0
        %899 = vmatpush2.msra.mxu0 0.0
        %900 = vmatprep.subr.mxu0 0.0
        %901 = vmatpush2.msra.mxu0 0.0
        %902 = vmatprep.subr.mxu0 0.0
        %903 = vmatpush2.msra.mxu0 0.0
        %904 = vmatprep.subr.mxu0 0.0
        %905 = vmatpush2.msra.mxu0 0.0
        %906 = vmatprep.subr.mxu0 0.0
        %907 = vmatpush2.msra.mxu0 0.0
        %908 = vmatprep.subr.mxu0 0.0
        %909 = vmatpush2.msra.mxu0 0.0
        %910 = vmatprep.subr.mxu0 0.0
        %911 = vmatpush2.msra.mxu0 0.0
        %912 = vmatprep.subr.mxu0 0.0
        %913 = vmatpush2.msra.mxu0 0.0
        %914 = vmatprep.subr.mxu0 0.0
        %915 = vmatpush2.msra.mxu0 0.0
        %916 = vmatprep.subr.mxu0 0.0
        %917 = vmatpush2.msra.mxu0 0.0
        %918 = vmatprep.subr.mxu0 0.0
        %919 = vmatpush2.msra.mxu0 0.0
        %920 = vmatprep.subr.mxu0 0.0
        %921 = vmatpush2.msra.mxu0 0.0
        %922 = vmatprep.subr.mxu0 0.0
        %923 = vmatpush2.msra.mxu0 0.0
        %924 = vmatprep.subr.mxu0 0.0
        %925 = vmatpush2.msra.mxu0 0.0
        %926 = vmatprep.subr.mxu0 0.0
        %927 = vmatpush2.msra.mxu0 0.0
        %928 = vmatprep.mubr.f32.mxu0 0.0
        %929 = vmatmul.mubr.f32.gmra.mxu0 %v853
        %v930 = vpop.f32.mrf.mxu0
        %v931 = vadd.f32 0.0, %v930
        %v932 = vpop.f32.mrf.mxu0
        %v933 = vadd.f32 0.0, %v932
        %934 = vmatprep.mubr.f32.mxu0 0.0
        %935 = vmatmul.mubr.f32.gmra.mxu0 %v856
        %v936 = vpop.f32.mrf.mxu0
        %v937 = vadd.f32 0.0, %v936
        %v938 = vpop.f32.mrf.mxu0
        %v939 = vadd.f32 0.0, %v938
        %940 = vmatprep.mubr.f32.mxu0 0.0
        %941 = vmatmul.mubr.f32.gmra.mxu0 %v859
        %v942 = vpop.f32.mrf.mxu0
        %v943 = vadd.f32 0.0, %v942
        %v944 = vpop.f32.mrf.mxu0
        %v945 = vadd.f32 0.0, %v944
        %946 = vmatprep.mubr.f32.mxu0 0.0
        %947 = vmatmul.mubr.f32.gmra.mxu0 %v862
        %v948 = vpop.f32.mrf.mxu0
        %v949 = vadd.f32 0.0, %v948
        %v950 = vpop.f32.mrf.mxu0
        %v951 = vadd.f32 0.0, %v950
        %952 = vdwg.mxu0
        %953 = vrot.lane.b32.xlu0 %v330, 16
        %v954 = vpop.permute.xlu0 %953
        %955 = vrot.lane.b32.xlu0 %v331, 16
        %v956 = vpop.permute.xlu0 %955
        %957 = vrot.lane.b32.xlu0 %v332, 16
        %v958 = vpop.permute.xlu0 %957
        %959 = vrot.lane.b32.xlu0 %v333, 16
        %v960 = vpop.permute.xlu0 %959
        %961 = vrot.lane.b32.xlu0 %v334, 16
        %v962 = vpop.permute.xlu0 %961
        %963 = vrot.lane.b32.xlu0 %v335, 16
        %v964 = vpop.permute.xlu0 %963
        %965 = vrot.lane.b32.xlu0 %v336, 16
        %v966 = vpop.permute.xlu0 %965
        %967 = vrot.lane.b32.xlu0 %v337, 16
        %v968 = vpop.permute.xlu0 %967
        %969 = vrot.lane.b32.xlu0 %v338, 16
        %v970 = vpop.permute.xlu0 %969
        %971 = vrot.lane.b32.xlu0 %v339, 16
        %v972 = vpop.permute.xlu0 %971
        %973 = vrot.lane.b32.xlu0 %v340, 16
        %v974 = vpop.permute.xlu0 %973
        %975 = vrot.lane.b32.xlu0 %v341, 16
        %v976 = vpop.permute.xlu0 %975
        %vm977 = vcmask 130048
        %v978 = vsel %vm977, %v954, %v956
        %v979 = vsel %vm977, %v956, %v958
        %v980 = vsel %vm977, %v960, %v962
        %v981 = vsel %vm977, %v962, %v964
        %v982 = vsel %vm977, %v966, %v968
        %v983 = vsel %vm977, %v968, %v970
        %v984 = vsel %vm977, %v972, %v974
        %v985 = vsel %vm977, %v974, %v976
        %v995 = vsel %vm400, %v843, 0
        %v998 = vsel %vm400, %v844, 0
        %v1001 = vsel %vm400, %v845, 0
        %v1004 = vsel %vm400, %v846, 0
        %1006 = vmatprep.subr.mxu0 0.0
        %1007 = vmatpush1.msra.mxu0 0.0
        %1008 = vmatprep.subr.mxu0 0.0
        %1009 = vmatpush1.msra.mxu0 0.0
        %1010 = vmatprep.subr.mxu0 0.0
        %1011 = vmatpush1.msra.mxu0 0.0
        %1012 = vmatprep.subr.mxu0 0.0
        %1013 = vmatpush1.msra.mxu0 0.0
        %1014 = vmatprep.subr.mxu0 0.0
        %1015 = vmatpush1.msra.mxu0 0.0
        %1016 = vmatprep.subr.mxu0 0.0
        %1017 = vmatpush1.msra.mxu0 0.0
        %1018 = vmatprep.subr.mxu0 0.0
        %1019 = vmatpush1.msra.mxu0 0.0
        %1020 = vmatprep.subr.mxu0 0.0
        %1021 = vmatpush1.msra.mxu0 0.0
        %1022 = vmatprep.subr.mxu0 0.0
        %1023 = vmatpush1.msra.mxu0 0.0
        %1024 = vmatprep.subr.mxu0 0.0
        %1025 = vmatpush1.msra.mxu0 0.0
        %1026 = vmatprep.subr.mxu0 0.0
        %1027 = vmatpush1.msra.mxu0 0.0
        %1028 = vmatprep.subr.mxu0 0.0
        %1029 = vmatpush1.msra.mxu0 0.0
        %1030 = vmatprep.subr.mxu0 %v985
        %1031 = vmatpush1.msra.mxu0 %v984
        %1032 = vmatprep.subr.mxu0 %v983
        %1033 = vmatpush1.msra.mxu0 %v982
        %1034 = vmatprep.subr.mxu0 %v981
        %1035 = vmatpush1.msra.mxu0 %v980
        %1036 = vmatprep.subr.mxu0 %v979
        %1037 = vmatpush1.msra.mxu0 %v978
        %1038 = vmatprep.subr.mxu0 0.0
        %1039 = vmatpush2.msra.mxu0 0.0
        %1040 = vmatprep.subr.mxu0 0.0
        %1041 = vmatpush2.msra.mxu0 0.0
        %1042 = vmatprep.subr.mxu0 0.0
        %1043 = vmatpush2.msra.mxu0 0.0
        %1044 = vmatprep.subr.mxu0 0.0
        %1045 = vmatpush2.msra.mxu0 0.0
        %1046 = vmatprep.subr.mxu0 0.0
        %1047 = vmatpush2.msra.mxu0 0.0
        %1048 = vmatprep.subr.mxu0 0.0
        %1049 = vmatpush2.msra.mxu0 0.0
        %1050 = vmatprep.subr.mxu0 0.0
        %1051 = vmatpush2.msra.mxu0 0.0
        %1052 = vmatprep.subr.mxu0 0.0
        %1053 = vmatpush2.msra.mxu0 0.0
        %1054 = vmatprep.subr.mxu0 0.0
        %1055 = vmatpush2.msra.mxu0 0.0
        %1056 = vmatprep.subr.mxu0 0.0
        %1057 = vmatpush2.msra.mxu0 0.0
        %1058 = vmatprep.subr.mxu0 0.0
        %1059 = vmatpush2.msra.mxu0 0.0
        %1060 = vmatprep.subr.mxu0 0.0
        %1061 = vmatpush2.msra.mxu0 0.0
        %1062 = vmatprep.subr.mxu0 0.0
        %1063 = vmatpush2.msra.mxu0 0.0
        %1064 = vmatprep.subr.mxu0 0.0
        %1065 = vmatpush2.msra.mxu0 0.0
        %1066 = vmatprep.subr.mxu0 0.0
        %1067 = vmatpush2.msra.mxu0 0.0
        %1068 = vmatprep.subr.mxu0 0.0
        %1069 = vmatpush2.msra.mxu0 0.0
        %1070 = vmatprep.mubr.f32.mxu0 0.0
        %1071 = vmatmul.mubr.f32.gmra.mxu0 %v995
        %v1072 = vpop.f32.mrf.mxu0
        %v1073 = vadd.f32 %v931, %v1072
        %v1074 = vpop.f32.mrf.mxu0
        %v1075 = vadd.f32 %v933, %v1074
        %1076 = vmatprep.mubr.f32.mxu0 0.0
        %1077 = vmatmul.mubr.f32.gmra.mxu0 %v998
        %v1078 = vpop.f32.mrf.mxu0
        %v1079 = vadd.f32 %v937, %v1078
        %v1080 = vpop.f32.mrf.mxu0
        %v1081 = vadd.f32 %v939, %v1080
        %1082 = vmatprep.mubr.f32.mxu0 0.0
        %1083 = vmatmul.mubr.f32.gmra.mxu0 %v1001
        %v1084 = vpop.f32.mrf.mxu0
        %v1085 = vadd.f32 %v943, %v1084
        %v1086 = vpop.f32.mrf.mxu0
        %v1087 = vadd.f32 %v945, %v1086
        %1088 = vmatprep.mubr.f32.mxu0 0.0
        %1089 = vmatmul.mubr.f32.gmra.mxu0 %v1004
        %v1090 = vpop.f32.mrf.mxu0
        %v1091 = vadd.f32 %v949, %v1090
        %v1092 = vpop.f32.mrf.mxu0
        %v1093 = vadd.f32 %v951, %v1092
        %1094 = vdwg.mxu0
        %s1095 = scalar_lea.vmem [#allocation6], 224
        %v1096 = vld [vmem:[%s1095] sm:$0xff]
        %v1097 = vld [vmem:[%s1095 + $0x8] sm:$0xff]
        %v1098 = vld [vmem:[%s1095 + $0x10] sm:$0xff]
        %v1099 = vld [vmem:[%s1095 + $0x18] sm:$0xff]
        %1100 = vrot.lane.b32.xlu0 %v649, 112
        %v1101 = vpop.permute.xlu0 %1100
        %1102 = vrot.lane.b32.xlu0 %v650, 112
        %v1103 = vpop.permute.xlu0 %1102
        %1104 = vrot.lane.b32.xlu0 %v651, 112
        %v1105 = vpop.permute.xlu0 %1104
        %1106 = vrot.lane.b32.xlu0 %v652, 112
        %v1107 = vpop.permute.xlu0 %1106
        %1108 = vrot.lane.b32.xlu0 %v653, 112
        %v1109 = vpop.permute.xlu0 %1108
        %1110 = vrot.lane.b32.xlu0 %v654, 112
        %v1111 = vpop.permute.xlu0 %1110
        %1112 = vrot.lane.b32.xlu0 %v655, 112
        %v1113 = vpop.permute.xlu0 %1112
        %1114 = vrot.lane.b32.xlu0 %v656, 112
        %v1115 = vpop.permute.xlu0 %1114
        %1116 = vrot.lane.b32.xlu0 %v657, 112
        %v1117 = vpop.permute.xlu0 %1116
        %1118 = vrot.lane.b32.xlu0 %v658, 112
        %v1119 = vpop.permute.xlu0 %1118
        %1120 = vrot.lane.b32.xlu0 %v659, 112
        %v1121 = vpop.permute.xlu0 %1120
        %1122 = vrot.lane.b32.xlu0 %v660, 112
        %v1123 = vpop.permute.xlu0 %1122
        %vm1124 = vcmask 916480
        %v1125 = vsel %vm1124, %v1101, %v1103
        %v1126 = vsel %vm1124, %v1103, %v1105
        %v1127 = vsel %vm1124, %v1107, %v1109
        %v1128 = vsel %vm1124, %v1109, %v1111
        %v1129 = vsel %vm1124, %v1113, %v1115
        %v1130 = vsel %vm1124, %v1115, %v1117
        %v1131 = vsel %vm1124, %v1119, %v1121
        %v1132 = vsel %vm1124, %v1121, %v1123
        %v1142 = vsel %vm400, %v1096, 0
        %v1145 = vsel %vm400, %v1097, 0
        %v1148 = vsel %vm400, %v1098, 0
        %v1151 = vsel %vm400, %v1099, 0
        %1153 = vmatprep.subr.mxu0 0.0
        %1154 = vmatpush1.msra.mxu0 0.0
        %1155 = vmatprep.subr.mxu0 0.0
        %1156 = vmatpush1.msra.mxu0 0.0
        %1157 = vmatprep.subr.mxu0 0.0
        %1158 = vmatpush1.msra.mxu0 0.0
        %1159 = vmatprep.subr.mxu0 0.0
        %1160 = vmatpush1.msra.mxu0 0.0
        %1161 = vmatprep.subr.mxu0 0.0
        %1162 = vmatpush1.msra.mxu0 0.0
        %1163 = vmatprep.subr.mxu0 0.0
        %1164 = vmatpush1.msra.mxu0 0.0
        %1165 = vmatprep.subr.mxu0 0.0
        %1166 = vmatpush1.msra.mxu0 0.0
        %1167 = vmatprep.subr.mxu0 0.0
        %1168 = vmatpush1.msra.mxu0 0.0
        %1169 = vmatprep.subr.mxu0 0.0
        %1170 = vmatpush1.msra.mxu0 0.0
        %1171 = vmatprep.subr.mxu0 0.0
        %1172 = vmatpush1.msra.mxu0 0.0
        %1173 = vmatprep.subr.mxu0 0.0
        %1174 = vmatpush1.msra.mxu0 0.0
        %1175 = vmatprep.subr.mxu0 0.0
        %1176 = vmatpush1.msra.mxu0 0.0
        %1177 = vmatprep.subr.mxu0 %v1132
        %1178 = vmatpush1.msra.mxu0 %v1131
        %1179 = vmatprep.subr.mxu0 %v1130
        %1180 = vmatpush1.msra.mxu0 %v1129
        %1181 = vmatprep.subr.mxu0 %v1128
        %1182 = vmatpush1.msra.mxu0 %v1127
        %1183 = vmatprep.subr.mxu0 %v1126
        %1184 = vmatpush1.msra.mxu0 %v1125
        %1185 = vmatprep.subr.mxu0 0.0
        %1186 = vmatpush2.msra.mxu0 0.0
        %1187 = vmatprep.subr.mxu0 0.0
        %1188 = vmatpush2.msra.mxu0 0.0
        %1189 = vmatprep.subr.mxu0 0.0
        %1190 = vmatpush2.msra.mxu0 0.0
        %1191 = vmatprep.subr.mxu0 0.0
        %1192 = vmatpush2.msra.mxu0 0.0
        %1193 = vmatprep.subr.mxu0 0.0
        %1194 = vmatpush2.msra.mxu0 0.0
        %1195 = vmatprep.subr.mxu0 0.0
        %1196 = vmatpush2.msra.mxu0 0.0
        %1197 = vmatprep.subr.mxu0 0.0
        %1198 = vmatpush2.msra.mxu0 0.0
        %1199 = vmatprep.subr.mxu0 0.0
        %1200 = vmatpush2.msra.mxu0 0.0
        %1201 = vmatprep.subr.mxu0 0.0
        %1202 = vmatpush2.msra.mxu0 0.0
        %1203 = vmatprep.subr.mxu0 0.0
        %1204 = vmatpush2.msra.mxu0 0.0
        %1205 = vmatprep.subr.mxu0 0.0
        %1206 = vmatpush2.msra.mxu0 0.0
        %1207 = vmatprep.subr.mxu0 0.0
        %1208 = vmatpush2.msra.mxu0 0.0
        %1209 = vmatprep.subr.mxu0 0.0
        %1210 = vmatpush2.msra.mxu0 0.0
        %1211 = vmatprep.subr.mxu0 0.0
        %1212 = vmatpush2.msra.mxu0 0.0
        %1213 = vmatprep.subr.mxu0 0.0
        %1214 = vmatpush2.msra.mxu0 0.0
        %1215 = vmatprep.subr.mxu0 0.0
        %1216 = vmatpush2.msra.mxu0 0.0
        %1217 = vmatprep.mubr.f32.mxu0 0.0
        %1218 = vmatmul.mubr.f32.gmra.mxu0 %v1142
        %v1219 = vpop.f32.mrf.mxu0
        %v1220 = vadd.f32 0.0, %v1219
        %v1221 = vpop.f32.mrf.mxu0
        %v1222 = vadd.f32 0.0, %v1221
        %1223 = vmatprep.mubr.f32.mxu0 0.0
        %1224 = vmatmul.mubr.f32.gmra.mxu0 %v1145
        %v1225 = vpop.f32.mrf.mxu0
        %v1226 = vadd.f32 0.0, %v1225
        %v1227 = vpop.f32.mrf.mxu0
        %v1228 = vadd.f32 0.0, %v1227
        %1229 = vmatprep.mubr.f32.mxu0 0.0
        %1230 = vmatmul.mubr.f32.gmra.mxu0 %v1148
        %v1231 = vpop.f32.mrf.mxu0
        %v1232 = vadd.f32 0.0, %v1231
        %v1233 = vpop.f32.mrf.mxu0
        %v1234 = vadd.f32 0.0, %v1233
        %1235 = vmatprep.mubr.f32.mxu0 0.0
        %1236 = vmatmul.mubr.f32.gmra.mxu0 %v1151
        %v1237 = vpop.f32.mrf.mxu0
        %v1238 = vadd.f32 0.0, %v1237
        %v1239 = vpop.f32.mrf.mxu0
        %v1240 = vadd.f32 0.0, %v1239
        %1241 = vdwg.mxu0
        %v1242 = vadd.f32 %v1073, %v1220
        %v1243 = vadd.f32 %v1075, %v1222
        %v1244 = vadd.f32 %v1079, %v1226
        %v1245 = vadd.f32 %v1081, %v1228
        %v1246 = vadd.f32 %v1085, %v1232
        %v1247 = vadd.f32 %v1087, %v1234
        %v1248 = vadd.f32 %v1091, %v1238
        %v1249 = vadd.f32 %v1093, %v1240
        %v1250 = vadd.f32 %v834, %v1242
        %v1251 = vadd.f32 %v835, %v1243
        %v1252 = vadd.f32 %v836, %v1244
        %v1253 = vadd.f32 %v837, %v1245
        %v1254 = vadd.f32 %v838, %v1246
        %v1255 = vadd.f32 %v839, %v1247
        %v1256 = vadd.f32 %v840, %v1248
        %v1257 = vadd.f32 %v841, %v1249
        %s1258 = scalar_lea.vmem [#allocation6], 64
        %v1259 = vld [vmem:[%s1258] sm:$0xff]
        %v1260 = vld [vmem:[%s1258 + $0x8] sm:$0xff]
        %v1261 = vld [vmem:[%s1258 + $0x10] sm:$0xff]
        %v1262 = vld [vmem:[%s1258 + $0x18] sm:$0xff]
        %s1263 = scalar_lea.vmem [#allocation6], 160
        %v1264 = vld [vmem:[%s1263] sm:$0xff]
        %v1265 = vld [vmem:[%s1263 + $0x8] sm:$0xff]
        %v1266 = vld [vmem:[%s1263 + $0x10] sm:$0xff]
        %v1267 = vld [vmem:[%s1263 + $0x18] sm:$0xff]
        %1268 = vrot.lane.b32.xlu0 %v649, 127
        %v1269 = vpop.permute.xlu0 %1268
        %1270 = vrot.lane.b32.xlu0 %v650, 127
        %v1271 = vpop.permute.xlu0 %1270
        %1272 = vrot.lane.b32.xlu0 %v651, 127
        %v1273 = vpop.permute.xlu0 %1272
        %1274 = vrot.lane.b32.xlu0 %v652, 127
        %v1275 = vpop.permute.xlu0 %1274
        %1276 = vrot.lane.b32.xlu0 %v653, 127
        %v1277 = vpop.permute.xlu0 %1276
        %1278 = vrot.lane.b32.xlu0 %v654, 127
        %v1279 = vpop.permute.xlu0 %1278
        %1280 = vrot.lane.b32.xlu0 %v655, 127
        %v1281 = vpop.permute.xlu0 %1280
        %1282 = vrot.lane.b32.xlu0 %v656, 127
        %v1283 = vpop.permute.xlu0 %1282
        %1284 = vrot.lane.b32.xlu0 %v657, 127
        %v1285 = vpop.permute.xlu0 %1284
        %1286 = vrot.lane.b32.xlu0 %v658, 127
        %v1287 = vpop.permute.xlu0 %1286
        %1288 = vrot.lane.b32.xlu0 %v659, 127
        %v1289 = vpop.permute.xlu0 %1288
        %1290 = vrot.lane.b32.xlu0 %v660, 127
        %v1291 = vpop.permute.xlu0 %1290
        %vm1292 = vcmask 1039360
        %v1293 = vsel %vm1292, %v1269, %v1271
        %v1294 = vsel %vm1292, %v1271, %v1273
        %v1295 = vsel %vm1292, %v1275, %v1277
        %v1296 = vsel %vm1292, %v1277, %v1279
        %v1297 = vsel %vm1292, %v1281, %v1283
        %v1298 = vsel %vm1292, %v1283, %v1285
        %v1299 = vsel %vm1292, %v1287, %v1289
        %v1300 = vsel %vm1292, %v1289, %v1291
        %v1310 = vsel %vm400, %v1264, 0
        %v1313 = vsel %vm400, %v1265, 0
        %v1316 = vsel %vm400, %v1266, 0
        %v1319 = vsel %vm400, %v1267, 0
        %1321 = vmatprep.subr.mxu0 0.0
        %1322 = vmatpush1.msra.mxu0 0.0
        %1323 = vmatprep.subr.mxu0 0.0
        %1324 = vmatpush1.msra.mxu0 0.0
        %1325 = vmatprep.subr.mxu0 0.0
        %1326 = vmatpush1.msra.mxu0 0.0
        %1327 = vmatprep.subr.mxu0 0.0
        %1328 = vmatpush1.msra.mxu0 0.0
        %1329 = vmatprep.subr.mxu0 0.0
        %1330 = vmatpush1.msra.mxu0 0.0
        %1331 = vmatprep.subr.mxu0 0.0
        %1332 = vmatpush1.msra.mxu0 0.0
        %1333 = vmatprep.subr.mxu0 0.0
        %1334 = vmatpush1.msra.mxu0 0.0
        %1335 = vmatprep.subr.mxu0 0.0
        %1336 = vmatpush1.msra.mxu0 0.0
        %1337 = vmatprep.subr.mxu0 0.0
        %1338 = vmatpush1.msra.mxu0 0.0
        %1339 = vmatprep.subr.mxu0 0.0
        %1340 = vmatpush1.msra.mxu0 0.0
        %1341 = vmatprep.subr.mxu0 0.0
        %1342 = vmatpush1.msra.mxu0 0.0
        %1343 = vmatprep.subr.mxu0 0.0
        %1344 = vmatpush1.msra.mxu0 0.0
        %1345 = vmatprep.subr.mxu0 %v1300
        %1346 = vmatpush1.msra.mxu0 %v1299
        %1347 = vmatprep.subr.mxu0 %v1298
        %1348 = vmatpush1.msra.mxu0 %v1297
        %1349 = vmatprep.subr.mxu0 %v1296
        %1350 = vmatpush1.msra.mxu0 %v1295
        %1351 = vmatprep.subr.mxu0 %v1294
        %1352 = vmatpush1.msra.mxu0 %v1293
        %1353 = vmatprep.subr.mxu0 0.0
        %1354 = vmatpush2.msra.mxu0 0.0
        %1355 = vmatprep.subr.mxu0 0.0
        %1356 = vmatpush2.msra.mxu0 0.0
        %1357 = vmatprep.subr.mxu0 0.0
        %1358 = vmatpush2.msra.mxu0 0.0
        %1359 = vmatprep.subr.mxu0 0.0
        %1360 = vmatpush2.msra.mxu0 0.0
        %1361 = vmatprep.subr.mxu0 0.0
        %1362 = vmatpush2.msra.mxu0 0.0
        %1363 = vmatprep.subr.mxu0 0.0
        %1364 = vmatpush2.msra.mxu0 0.0
        %1365 = vmatprep.subr.mxu0 0.0
        %1366 = vmatpush2.msra.mxu0 0.0
        %1367 = vmatprep.subr.mxu0 0.0
        %1368 = vmatpush2.msra.mxu0 0.0
        %1369 = vmatprep.subr.mxu0 0.0
        %1370 = vmatpush2.msra.mxu0 0.0
        %1371 = vmatprep.subr.mxu0 0.0
        %1372 = vmatpush2.msra.mxu0 0.0
        %1373 = vmatprep.subr.mxu0 0.0
        %1374 = vmatpush2.msra.mxu0 0.0
        %1375 = vmatprep.subr.mxu0 0.0
        %1376 = vmatpush2.msra.mxu0 0.0
        %1377 = vmatprep.subr.mxu0 0.0
        %1378 = vmatpush2.msra.mxu0 0.0
        %1379 = vmatprep.subr.mxu0 0.0
        %1380 = vmatpush2.msra.mxu0 0.0
        %1381 = vmatprep.subr.mxu0 0.0
        %1382 = vmatpush2.msra.mxu0 0.0
        %1383 = vmatprep.subr.mxu0 0.0
        %1384 = vmatpush2.msra.mxu0 0.0
        %1385 = vmatprep.mubr.f32.mxu0 0.0
        %1386 = vmatmul.mubr.f32.gmra.mxu0 %v1310
        %v1387 = vpop.f32.mrf.mxu0
        %v1388 = vadd.f32 0.0, %v1387
        %v1389 = vpop.f32.mrf.mxu0
        %v1390 = vadd.f32 0.0, %v1389
        %1391 = vmatprep.mubr.f32.mxu0 0.0
        %1392 = vmatmul.mubr.f32.gmra.mxu0 %v1313
        %v1393 = vpop.f32.mrf.mxu0
        %v1394 = vadd.f32 0.0, %v1393
        %v1395 = vpop.f32.mrf.mxu0
        %v1396 = vadd.f32 0.0, %v1395
        %1397 = vmatprep.mubr.f32.mxu0 0.0
        %1398 = vmatmul.mubr.f32.gmra.mxu0 %v1316
        %v1399 = vpop.f32.mrf.mxu0
        %v1400 = vadd.f32 0.0, %v1399
        %v1401 = vpop.f32.mrf.mxu0
        %v1402 = vadd.f32 0.0, %v1401
        %1403 = vmatprep.mubr.f32.mxu0 0.0
        %1404 = vmatmul.mubr.f32.gmra.mxu0 %v1319
        %v1405 = vpop.f32.mrf.mxu0
        %v1406 = vadd.f32 0.0, %v1405
        %v1407 = vpop.f32.mrf.mxu0
        %v1408 = vadd.f32 0.0, %v1407
        %1409 = vdwg.mxu0
        %1410 = vrot.lane.b32.xlu0 %v330, 15
        %v1411 = vpop.permute.xlu0 %1410
        %1412 = vrot.lane.b32.xlu0 %v331, 15
        %v1413 = vpop.permute.xlu0 %1412
        %1414 = vrot.lane.b32.xlu0 %v332, 15
        %v1415 = vpop.permute.xlu0 %1414
        %1416 = vrot.lane.b32.xlu0 %v333, 15
        %v1417 = vpop.permute.xlu0 %1416
        %1418 = vrot.lane.b32.xlu0 %v334, 15
        %v1419 = vpop.permute.xlu0 %1418
        %1420 = vrot.lane.b32.xlu0 %v335, 15
        %v1421 = vpop.permute.xlu0 %1420
        %1422 = vrot.lane.b32.xlu0 %v336, 15
        %v1423 = vpop.permute.xlu0 %1422
        %1424 = vrot.lane.b32.xlu0 %v337, 15
        %v1425 = vpop.permute.xlu0 %1424
        %1426 = vrot.lane.b32.xlu0 %v338, 15
        %v1427 = vpop.permute.xlu0 %1426
        %1428 = vrot.lane.b32.xlu0 %v339, 15
        %v1429 = vpop.permute.xlu0 %1428
        %1430 = vrot.lane.b32.xlu0 %v340, 15
        %v1431 = vpop.permute.xlu0 %1430
        %1432 = vrot.lane.b32.xlu0 %v341, 15
        %v1433 = vpop.permute.xlu0 %1432
        %vm1434 = vcmask 121856
        %v1435 = vsel %vm1434, %v1411, %v1413
        %v1436 = vsel %vm1434, %v1413, %v1415
        %v1437 = vsel %vm1434, %v1417, %v1419
        %v1438 = vsel %vm1434, %v1419, %v1421
        %v1439 = vsel %vm1434, %v1423, %v1425
        %v1440 = vsel %vm1434, %v1425, %v1427
        %v1441 = vsel %vm1434, %v1429, %v1431
        %v1442 = vsel %vm1434, %v1431, %v1433
        %v1452 = vsel %vm400, %v1259, 0
        %v1455 = vsel %vm400, %v1260, 0
        %v1458 = vsel %vm400, %v1261, 0
        %v1461 = vsel %vm400, %v1262, 0
        %1463 = vmatprep.subr.mxu0 0.0
        %1464 = vmatpush1.msra.mxu0 0.0
        %1465 = vmatprep.subr.mxu0 0.0
        %1466 = vmatpush1.msra.mxu0 0.0
        %1467 = vmatprep.subr.mxu0 0.0
        %1468 = vmatpush1.msra.mxu0 0.0
        %1469 = vmatprep.subr.mxu0 0.0
        %1470 = vmatpush1.msra.mxu0 0.0
        %1471 = vmatprep.subr.mxu0 0.0
        %1472 = vmatpush1.msra.mxu0 0.0
        %1473 = vmatprep.subr.mxu0 0.0
        %1474 = vmatpush1.msra.mxu0 0.0
        %1475 = vmatprep.subr.mxu0 0.0
        %1476 = vmatpush1.msra.mxu0 0.0
        %1477 = vmatprep.subr.mxu0 0.0
        %1478 = vmatpush1.msra.mxu0 0.0
        %1479 = vmatprep.subr.mxu0 0.0
        %1480 = vmatpush1.msra.mxu0 0.0
        %1481 = vmatprep.subr.mxu0 0.0
        %1482 = vmatpush1.msra.mxu0 0.0
        %1483 = vmatprep.subr.mxu0 0.0
        %1484 = vmatpush1.msra.mxu0 0.0
        %1485 = vmatprep.subr.mxu0 0.0
        %1486 = vmatpush1.msra.mxu0 0.0
        %1487 = vmatprep.subr.mxu0 %v1442
        %1488 = vmatpush1.msra.mxu0 %v1441
        %1489 = vmatprep.subr.mxu0 %v1440
        %1490 = vmatpush1.msra.mxu0 %v1439
        %1491 = vmatprep.subr.mxu0 %v1438
        %1492 = vmatpush1.msra.mxu0 %v1437
        %1493 = vmatprep.subr.mxu0 %v1436
        %1494 = vmatpush1.msra.mxu0 %v1435
        %1495 = vmatprep.subr.mxu0 0.0
        %1496 = vmatpush2.msra.mxu0 0.0
        %1497 = vmatprep.subr.mxu0 0.0
        %1498 = vmatpush2.msra.mxu0 0.0
        %1499 = vmatprep.subr.mxu0 0.0
        %1500 = vmatpush2.msra.mxu0 0.0
        %1501 = vmatprep.subr.mxu0 0.0
        %1502 = vmatpush2.msra.mxu0 0.0
        %1503 = vmatprep.subr.mxu0 0.0
        %1504 = vmatpush2.msra.mxu0 0.0
        %1505 = vmatprep.subr.mxu0 0.0
        %1506 = vmatpush2.msra.mxu0 0.0
        %1507 = vmatprep.subr.mxu0 0.0
        %1508 = vmatpush2.msra.mxu0 0.0
        %1509 = vmatprep.subr.mxu0 0.0
        %1510 = vmatpush2.msra.mxu0 0.0
        %1511 = vmatprep.subr.mxu0 0.0
        %1512 = vmatpush2.msra.mxu0 0.0
        %1513 = vmatprep.subr.mxu0 0.0
        %1514 = vmatpush2.msra.mxu0 0.0
        %1515 = vmatprep.subr.mxu0 0.0
        %1516 = vmatpush2.msra.mxu0 0.0
        %1517 = vmatprep.subr.mxu0 0.0
        %1518 = vmatpush2.msra.mxu0 0.0
        %1519 = vmatprep.subr.mxu0 0.0
        %1520 = vmatpush2.msra.mxu0 0.0
        %1521 = vmatprep.subr.mxu0 0.0
        %1522 = vmatpush2.msra.mxu0 0.0
        %1523 = vmatprep.subr.mxu0 0.0
        %1524 = vmatpush2.msra.mxu0 0.0
        %1525 = vmatprep.subr.mxu0 0.0
        %1526 = vmatpush2.msra.mxu0 0.0
        %1527 = vmatprep.mubr.f32.mxu0 0.0
        %1528 = vmatmul.mubr.f32.gmra.mxu0 %v1452
        %v1529 = vpop.f32.mrf.mxu0
        %v1530 = vadd.f32 %v1388, %v1529
        %v1531 = vpop.f32.mrf.mxu0
        %v1532 = vadd.f32 %v1390, %v1531
        %1533 = vmatprep.mubr.f32.mxu0 0.0
        %1534 = vmatmul.mubr.f32.gmra.mxu0 %v1455
        %v1535 = vpop.f32.mrf.mxu0
        %v1536 = vadd.f32 %v1394, %v1535
        %v1537 = vpop.f32.mrf.mxu0
        %v1538 = vadd.f32 %v1396, %v1537
        %1539 = vmatprep.mubr.f32.mxu0 0.0
        %1540 = vmatmul.mubr.f32.gmra.mxu0 %v1458
        %v1541 = vpop.f32.mrf.mxu0
        %v1542 = vadd.f32 %v1400, %v1541
        %v1543 = vpop.f32.mrf.mxu0
        %v1544 = vadd.f32 %v1402, %v1543
        %1545 = vmatprep.mubr.f32.mxu0 0.0
        %1546 = vmatmul.mubr.f32.gmra.mxu0 %v1461
        %v1547 = vpop.f32.mrf.mxu0
        %v1548 = vadd.f32 %v1406, %v1547
        %v1549 = vpop.f32.mrf.mxu0
        %v1550 = vadd.f32 %v1408, %v1549
        %1551 = vdwg.mxu0
        %s1552 = scalar_lea.vmem [#allocation6], 256
        %v1553 = vld [vmem:[%s1552] sm:$0xff]
        %v1554 = vld [vmem:[%s1552 + $0x8] sm:$0xff]
        %v1555 = vld [vmem:[%s1552 + $0x10] sm:$0xff]
        %v1556 = vld [vmem:[%s1552 + $0x18] sm:$0xff]
        %1557 = vrot.lane.b32.xlu0 %v649, 111
        %v1558 = vpop.permute.xlu0 %1557
        %1559 = vrot.lane.b32.xlu0 %v650, 111
        %v1560 = vpop.permute.xlu0 %1559
        %1561 = vrot.lane.b32.xlu0 %v651, 111
        %v1562 = vpop.permute.xlu0 %1561
        %1563 = vrot.lane.b32.xlu0 %v652, 111
        %v1564 = vpop.permute.xlu0 %1563
        %1565 = vrot.lane.b32.xlu0 %v653, 111
        %v1566 = vpop.permute.xlu0 %1565
        %1567 = vrot.lane.b32.xlu0 %v654, 111
        %v1568 = vpop.permute.xlu0 %1567
        %1569 = vrot.lane.b32.xlu0 %v655, 111
        %v1570 = vpop.permute.xlu0 %1569
        %1571 = vrot.lane.b32.xlu0 %v656, 111
        %v1572 = vpop.permute.xlu0 %1571
        %1573 = vrot.lane.b32.xlu0 %v657, 111
        %v1574 = vpop.permute.xlu0 %1573
        %1575 = vrot.lane.b32.xlu0 %v658, 111
        %v1576 = vpop.permute.xlu0 %1575
        %1577 = vrot.lane.b32.xlu0 %v659, 111
        %v1578 = vpop.permute.xlu0 %1577
        %1579 = vrot.lane.b32.xlu0 %v660, 111
        %v1580 = vpop.permute.xlu0 %1579
        %vm1581 = vcmask 908288
        %v1582 = vsel %vm1581, %v1558, %v1560
        %v1583 = vsel %vm1581, %v1560, %v1562
        %v1584 = vsel %vm1581, %v1564, %v1566
        %v1585 = vsel %vm1581, %v1566, %v1568
        %v1586 = vsel %vm1581, %v1570, %v1572
        %v1587 = vsel %vm1581, %v1572, %v1574
        %v1588 = vsel %vm1581, %v1576, %v1578
        %v1589 = vsel %vm1581, %v1578, %v1580
        %v1599 = vsel %vm400, %v1553, 0
        %v1602 = vsel %vm400, %v1554, 0
        %v1605 = vsel %vm400, %v1555, 0
        %v1608 = vsel %vm400, %v1556, 0
        %1610 = vmatprep.subr.mxu0 0.0
        %1611 = vmatpush1.msra.mxu0 0.0
        %1612 = vmatprep.subr.mxu0 0.0
        %1613 = vmatpush1.msra.mxu0 0.0
        %1614 = vmatprep.subr.mxu0 0.0
        %1615 = vmatpush1.msra.mxu0 0.0
        %1616 = vmatprep.subr.mxu0 0.0
        %1617 = vmatpush1.msra.mxu0 0.0
        %1618 = vmatprep.subr.mxu0 0.0
        %1619 = vmatpush1.msra.mxu0 0.0
        %1620 = vmatprep.subr.mxu0 0.0
        %1621 = vmatpush1.msra.mxu0 0.0
        %1622 = vmatprep.subr.mxu0 0.0
        %1623 = vmatpush1.msra.mxu0 0.0
        %1624 = vmatprep.subr.mxu0 0.0
        %1625 = vmatpush1.msra.mxu0 0.0
        %1626 = vmatprep.subr.mxu0 0.0
        %1627 = vmatpush1.msra.mxu0 0.0
        %1628 = vmatprep.subr.mxu0 0.0
        %1629 = vmatpush1.msra.mxu0 0.0
        %1630 = vmatprep.subr.mxu0 0.0
        %1631 = vmatpush1.msra.mxu0 0.0
        %1632 = vmatprep.subr.mxu0 0.0
        %1633 = vmatpush1.msra.mxu0 0.0
        %1634 = vmatprep.subr.mxu0 %v1589
        %1635 = vmatpush1.msra.mxu0 %v1588
        %1636 = vmatprep.subr.mxu0 %v1587
        %1637 = vmatpush1.msra.mxu0 %v1586
        %1638 = vmatprep.subr.mxu0 %v1585
        %1639 = vmatpush1.msra.mxu0 %v1584
        %1640 = vmatprep.subr.mxu0 %v1583
        %1641 = vmatpush1.msra.mxu0 %v1582
        %1642 = vmatprep.subr.mxu0 0.0
        %1643 = vmatpush2.msra.mxu0 0.0
        %1644 = vmatprep.subr.mxu0 0.0
        %1645 = vmatpush2.msra.mxu0 0.0
        %1646 = vmatprep.subr.mxu0 0.0
        %1647 = vmatpush2.msra.mxu0 0.0
        %1648 = vmatprep.subr.mxu0 0.0
        %1649 = vmatpush2.msra.mxu0 0.0
        %1650 = vmatprep.subr.mxu0 0.0
        %1651 = vmatpush2.msra.mxu0 0.0
        %1652 = vmatprep.subr.mxu0 0.0
        %1653 = vmatpush2.msra.mxu0 0.0
        %1654 = vmatprep.subr.mxu0 0.0
        %1655 = vmatpush2.msra.mxu0 0.0
        %1656 = vmatprep.subr.mxu0 0.0
        %1657 = vmatpush2.msra.mxu0 0.0
        %1658 = vmatprep.subr.mxu0 0.0
        %1659 = vmatpush2.msra.mxu0 0.0
        %1660 = vmatprep.subr.mxu0 0.0
        %1661 = vmatpush2.msra.mxu0 0.0
        %1662 = vmatprep.subr.mxu0 0.0
        %1663 = vmatpush2.msra.mxu0 0.0
        %1664 = vmatprep.subr.mxu0 0.0
        %1665 = vmatpush2.msra.mxu0 0.0
        %1666 = vmatprep.subr.mxu0 0.0
        %1667 = vmatpush2.msra.mxu0 0.0
        %1668 = vmatprep.subr.mxu0 0.0
        %1669 = vmatpush2.msra.mxu0 0.0
        %1670 = vmatprep.subr.mxu0 0.0
        %1671 = vmatpush2.msra.mxu0 0.0
        %1672 = vmatprep.subr.mxu0 0.0
        %1673 = vmatpush2.msra.mxu0 0.0
        %1674 = vmatprep.mubr.f32.mxu0 0.0
        %1675 = vmatmul.mubr.f32.gmra.mxu0 %v1599
        %v1676 = vpop.f32.mrf.mxu0
        %v1677 = vadd.f32 0.0, %v1676
        %v1678 = vpop.f32.mrf.mxu0
        %v1679 = vadd.f32 0.0, %v1678
        %1680 = vmatprep.mubr.f32.mxu0 0.0
        %1681 = vmatmul.mubr.f32.gmra.mxu0 %v1602
        %v1682 = vpop.f32.mrf.mxu0
        %v1683 = vadd.f32 0.0, %v1682
        %v1684 = vpop.f32.mrf.mxu0
        %v1685 = vadd.f32 0.0, %v1684
        %1686 = vmatprep.mubr.f32.mxu0 0.0
        %1687 = vmatmul.mubr.f32.gmra.mxu0 %v1605
        %v1688 = vpop.f32.mrf.mxu0
        %v1689 = vadd.f32 0.0, %v1688
        %v1690 = vpop.f32.mrf.mxu0
        %v1691 = vadd.f32 0.0, %v1690
        %1692 = vmatprep.mubr.f32.mxu0 0.0
        %1693 = vmatmul.mubr.f32.gmra.mxu0 %v1608
        %v1694 = vpop.f32.mrf.mxu0
        %v1695 = vadd.f32 0.0, %v1694
        %v1696 = vpop.f32.mrf.mxu0
        %v1697 = vadd.f32 0.0, %v1696
        %1698 = vdwg.mxu0
        %v1699 = vadd.f32 %v1530, %v1677
        %v1700 = vadd.f32 %v1532, %v1679
        %v1701 = vadd.f32 %v1536, %v1683
        %v1702 = vadd.f32 %v1538, %v1685
        %v1703 = vadd.f32 %v1542, %v1689
        %v1704 = vadd.f32 %v1544, %v1691
        %v1705 = vadd.f32 %v1548, %v1695
        %v1706 = vadd.f32 %v1550, %v1697
        %v1708 = vlaneseq
        %v1709 = vshrl.u32 %v1708, 7
        %v1710 = vsub.s32 0, %v1709
        %v1711 = vrot.slane %v309, %v1710
        %v1712 = vlaneseq
        %v1713 = vshrl.u32 %v1712, 7
        %v1714 = vsub.s32 1, %v1713
        %v1715 = vrot.slane %v309, %v1714
        %v1718 = vmul.f32 %v1699, %v1711
        %v1719 = vmul.f32 %v1700, %v1715
        %v1720 = vmul.f32 %v1701, %v1711
        %v1721 = vmul.f32 %v1702, %v1715
        %v1722 = vmul.f32 %v1703, %v1711
        %v1723 = vmul.f32 %v1704, %v1715
        %v1724 = vmul.f32 %v1705, %v1711
        %v1725 = vmul.f32 %v1706, %v1715
        %v1726 = vadd.f32 %v1250, %v1718
        %v1727 = vadd.f32 %v1251, %v1719
        %v1728 = vadd.f32 %v1252, %v1720
        %v1729 = vadd.f32 %v1253, %v1721
        %v1730 = vadd.f32 %v1254, %v1722
        %v1731 = vadd.f32 %v1255, %v1723
        %v1732 = vadd.f32 %v1256, %v1724
        %v1733 = vadd.f32 %v1257, %v1725
        %v1734 = vld [vmem:[%s2] sm:$0xff]
        %v1735 = vld [vmem:[%s2 + $0x8] sm:$0xff]
        %v1736 = vld [vmem:[%s2 + $0x10] sm:$0xff]
        %v1737 = vld [vmem:[%s2 + $0x18] sm:$0xff]
        %1739 = vset.pattern.permute.xlu0 0
        %1740 = vperm.xlu0 %1739, %v1734
        %v1741 = vpop.permute.xlu0 %1740
        %1744 = vset.pattern.permute.xlu0 0
        %1745 = vperm.xlu0 %1744, %v1735
        %v1746 = vpop.permute.xlu0 %1745
        %1749 = vset.pattern.permute.xlu0 0
        %1750 = vperm.xlu0 %1749, %v1736
        %v1751 = vpop.permute.xlu0 %1750
        %1754 = vset.pattern.permute.xlu0 0
        %1755 = vperm.xlu0 %1754, %v1737
        %v1756 = vpop.permute.xlu0 %1755
        %v1758 = vadd.f32 %v1726, %v1741
        %v1759 = vadd.f32 %v1727, %v1741
        %v1760 = vadd.f32 %v1728, %v1746
        %v1761 = vadd.f32 %v1729, %v1746
        %v1762 = vadd.f32 %v1730, %v1751
        %v1763 = vadd.f32 %v1731, %v1751
        %v1764 = vadd.f32 %v1732, %v1756
        %v1765 = vadd.f32 %v1733, %v1756
        %v1766 = vmax.f32 %v1758, 0.0
        %v1767 = vmax.f32 %v1759, 0.0
        %v1768 = vmax.f32 %v1760, 0.0
        %v1769 = vmax.f32 %v1761, 0.0
        %v1770 = vmax.f32 %v1762, 0.0
        %v1771 = vmax.f32 %v1763, 0.0
        %v1772 = vmax.f32 %v1764, 0.0
        %v1773 = vmax.f32 %v1765, 0.0
        %1774 = vst [vmem:[#allocation2 + $0x8] sm:$0xff] %v1766
        %1775 = vst [vmem:[#allocation2 + $0x10] sm:$0xff] %v1767
        %1776 = vst [vmem:[#allocation2 + $0x28] sm:$0xff] %v1768
        %1777 = vst [vmem:[#allocation2 + $0x30] sm:$0xff] %v1769
        %1778 = vst [vmem:[#allocation2 + $0x48] sm:$0xff] %v1770
        %1779 = vst [vmem:[#allocation2 + $0x50] sm:$0xff] %v1771
        %1780 = vst [vmem:[#allocation2 + $0x68] sm:$0xff] %v1772
        %1781 = vst [vmem:[#allocation2 + $0x70] sm:$0xff] %v1773
        %v1782 = vld [vmem:[#allocation8] sm:$0xff]
        %v1783 = vld [vmem:[#allocation8 + $0x8] sm:$0xff]
        %v1784 = vld [vmem:[#allocation8 + $0x10] sm:$0xff]
        %v1785 = vld [vmem:[#allocation8 + $0x18] sm:$0xff]
        %v1786 = vld [vmem:[#allocation2] sm:$0xff]
        %v1787 = vld [vmem:[#allocation2 + $0x8] sm:$0xff]
        %v1788 = vld [vmem:[#allocation2 + $0x10] sm:$0xff]
        %v1789 = vld [vmem:[#allocation2 + $0x20] sm:$0xff]
        %v1790 = vld [vmem:[#allocation2 + $0x28] sm:$0xff]
        %v1791 = vld [vmem:[#allocation2 + $0x30] sm:$0xff]
        %v1792 = vld [vmem:[#allocation2 + $0x40] sm:$0xff]
        %v1793 = vld [vmem:[#allocation2 + $0x48] sm:$0xff]
        %v1794 = vld [vmem:[#allocation2 + $0x50] sm:$0xff]
        %v1795 = vld [vmem:[#allocation2 + $0x60] sm:$0xff]
        %v1796 = vld [vmem:[#allocation2 + $0x68] sm:$0xff]
        %v1797 = vld [vmem:[#allocation2 + $0x70] sm:$0xff]
        %s1798 = scalar_lea.vmem [#allocation8], 96
        %v1799 = vld [vmem:[%s1798] sm:$0xff]
        %v1800 = vld [vmem:[%s1798 + $0x8] sm:$0xff]
        %v1801 = vld [vmem:[%s1798 + $0x10] sm:$0xff]
        %v1802 = vld [vmem:[%s1798 + $0x18] sm:$0xff]
        %1815 = vrot.lane.b32.xlu0 %v1786, 1
        %v1816 = vpop.permute.xlu0 %1815
        %1817 = vrot.lane.b32.xlu0 %v1787, 1
        %v1818 = vpop.permute.xlu0 %1817
        %1819 = vrot.lane.b32.xlu0 %v1788, 1
        %v1820 = vpop.permute.xlu0 %1819
        %1821 = vrot.lane.b32.xlu0 %v1789, 1
        %v1822 = vpop.permute.xlu0 %1821
        %1823 = vrot.lane.b32.xlu0 %v1790, 1
        %v1824 = vpop.permute.xlu0 %1823
        %1825 = vrot.lane.b32.xlu0 %v1791, 1
        %v1826 = vpop.permute.xlu0 %1825
        %1827 = vrot.lane.b32.xlu0 %v1792, 1
        %v1828 = vpop.permute.xlu0 %1827
        %1829 = vrot.lane.b32.xlu0 %v1793, 1
        %v1830 = vpop.permute.xlu0 %1829
        %1831 = vrot.lane.b32.xlu0 %v1794, 1
        %v1832 = vpop.permute.xlu0 %1831
        %1833 = vrot.lane.b32.xlu0 %v1795, 1
        %v1834 = vpop.permute.xlu0 %1833
        %1835 = vrot.lane.b32.xlu0 %v1796, 1
        %v1836 = vpop.permute.xlu0 %1835
        %1837 = vrot.lane.b32.xlu0 %v1797, 1
        %v1838 = vpop.permute.xlu0 %1837
        %v1839 = vsel %vm383, %v1816, %v1818
        %v1840 = vsel %vm383, %v1818, %v1820
        %v1841 = vsel %vm383, %v1822, %v1824
        %v1842 = vsel %vm383, %v1824, %v1826
        %v1843 = vsel %vm383, %v1828, %v1830
        %v1844 = vsel %vm383, %v1830, %v1832
        %v1845 = vsel %vm383, %v1834, %v1836
        %v1846 = vsel %vm383, %v1836, %v1838
        %v1856 = vsel %vm400, %v1799, 0
        %v1859 = vsel %vm400, %v1800, 0
        %v1862 = vsel %vm400, %v1801, 0
        %v1865 = vsel %vm400, %v1802, 0
        %1867 = vmatprep.subr.mxu0 0.0
        %1868 = vmatpush1.msra.mxu0 0.0
        %1869 = vmatprep.subr.mxu0 0.0
        %1870 = vmatpush1.msra.mxu0 0.0
        %1871 = vmatprep.subr.mxu0 0.0
        %1872 = vmatpush1.msra.mxu0 0.0
        %1873 = vmatprep.subr.mxu0 0.0
        %1874 = vmatpush1.msra.mxu0 0.0
        %1875 = vmatprep.subr.mxu0 0.0
        %1876 = vmatpush1.msra.mxu0 0.0
        %1877 = vmatprep.subr.mxu0 0.0
        %1878 = vmatpush1.msra.mxu0 0.0
        %1879 = vmatprep.subr.mxu0 0.0
        %1880 = vmatpush1.msra.mxu0 0.0
        %1881 = vmatprep.subr.mxu0 0.0
        %1882 = vmatpush1.msra.mxu0 0.0
        %1883 = vmatprep.subr.mxu0 0.0
        %1884 = vmatpush1.msra.mxu0 0.0
        %1885 = vmatprep.subr.mxu0 0.0
        %1886 = vmatpush1.msra.mxu0 0.0
        %1887 = vmatprep.subr.mxu0 0.0
        %1888 = vmatpush1.msra.mxu0 0.0
        %1889 = vmatprep.subr.mxu0 0.0
        %1890 = vmatpush1.msra.mxu0 0.0
        %1891 = vmatprep.subr.mxu0 %v1846
        %1892 = vmatpush1.msra.mxu0 %v1845
        %1893 = vmatprep.subr.mxu0 %v1844
        %1894 = vmatpush1.msra.mxu0 %v1843
        %1895 = vmatprep.subr.mxu0 %v1842
        %1896 = vmatpush1.msra.mxu0 %v1841
        %1897 = vmatprep.subr.mxu0 %v1840
        %1898 = vmatpush1.msra.mxu0 %v1839
        %1899 = vmatprep.subr.mxu0 0.0
        %1900 = vmatpush2.msra.mxu0 0.0
        %1901 = vmatprep.subr.mxu0 0.0
        %1902 = vmatpush2.msra.mxu0 0.0
        %1903 = vmatprep.subr.mxu0 0.0
        %1904 = vmatpush2.msra.mxu0 0.0
        %1905 = vmatprep.subr.mxu0 0.0
        %1906 = vmatpush2.msra.mxu0 0.0
        %1907 = vmatprep.subr.mxu0 0.0
        %1908 = vmatpush2.msra.mxu0 0.0
        %1909 = vmatprep.subr.mxu0 0.0
        %1910 = vmatpush2.msra.mxu0 0.0
        %1911 = vmatprep.subr.mxu0 0.0
        %1912 = vmatpush2.msra.mxu0 0.0
        %1913 = vmatprep.subr.mxu0 0.0
        %1914 = vmatpush2.msra.mxu0 0.0
        %1915 = vmatprep.subr.mxu0 0.0
        %1916 = vmatpush2.msra.mxu0 0.0
        %1917 = vmatprep.subr.mxu0 0.0
        %1918 = vmatpush2.msra.mxu0 0.0
        %1919 = vmatprep.subr.mxu0 0.0
        %1920 = vmatpush2.msra.mxu0 0.0
        %1921 = vmatprep.subr.mxu0 0.0
        %1922 = vmatpush2.msra.mxu0 0.0
        %1923 = vmatprep.subr.mxu0 0.0
        %1924 = vmatpush2.msra.mxu0 0.0
        %1925 = vmatprep.subr.mxu0 0.0
        %1926 = vmatpush2.msra.mxu0 0.0
        %1927 = vmatprep.subr.mxu0 0.0
        %1928 = vmatpush2.msra.mxu0 0.0
        %1929 = vmatprep.subr.mxu0 0.0
        %1930 = vmatpush2.msra.mxu0 0.0
        %1931 = vmatprep.mubr.f32.mxu0 0.0
        %1932 = vmatmul.mubr.f32.gmra.mxu0 %v1856
        %v1933 = vpop.f32.mrf.mxu0
        %v1934 = vadd.f32 0.0, %v1933
        %v1935 = vpop.f32.mrf.mxu0
        %v1936 = vadd.f32 0.0, %v1935
        %1937 = vmatprep.mubr.f32.mxu0 0.0
        %1938 = vmatmul.mubr.f32.gmra.mxu0 %v1859
        %v1939 = vpop.f32.mrf.mxu0
        %v1940 = vadd.f32 0.0, %v1939
        %v1941 = vpop.f32.mrf.mxu0
        %v1942 = vadd.f32 0.0, %v1941
        %1943 = vmatprep.mubr.f32.mxu0 0.0
        %1944 = vmatmul.mubr.f32.gmra.mxu0 %v1862
        %v1945 = vpop.f32.mrf.mxu0
        %v1946 = vadd.f32 0.0, %v1945
        %v1947 = vpop.f32.mrf.mxu0
        %v1948 = vadd.f32 0.0, %v1947
        %1949 = vmatprep.mubr.f32.mxu0 0.0
        %1950 = vmatmul.mubr.f32.gmra.mxu0 %v1865
        %v1951 = vpop.f32.mrf.mxu0
        %v1952 = vadd.f32 0.0, %v1951
        %v1953 = vpop.f32.mrf.mxu0
        %v1954 = vadd.f32 0.0, %v1953
        %1955 = vdwg.mxu0
        %1956 = vrot.lane.b32.xlu0 %v1786, 17
        %v1957 = vpop.permute.xlu0 %1956
        %1958 = vrot.lane.b32.xlu0 %v1787, 17
        %v1959 = vpop.permute.xlu0 %1958
        %1960 = vrot.lane.b32.xlu0 %v1788, 17
        %v1961 = vpop.permute.xlu0 %1960
        %1962 = vrot.lane.b32.xlu0 %v1789, 17
        %v1963 = vpop.permute.xlu0 %1962
        %1964 = vrot.lane.b32.xlu0 %v1790, 17
        %v1965 = vpop.permute.xlu0 %1964
        %1966 = vrot.lane.b32.xlu0 %v1791, 17
        %v1967 = vpop.permute.xlu0 %1966
        %1968 = vrot.lane.b32.xlu0 %v1792, 17
        %v1969 = vpop.permute.xlu0 %1968
        %1970 = vrot.lane.b32.xlu0 %v1793, 17
        %v1971 = vpop.permute.xlu0 %1970
        %1972 = vrot.lane.b32.xlu0 %v1794, 17
        %v1973 = vpop.permute.xlu0 %1972
        %1974 = vrot.lane.b32.xlu0 %v1795, 17
        %v1975 = vpop.permute.xlu0 %1974
        %1976 = vrot.lane.b32.xlu0 %v1796, 17
        %v1977 = vpop.permute.xlu0 %1976
        %1978 = vrot.lane.b32.xlu0 %v1797, 17
        %v1979 = vpop.permute.xlu0 %1978
        %v1980 = vsel %vm526, %v1957, %v1959
        %v1981 = vsel %vm526, %v1959, %v1961
        %v1982 = vsel %vm526, %v1963, %v1965
        %v1983 = vsel %vm526, %v1965, %v1967
        %v1984 = vsel %vm526, %v1969, %v1971
        %v1985 = vsel %vm526, %v1971, %v1973
        %v1986 = vsel %vm526, %v1975, %v1977
        %v1987 = vsel %vm526, %v1977, %v1979
        %v1997 = vsel %vm400, %v1782, 0
        %v2000 = vsel %vm400, %v1783, 0
        %v2003 = vsel %vm400, %v1784, 0
        %v2006 = vsel %vm400, %v1785, 0
        %2008 = vmatprep.subr.mxu0 0.0
        %2009 = vmatpush1.msra.mxu0 0.0
        %2010 = vmatprep.subr.mxu0 0.0
        %2011 = vmatpush1.msra.mxu0 0.0
        %2012 = vmatprep.subr.mxu0 0.0
        %2013 = vmatpush1.msra.mxu0 0.0
        %2014 = vmatprep.subr.mxu0 0.0
        %2015 = vmatpush1.msra.mxu0 0.0
        %2016 = vmatprep.subr.mxu0 0.0
        %2017 = vmatpush1.msra.mxu0 0.0
        %2018 = vmatprep.subr.mxu0 0.0
        %2019 = vmatpush1.msra.mxu0 0.0
        %2020 = vmatprep.subr.mxu0 0.0
        %2021 = vmatpush1.msra.mxu0 0.0
        %2022 = vmatprep.subr.mxu0 0.0
        %2023 = vmatpush1.msra.mxu0 0.0
        %2024 = vmatprep.subr.mxu0 0.0
        %2025 = vmatpush1.msra.mxu0 0.0
        %2026 = vmatprep.subr.mxu0 0.0
        %2027 = vmatpush1.msra.mxu0 0.0
        %2028 = vmatprep.subr.mxu0 0.0
        %2029 = vmatpush1.msra.mxu0 0.0
        %2030 = vmatprep.subr.mxu0 0.0
        %2031 = vmatpush1.msra.mxu0 0.0
        %2032 = vmatprep.subr.mxu0 %v1987
        %2033 = vmatpush1.msra.mxu0 %v1986
        %2034 = vmatprep.subr.mxu0 %v1985
        %2035 = vmatpush1.msra.mxu0 %v1984
        %2036 = vmatprep.subr.mxu0 %v1983
        %2037 = vmatpush1.msra.mxu0 %v1982
        %2038 = vmatprep.subr.mxu0 %v1981
        %2039 = vmatpush1.msra.mxu0 %v1980
        %2040 = vmatprep.subr.mxu0 0.0
        %2041 = vmatpush2.msra.mxu0 0.0
        %2042 = vmatprep.subr.mxu0 0.0
        %2043 = vmatpush2.msra.mxu0 0.0
        %2044 = vmatprep.subr.mxu0 0.0
        %2045 = vmatpush2.msra.mxu0 0.0
        %2046 = vmatprep.subr.mxu0 0.0
        %2047 = vmatpush2.msra.mxu0 0.0
        %2048 = vmatprep.subr.mxu0 0.0
        %2049 = vmatpush2.msra.mxu0 0.0
        %2050 = vmatprep.subr.mxu0 0.0
        %2051 = vmatpush2.msra.mxu0 0.0
        %2052 = vmatprep.subr.mxu0 0.0
        %2053 = vmatpush2.msra.mxu0 0.0
        %2054 = vmatprep.subr.mxu0 0.0
        %2055 = vmatpush2.msra.mxu0 0.0
        %2056 = vmatprep.subr.mxu0 0.0
        %2057 = vmatpush2.msra.mxu0 0.0
        %2058 = vmatprep.subr.mxu0 0.0
        %2059 = vmatpush2.msra.mxu0 0.0
        %2060 = vmatprep.subr.mxu0 0.0
        %2061 = vmatpush2.msra.mxu0 0.0
        %2062 = vmatprep.subr.mxu0 0.0
        %2063 = vmatpush2.msra.mxu0 0.0
        %2064 = vmatprep.subr.mxu0 0.0
        %2065 = vmatpush2.msra.mxu0 0.0
        %2066 = vmatprep.subr.mxu0 0.0
        %2067 = vmatpush2.msra.mxu0 0.0
        %2068 = vmatprep.subr.mxu0 0.0
        %2069 = vmatpush2.msra.mxu0 0.0
        %2070 = vmatprep.subr.mxu0 0.0
        %2071 = vmatpush2.msra.mxu0 0.0
        %2072 = vmatprep.mubr.f32.mxu0 0.0
        %2073 = vmatmul.mubr.f32.gmra.mxu0 %v1997
        %v2074 = vpop.f32.mrf.mxu0
        %v2075 = vadd.f32 %v1934, %v2074
        %v2076 = vpop.f32.mrf.mxu0
        %v2077 = vadd.f32 %v1936, %v2076
        %2078 = vmatprep.mubr.f32.mxu0 0.0
        %2079 = vmatmul.mubr.f32.gmra.mxu0 %v2000
        %v2080 = vpop.f32.mrf.mxu0
        %v2081 = vadd.f32 %v1940, %v2080
        %v2082 = vpop.f32.mrf.mxu0
        %v2083 = vadd.f32 %v1942, %v2082
        %2084 = vmatprep.mubr.f32.mxu0 0.0
        %2085 = vmatmul.mubr.f32.gmra.mxu0 %v2003
        %v2086 = vpop.f32.mrf.mxu0
        %v2087 = vadd.f32 %v1946, %v2086
        %v2088 = vpop.f32.mrf.mxu0
        %v2089 = vadd.f32 %v1948, %v2088
        %2090 = vmatprep.mubr.f32.mxu0 0.0
        %2091 = vmatmul.mubr.f32.gmra.mxu0 %v2006
        %v2092 = vpop.f32.mrf.mxu0
        %v2093 = vadd.f32 %v1952, %v2092
        %v2094 = vpop.f32.mrf.mxu0
        %v2095 = vadd.f32 %v1954, %v2094
        %2096 = vdwg.mxu0
        %s2097 = scalar_lea.vmem [#allocation8], 192
        %v2098 = vld [vmem:[%s2097] sm:$0xff]
        %v2099 = vld [vmem:[%s2097 + $0x8] sm:$0xff]
        %v2100 = vld [vmem:[%s2097 + $0x10] sm:$0xff]
        %v2101 = vld [vmem:[%s2097 + $0x18] sm:$0xff]
        %v2102 = vld [vmem:[#allocation2 + $0x8] sm:$0xff]
        %v2103 = vld [vmem:[#allocation2 + $0x10] sm:$0xff]
        %v2104 = vld [vmem:[#allocation2 + $0x18] sm:$0xff]
        %v2105 = vld [vmem:[#allocation2 + $0x28] sm:$0xff]
        %v2106 = vld [vmem:[#allocation2 + $0x30] sm:$0xff]
        %v2107 = vld [vmem:[#allocation2 + $0x38] sm:$0xff]
        %v2108 = vld [vmem:[#allocation2 + $0x48] sm:$0xff]
        %v2109 = vld [vmem:[#allocation2 + $0x50] sm:$0xff]
        %v2110 = vld [vmem:[#allocation2 + $0x58] sm:$0xff]
        %v2111 = vld [vmem:[#allocation2 + $0x68] sm:$0xff]
        %v2112 = vld [vmem:[#allocation2 + $0x70] sm:$0xff]
        %v2113 = vld [vmem:[#allocation2 + $0x78] sm:$0xff]
        %2126 = vrot.lane.b32.xlu0 %v2102, 113
        %v2127 = vpop.permute.xlu0 %2126
        %2128 = vrot.lane.b32.xlu0 %v2103, 113
        %v2129 = vpop.permute.xlu0 %2128
        %2130 = vrot.lane.b32.xlu0 %v2104, 113
        %v2131 = vpop.permute.xlu0 %2130
        %2132 = vrot.lane.b32.xlu0 %v2105, 113
        %v2133 = vpop.permute.xlu0 %2132
        %2134 = vrot.lane.b32.xlu0 %v2106, 113
        %v2135 = vpop.permute.xlu0 %2134
        %2136 = vrot.lane.b32.xlu0 %v2107, 113
        %v2137 = vpop.permute.xlu0 %2136
        %2138 = vrot.lane.b32.xlu0 %v2108, 113
        %v2139 = vpop.permute.xlu0 %2138
        %2140 = vrot.lane.b32.xlu0 %v2109, 113
        %v2141 = vpop.permute.xlu0 %2140
        %2142 = vrot.lane.b32.xlu0 %v2110, 113
        %v2143 = vpop.permute.xlu0 %2142
        %2144 = vrot.lane.b32.xlu0 %v2111, 113
        %v2145 = vpop.permute.xlu0 %2144
        %2146 = vrot.lane.b32.xlu0 %v2112, 113
        %v2147 = vpop.permute.xlu0 %2146
        %2148 = vrot.lane.b32.xlu0 %v2113, 113
        %v2149 = vpop.permute.xlu0 %2148
        %v2150 = vsel %vm697, %v2127, %v2129
        %v2151 = vsel %vm697, %v2129, %v2131
        %v2152 = vsel %vm697, %v2133, %v2135
        %v2153 = vsel %vm697, %v2135, %v2137
        %v2154 = vsel %vm697, %v2139, %v2141
        %v2155 = vsel %vm697, %v2141, %v2143
        %v2156 = vsel %vm697, %v2145, %v2147
        %v2157 = vsel %vm697, %v2147, %v2149
        %v2167 = vsel %vm400, %v2098, 0
        %v2170 = vsel %vm400, %v2099, 0
        %v2173 = vsel %vm400, %v2100, 0
        %v2176 = vsel %vm400, %v2101, 0
        %2178 = vmatprep.subr.mxu0 0.0
        %2179 = vmatpush1.msra.mxu0 0.0
        %2180 = vmatprep.subr.mxu0 0.0
        %2181 = vmatpush1.msra.mxu0 0.0
        %2182 = vmatprep.subr.mxu0 0.0
        %2183 = vmatpush1.msra.mxu0 0.0
        %2184 = vmatprep.subr.mxu0 0.0
        %2185 = vmatpush1.msra.mxu0 0.0
        %2186 = vmatprep.subr.mxu0 0.0
        %2187 = vmatpush1.msra.mxu0 0.0
        %2188 = vmatprep.subr.mxu0 0.0
        %2189 = vmatpush1.msra.mxu0 0.0
        %2190 = vmatprep.subr.mxu0 0.0
        %2191 = vmatpush1.msra.mxu0 0.0
        %2192 = vmatprep.subr.mxu0 0.0
        %2193 = vmatpush1.msra.mxu0 0.0
        %2194 = vmatprep.subr.mxu0 0.0
        %2195 = vmatpush1.msra.mxu0 0.0
        %2196 = vmatprep.subr.mxu0 0.0
        %2197 = vmatpush1.msra.mxu0 0.0
        %2198 = vmatprep.subr.mxu0 0.0
        %2199 = vmatpush1.msra.mxu0 0.0
        %2200 = vmatprep.subr.mxu0 0.0
        %2201 = vmatpush1.msra.mxu0 0.0
        %2202 = vmatprep.subr.mxu0 %v2157
        %2203 = vmatpush1.msra.mxu0 %v2156
        %2204 = vmatprep.subr.mxu0 %v2155
        %2205 = vmatpush1.msra.mxu0 %v2154
        %2206 = vmatprep.subr.mxu0 %v2153
        %2207 = vmatpush1.msra.mxu0 %v2152
        %2208 = vmatprep.subr.mxu0 %v2151
        %2209 = vmatpush1.msra.mxu0 %v2150
        %2210 = vmatprep.subr.mxu0 0.0
        %2211 = vmatpush2.msra.mxu0 0.0
        %2212 = vmatprep.subr.mxu0 0.0
        %2213 = vmatpush2.msra.mxu0 0.0
        %2214 = vmatprep.subr.mxu0 0.0
        %2215 = vmatpush2.msra.mxu0 0.0
        %2216 = vmatprep.subr.mxu0 0.0
        %2217 = vmatpush2.msra.mxu0 0.0
        %2218 = vmatprep.subr.mxu0 0.0
        %2219 = vmatpush2.msra.mxu0 0.0
        %2220 = vmatprep.subr.mxu0 0.0
        %2221 = vmatpush2.msra.mxu0 0.0
        %2222 = vmatprep.subr.mxu0 0.0
        %2223 = vmatpush2.msra.mxu0 0.0
        %2224 = vmatprep.subr.mxu0 0.0
        %2225 = vmatpush2.msra.mxu0 0.0
        %2226 = vmatprep.subr.mxu0 0.0
        %2227 = vmatpush2.msra.mxu0 0.0
        %2228 = vmatprep.subr.mxu0 0.0
        %2229 = vmatpush2.msra.mxu0 0.0
        %2230 = vmatprep.subr.mxu0 0.0
        %2231 = vmatpush2.msra.mxu0 0.0
        %2232 = vmatprep.subr.mxu0 0.0
        %2233 = vmatpush2.msra.mxu0 0.0
        %2234 = vmatprep.subr.mxu0 0.0
        %2235 = vmatpush2.msra.mxu0 0.0
        %2236 = vmatprep.subr.mxu0 0.0
        %2237 = vmatpush2.msra.mxu0 0.0
        %2238 = vmatprep.subr.mxu0 0.0
        %2239 = vmatpush2.msra.mxu0 0.0
        %2240 = vmatprep.subr.mxu0 0.0
        %2241 = vmatpush2.msra.mxu0 0.0
        %2242 = vmatprep.mubr.f32.mxu0 0.0
        %2243 = vmatmul.mubr.f32.gmra.mxu0 %v2167
        %v2244 = vpop.f32.mrf.mxu0
        %v2245 = vadd.f32 0.0, %v2244
        %v2246 = vpop.f32.mrf.mxu0
        %v2247 = vadd.f32 0.0, %v2246
        %2248 = vmatprep.mubr.f32.mxu0 0.0
        %2249 = vmatmul.mubr.f32.gmra.mxu0 %v2170
        %v2250 = vpop.f32.mrf.mxu0
        %v2251 = vadd.f32 0.0, %v2250
        %v2252 = vpop.f32.mrf.mxu0
        %v2253 = vadd.f32 0.0, %v2252
        %2254 = vmatprep.mubr.f32.mxu0 0.0
        %2255 = vmatmul.mubr.f32.gmra.mxu0 %v2173
        %v2256 = vpop.f32.mrf.mxu0
        %v2257 = vadd.f32 0.0, %v2256
        %v2258 = vpop.f32.mrf.mxu0
        %v2259 = vadd.f32 0.0, %v2258
        %2260 = vmatprep.mubr.f32.mxu0 0.0
        %2261 = vmatmul.mubr.f32.gmra.mxu0 %v2176
        %v2262 = vpop.f32.mrf.mxu0
        %v2263 = vadd.f32 0.0, %v2262
        %v2264 = vpop.f32.mrf.mxu0
        %v2265 = vadd.f32 0.0, %v2264
        %2266 = vdwg.mxu0
        %v2267 = vadd.f32 %v2075, %v2245
        %v2268 = vadd.f32 %v2077, %v2247
        %v2269 = vadd.f32 %v2081, %v2251
        %v2270 = vadd.f32 %v2083, %v2253
        %v2271 = vadd.f32 %v2087, %v2257
        %v2272 = vadd.f32 %v2089, %v2259
        %v2273 = vadd.f32 %v2093, %v2263
        %v2274 = vadd.f32 %v2095, %v2265
        %v2275 = vmul.f32 %v2267, %v827
        %v2276 = vmul.f32 %v2268, %v831
        %v2277 = vmul.f32 %v2269, %v827
        %v2278 = vmul.f32 %v2270, %v831
        %v2279 = vmul.f32 %v2271, %v827
        %v2280 = vmul.f32 %v2272, %v831
        %v2281 = vmul.f32 %v2273, %v827
        %v2282 = vmul.f32 %v2274, %v831
        %s2283 = scalar_lea.vmem [#allocation8], 32
        %v2284 = vld [vmem:[%s2283] sm:$0xff]
        %v2285 = vld [vmem:[%s2283 + $0x8] sm:$0xff]
        %v2286 = vld [vmem:[%s2283 + $0x10] sm:$0xff]
        %v2287 = vld [vmem:[%s2283 + $0x18] sm:$0xff]
        %s2288 = scalar_lea.vmem [#allocation8], 128
        %v2289 = vld [vmem:[%s2288] sm:$0xff]
        %v2290 = vld [vmem:[%s2288 + $0x8] sm:$0xff]
        %v2291 = vld [vmem:[%s2288 + $0x10] sm:$0xff]
        %v2292 = vld [vmem:[%s2288 + $0x18] sm:$0xff]
        %v2294 = vsel %vm400, %v2289, 0
        %v2297 = vsel %vm400, %v2290, 0
        %v2300 = vsel %vm400, %v2291, 0
        %v2303 = vsel %vm400, %v2292, 0
        %2305 = vmatprep.subr.mxu0 0.0
        %2306 = vmatpush1.msra.mxu0 0.0
        %2307 = vmatprep.subr.mxu0 0.0
        %2308 = vmatpush1.msra.mxu0 0.0
        %2309 = vmatprep.subr.mxu0 0.0
        %2310 = vmatpush1.msra.mxu0 0.0
        %2311 = vmatprep.subr.mxu0 0.0
        %2312 = vmatpush1.msra.mxu0 0.0
        %2313 = vmatprep.subr.mxu0 0.0
        %2314 = vmatpush1.msra.mxu0 0.0
        %2315 = vmatprep.subr.mxu0 0.0
        %2316 = vmatpush1.msra.mxu0 0.0
        %2317 = vmatprep.subr.mxu0 0.0
        %2318 = vmatpush1.msra.mxu0 0.0
        %2319 = vmatprep.subr.mxu0 0.0
        %2320 = vmatpush1.msra.mxu0 0.0
        %2321 = vmatprep.subr.mxu0 0.0
        %2322 = vmatpush1.msra.mxu0 0.0
        %2323 = vmatprep.subr.mxu0 0.0
        %2324 = vmatpush1.msra.mxu0 0.0
        %2325 = vmatprep.subr.mxu0 0.0
        %2326 = vmatpush1.msra.mxu0 0.0
        %2327 = vmatprep.subr.mxu0 0.0
        %2328 = vmatpush1.msra.mxu0 0.0
        %2329 = vmatprep.subr.mxu0 %v1797
        %2330 = vmatpush1.msra.mxu0 %v1796
        %2331 = vmatprep.subr.mxu0 %v1794
        %2332 = vmatpush1.msra.mxu0 %v1793
        %2333 = vmatprep.subr.mxu0 %v1791
        %2334 = vmatpush1.msra.mxu0 %v1790
        %2335 = vmatprep.subr.mxu0 %v1788
        %2336 = vmatpush1.msra.mxu0 %v1787
        %2337 = vmatprep.subr.mxu0 0.0
        %2338 = vmatpush2.msra.mxu0 0.0
        %2339 = vmatprep.subr.mxu0 0.0
        %2340 = vmatpush2.msra.mxu0 0.0
        %2341 = vmatprep.subr.mxu0 0.0
        %2342 = vmatpush2.msra.mxu0 0.0
        %2343 = vmatprep.subr.mxu0 0.0
        %2344 = vmatpush2.msra.mxu0 0.0
        %2345 = vmatprep.subr.mxu0 0.0
        %2346 = vmatpush2.msra.mxu0 0.0
        %2347 = vmatprep.subr.mxu0 0.0
        %2348 = vmatpush2.msra.mxu0 0.0
        %2349 = vmatprep.subr.mxu0 0.0
        %2350 = vmatpush2.msra.mxu0 0.0
        %2351 = vmatprep.subr.mxu0 0.0
        %2352 = vmatpush2.msra.mxu0 0.0
        %2353 = vmatprep.subr.mxu0 0.0
        %2354 = vmatpush2.msra.mxu0 0.0
        %2355 = vmatprep.subr.mxu0 0.0
        %2356 = vmatpush2.msra.mxu0 0.0
        %2357 = vmatprep.subr.mxu0 0.0
        %2358 = vmatpush2.msra.mxu0 0.0
        %2359 = vmatprep.subr.mxu0 0.0
        %2360 = vmatpush2.msra.mxu0 0.0
        %2361 = vmatprep.subr.mxu0 0.0
        %2362 = vmatpush2.msra.mxu0 0.0
        %2363 = vmatprep.subr.mxu0 0.0
        %2364 = vmatpush2.msra.mxu0 0.0
        %2365 = vmatprep.subr.mxu0 0.0
        %2366 = vmatpush2.msra.mxu0 0.0
        %2367 = vmatprep.subr.mxu0 0.0
        %2368 = vmatpush2.msra.mxu0 0.0
        %2369 = vmatprep.mubr.f32.mxu0 0.0
        %2370 = vmatmul.mubr.f32.gmra.mxu0 %v2294
        %v2371 = vpop.f32.mrf.mxu0
        %v2372 = vadd.f32 0.0, %v2371
        %v2373 = vpop.f32.mrf.mxu0
        %v2374 = vadd.f32 0.0, %v2373
        %2375 = vmatprep.mubr.f32.mxu0 0.0
        %2376 = vmatmul.mubr.f32.gmra.mxu0 %v2297
        %v2377 = vpop.f32.mrf.mxu0
        %v2378 = vadd.f32 0.0, %v2377
        %v2379 = vpop.f32.mrf.mxu0
        %v2380 = vadd.f32 0.0, %v2379
        %2381 = vmatprep.mubr.f32.mxu0 0.0
        %2382 = vmatmul.mubr.f32.gmra.mxu0 %v2300
        %v2383 = vpop.f32.mrf.mxu0
        %v2384 = vadd.f32 0.0, %v2383
        %v2385 = vpop.f32.mrf.mxu0
        %v2386 = vadd.f32 0.0, %v2385
        %2387 = vmatprep.mubr.f32.mxu0 0.0
        %2388 = vmatmul.mubr.f32.gmra.mxu0 %v2303
        %v2389 = vpop.f32.mrf.mxu0
        %v2390 = vadd.f32 0.0, %v2389
        %v2391 = vpop.f32.mrf.mxu0
        %v2392 = vadd.f32 0.0, %v2391
        %2393 = vdwg.mxu0
        %2394 = vrot.lane.b32.xlu0 %v1786, 16
        %v2395 = vpop.permute.xlu0 %2394
        %2396 = vrot.lane.b32.xlu0 %v1787, 16
        %v2397 = vpop.permute.xlu0 %2396
        %2398 = vrot.lane.b32.xlu0 %v1788, 16
        %v2399 = vpop.permute.xlu0 %2398
        %2400 = vrot.lane.b32.xlu0 %v1789, 16
        %v2401 = vpop.permute.xlu0 %2400
        %2402 = vrot.lane.b32.xlu0 %v1790, 16
        %v2403 = vpop.permute.xlu0 %2402
        %2404 = vrot.lane.b32.xlu0 %v1791, 16
        %v2405 = vpop.permute.xlu0 %2404
        %2406 = vrot.lane.b32.xlu0 %v1792, 16
        %v2407 = vpop.permute.xlu0 %2406
        %2408 = vrot.lane.b32.xlu0 %v1793, 16
        %v2409 = vpop.permute.xlu0 %2408
        %2410 = vrot.lane.b32.xlu0 %v1794, 16
        %v2411 = vpop.permute.xlu0 %2410
        %2412 = vrot.lane.b32.xlu0 %v1795, 16
        %v2413 = vpop.permute.xlu0 %2412
        %2414 = vrot.lane.b32.xlu0 %v1796, 16
        %v2415 = vpop.permute.xlu0 %2414
        %2416 = vrot.lane.b32.xlu0 %v1797, 16
        %v2417 = vpop.permute.xlu0 %2416
        %v2418 = vsel %vm977, %v2395, %v2397
        %v2419 = vsel %vm977, %v2397, %v2399
        %v2420 = vsel %vm977, %v2401, %v2403
        %v2421 = vsel %vm977, %v2403, %v2405
        %v2422 = vsel %vm977, %v2407, %v2409
        %v2423 = vsel %vm977, %v2409, %v2411
        %v2424 = vsel %vm977, %v2413, %v2415
        %v2425 = vsel %vm977, %v2415, %v2417
        %v2435 = vsel %vm400, %v2284, 0
        %v2438 = vsel %vm400, %v2285, 0
        %v2441 = vsel %vm400, %v2286, 0
        %v2444 = vsel %vm400, %v2287, 0
        %2446 = vmatprep.subr.mxu0 0.0
        %2447 = vmatpush1.msra.mxu0 0.0
        %2448 = vmatprep.subr.mxu0 0.0
        %2449 = vmatpush1.msra.mxu0 0.0
        %2450 = vmatprep.subr.mxu0 0.0
        %2451 = vmatpush1.msra.mxu0 0.0
        %2452 = vmatprep.subr.mxu0 0.0
        %2453 = vmatpush1.msra.mxu0 0.0
        %2454 = vmatprep.subr.mxu0 0.0
        %2455 = vmatpush1.msra.mxu0 0.0
        %2456 = vmatprep.subr.mxu0 0.0
        %2457 = vmatpush1.msra.mxu0 0.0
        %2458 = vmatprep.subr.mxu0 0.0
        %2459 = vmatpush1.msra.mxu0 0.0
        %2460 = vmatprep.subr.mxu0 0.0
        %2461 = vmatpush1.msra.mxu0 0.0
        %2462 = vmatprep.subr.mxu0 0.0
        %2463 = vmatpush1.msra.mxu0 0.0
        %2464 = vmatprep.subr.mxu0 0.0
        %2465 = vmatpush1.msra.mxu0 0.0
        %2466 = vmatprep.subr.mxu0 0.0
        %2467 = vmatpush1.msra.mxu0 0.0
        %2468 = vmatprep.subr.mxu0 0.0
        %2469 = vmatpush1.msra.mxu0 0.0
        %2470 = vmatprep.subr.mxu0 %v2425
        %2471 = vmatpush1.msra.mxu0 %v2424
        %2472 = vmatprep.subr.mxu0 %v2423
        %2473 = vmatpush1.msra.mxu0 %v2422
        %2474 = vmatprep.subr.mxu0 %v2421
        %2475 = vmatpush1.msra.mxu0 %v2420
        %2476 = vmatprep.subr.mxu0 %v2419
        %2477 = vmatpush1.msra.mxu0 %v2418
        %2478 = vmatprep.subr.mxu0 0.0
        %2479 = vmatpush2.msra.mxu0 0.0
        %2480 = vmatprep.subr.mxu0 0.0
        %2481 = vmatpush2.msra.mxu0 0.0
        %2482 = vmatprep.subr.mxu0 0.0
        %2483 = vmatpush2.msra.mxu0 0.0
        %2484 = vmatprep.subr.mxu0 0.0
        %2485 = vmatpush2.msra.mxu0 0.0
        %2486 = vmatprep.subr.mxu0 0.0
        %2487 = vmatpush2.msra.mxu0 0.0
        %2488 = vmatprep.subr.mxu0 0.0
        %2489 = vmatpush2.msra.mxu0 0.0
        %2490 = vmatprep.subr.mxu0 0.0
        %2491 = vmatpush2.msra.mxu0 0.0
        %2492 = vmatprep.subr.mxu0 0.0
        %2493 = vmatpush2.msra.mxu0 0.0
        %2494 = vmatprep.subr.mxu0 0.0
        %2495 = vmatpush2.msra.mxu0 0.0
        %2496 = vmatprep.subr.mxu0 0.0
        %2497 = vmatpush2.msra.mxu0 0.0
        %2498 = vmatprep.subr.mxu0 0.0
        %2499 = vmatpush2.msra.mxu0 0.0
        %2500 = vmatprep.subr.mxu0 0.0
        %2501 = vmatpush2.msra.mxu0 0.0
        %2502 = vmatprep.subr.mxu0 0.0
        %2503 = vmatpush2.msra.mxu0 0.0
        %2504 = vmatprep.subr.mxu0 0.0
        %2505 = vmatpush2.msra.mxu0 0.0
        %2506 = vmatprep.subr.mxu0 0.0
        %2507 = vmatpush2.msra.mxu0 0.0
        %2508 = vmatprep.subr.mxu0 0.0
        %2509 = vmatpush2.msra.mxu0 0.0
        %2510 = vmatprep.mubr.f32.mxu0 0.0
        %2511 = vmatmul.mubr.f32.gmra.mxu0 %v2435
        %v2512 = vpop.f32.mrf.mxu0
        %v2513 = vadd.f32 %v2372, %v2512
        %v2514 = vpop.f32.mrf.mxu0
        %v2515 = vadd.f32 %v2374, %v2514
        %2516 = vmatprep.mubr.f32.mxu0 0.0
        %2517 = vmatmul.mubr.f32.gmra.mxu0 %v2438
        %v2518 = vpop.f32.mrf.mxu0
        %v2519 = vadd.f32 %v2378, %v2518
        %v2520 = vpop.f32.mrf.mxu0
        %v2521 = vadd.f32 %v2380, %v2520
        %2522 = vmatprep.mubr.f32.mxu0 0.0
        %2523 = vmatmul.mubr.f32.gmra.mxu0 %v2441
        %v2524 = vpop.f32.mrf.mxu0
        %v2525 = vadd.f32 %v2384, %v2524
        %v2526 = vpop.f32.mrf.mxu0
        %v2527 = vadd.f32 %v2386, %v2526
        %2528 = vmatprep.mubr.f32.mxu0 0.0
        %2529 = vmatmul.mubr.f32.gmra.mxu0 %v2444
        %v2530 = vpop.f32.mrf.mxu0
        %v2531 = vadd.f32 %v2390, %v2530
        %v2532 = vpop.f32.mrf.mxu0
        %v2533 = vadd.f32 %v2392, %v2532
        %2534 = vdwg.mxu0
        %s2535 = scalar_lea.vmem [#allocation8], 224
        %v2536 = vld [vmem:[%s2535] sm:$0xff]
        %v2537 = vld [vmem:[%s2535 + $0x8] sm:$0xff]
        %v2538 = vld [vmem:[%s2535 + $0x10] sm:$0xff]
        %v2539 = vld [vmem:[%s2535 + $0x18] sm:$0xff]
        %2540 = vrot.lane.b32.xlu0 %v2102, 112
        %v2541 = vpop.permute.xlu0 %2540
        %2542 = vrot.lane.b32.xlu0 %v2103, 112
        %v2543 = vpop.permute.xlu0 %2542
        %2544 = vrot.lane.b32.xlu0 %v2104, 112
        %v2545 = vpop.permute.xlu0 %2544
        %2546 = vrot.lane.b32.xlu0 %v2105, 112
        %v2547 = vpop.permute.xlu0 %2546
        %2548 = vrot.lane.b32.xlu0 %v2106, 112
        %v2549 = vpop.permute.xlu0 %2548
        %2550 = vrot.lane.b32.xlu0 %v2107, 112
        %v2551 = vpop.permute.xlu0 %2550
        %2552 = vrot.lane.b32.xlu0 %v2108, 112
        %v2553 = vpop.permute.xlu0 %2552
        %2554 = vrot.lane.b32.xlu0 %v2109, 112
        %v2555 = vpop.permute.xlu0 %2554
        %2556 = vrot.lane.b32.xlu0 %v2110, 112
        %v2557 = vpop.permute.xlu0 %2556
        %2558 = vrot.lane.b32.xlu0 %v2111, 112
        %v2559 = vpop.permute.xlu0 %2558
        %2560 = vrot.lane.b32.xlu0 %v2112, 112
        %v2561 = vpop.permute.xlu0 %2560
        %2562 = vrot.lane.b32.xlu0 %v2113, 112
        %v2563 = vpop.permute.xlu0 %2562
        %v2564 = vsel %vm1124, %v2541, %v2543
        %v2565 = vsel %vm1124, %v2543, %v2545
        %v2566 = vsel %vm1124, %v2547, %v2549
        %v2567 = vsel %vm1124, %v2549, %v2551
        %v2568 = vsel %vm1124, %v2553, %v2555
        %v2569 = vsel %vm1124, %v2555, %v2557
        %v2570 = vsel %vm1124, %v2559, %v2561
        %v2571 = vsel %vm1124, %v2561, %v2563
        %v2581 = vsel %vm400, %v2536, 0
        %v2584 = vsel %vm400, %v2537, 0
        %v2587 = vsel %vm400, %v2538, 0
        %v2590 = vsel %vm400, %v2539, 0
        %2592 = vmatprep.subr.mxu0 0.0
        %2593 = vmatpush1.msra.mxu0 0.0
        %2594 = vmatprep.subr.mxu0 0.0
        %2595 = vmatpush1.msra.mxu0 0.0
        %2596 = vmatprep.subr.mxu0 0.0
        %2597 = vmatpush1.msra.mxu0 0.0
        %2598 = vmatprep.subr.mxu0 0.0
        %2599 = vmatpush1.msra.mxu0 0.0
        %2600 = vmatprep.subr.mxu0 0.0
        %2601 = vmatpush1.msra.mxu0 0.0
        %2602 = vmatprep.subr.mxu0 0.0
        %2603 = vmatpush1.msra.mxu0 0.0
        %2604 = vmatprep.subr.mxu0 0.0
        %2605 = vmatpush1.msra.mxu0 0.0
        %2606 = vmatprep.subr.mxu0 0.0
        %2607 = vmatpush1.msra.mxu0 0.0
        %2608 = vmatprep.subr.mxu0 0.0
        %2609 = vmatpush1.msra.mxu0 0.0
        %2610 = vmatprep.subr.mxu0 0.0
        %2611 = vmatpush1.msra.mxu0 0.0
        %2612 = vmatprep.subr.mxu0 0.0
        %2613 = vmatpush1.msra.mxu0 0.0
        %2614 = vmatprep.subr.mxu0 0.0
        %2615 = vmatpush1.msra.mxu0 0.0
        %2616 = vmatprep.subr.mxu0 %v2571
        %2617 = vmatpush1.msra.mxu0 %v2570
        %2618 = vmatprep.subr.mxu0 %v2569
        %2619 = vmatpush1.msra.mxu0 %v2568
        %2620 = vmatprep.subr.mxu0 %v2567
        %2621 = vmatpush1.msra.mxu0 %v2566
        %2622 = vmatprep.subr.mxu0 %v2565
        %2623 = vmatpush1.msra.mxu0 %v2564
        %2624 = vmatprep.subr.mxu0 0.0
        %2625 = vmatpush2.msra.mxu0 0.0
        %2626 = vmatprep.subr.mxu0 0.0
        %2627 = vmatpush2.msra.mxu0 0.0
        %2628 = vmatprep.subr.mxu0 0.0
        %2629 = vmatpush2.msra.mxu0 0.0
        %2630 = vmatprep.subr.mxu0 0.0
        %2631 = vmatpush2.msra.mxu0 0.0
        %2632 = vmatprep.subr.mxu0 0.0
        %2633 = vmatpush2.msra.mxu0 0.0
        %2634 = vmatprep.subr.mxu0 0.0
        %2635 = vmatpush2.msra.mxu0 0.0
        %2636 = vmatprep.subr.mxu0 0.0
        %2637 = vmatpush2.msra.mxu0 0.0
        %2638 = vmatprep.subr.mxu0 0.0
        %2639 = vmatpush2.msra.mxu0 0.0
        %2640 = vmatprep.subr.mxu0 0.0
        %2641 = vmatpush2.msra.mxu0 0.0
        %2642 = vmatprep.subr.mxu0 0.0
        %2643 = vmatpush2.msra.mxu0 0.0
        %2644 = vmatprep.subr.mxu0 0.0
        %2645 = vmatpush2.msra.mxu0 0.0
        %2646 = vmatprep.subr.mxu0 0.0
        %2647 = vmatpush2.msra.mxu0 0.0
        %2648 = vmatprep.subr.mxu0 0.0
        %2649 = vmatpush2.msra.mxu0 0.0
        %2650 = vmatprep.subr.mxu0 0.0
        %2651 = vmatpush2.msra.mxu0 0.0
        %2652 = vmatprep.subr.mxu0 0.0
        %2653 = vmatpush2.msra.mxu0 0.0
        %2654 = vmatprep.subr.mxu0 0.0
        %2655 = vmatpush2.msra.mxu0 0.0
        %2656 = vmatprep.mubr.f32.mxu0 0.0
        %2657 = vmatmul.mubr.f32.gmra.mxu0 %v2581
        %v2658 = vpop.f32.mrf.mxu0
        %v2659 = vadd.f32 0.0, %v2658
        %v2660 = vpop.f32.mrf.mxu0
        %v2661 = vadd.f32 0.0, %v2660
        %2662 = vmatprep.mubr.f32.mxu0 0.0
        %2663 = vmatmul.mubr.f32.gmra.mxu0 %v2584
        %v2664 = vpop.f32.mrf.mxu0
        %v2665 = vadd.f32 0.0, %v2664
        %v2666 = vpop.f32.mrf.mxu0
        %v2667 = vadd.f32 0.0, %v2666
        %2668 = vmatprep.mubr.f32.mxu0 0.0
        %2669 = vmatmul.mubr.f32.gmra.mxu0 %v2587
        %v2670 = vpop.f32.mrf.mxu0
        %v2671 = vadd.f32 0.0, %v2670
        %v2672 = vpop.f32.mrf.mxu0
        %v2673 = vadd.f32 0.0, %v2672
        %2674 = vmatprep.mubr.f32.mxu0 0.0
        %2675 = vmatmul.mubr.f32.gmra.mxu0 %v2590
        %v2676 = vpop.f32.mrf.mxu0
        %v2677 = vadd.f32 0.0, %v2676
        %v2678 = vpop.f32.mrf.mxu0
        %v2679 = vadd.f32 0.0, %v2678
        %2680 = vdwg.mxu0
        %v2681 = vadd.f32 %v2513, %v2659
        %v2682 = vadd.f32 %v2515, %v2661
        %v2683 = vadd.f32 %v2519, %v2665
        %v2684 = vadd.f32 %v2521, %v2667
        %v2685 = vadd.f32 %v2525, %v2671
        %v2686 = vadd.f32 %v2527, %v2673
        %v2687 = vadd.f32 %v2531, %v2677
        %v2688 = vadd.f32 %v2533, %v2679
        %v2689 = vadd.f32 %v2275, %v2681
        %v2690 = vadd.f32 %v2276, %v2682
        %v2691 = vadd.f32 %v2277, %v2683
        %v2692 = vadd.f32 %v2278, %v2684
        %v2693 = vadd.f32 %v2279, %v2685
        %v2694 = vadd.f32 %v2280, %v2686
        %v2695 = vadd.f32 %v2281, %v2687
        %v2696 = vadd.f32 %v2282, %v2688
        %s2697 = scalar_lea.vmem [#allocation8], 64
        %v2698 = vld [vmem:[%s2697] sm:$0xff]
        %v2699 = vld [vmem:[%s2697 + $0x8] sm:$0xff]
        %v2700 = vld [vmem:[%s2697 + $0x10] sm:$0xff]
        %v2701 = vld [vmem:[%s2697 + $0x18] sm:$0xff]
        %s2702 = scalar_lea.vmem [#allocation8], 160
        %v2703 = vld [vmem:[%s2702] sm:$0xff]
        %v2704 = vld [vmem:[%s2702 + $0x8] sm:$0xff]
        %v2705 = vld [vmem:[%s2702 + $0x10] sm:$0xff]
        %v2706 = vld [vmem:[%s2702 + $0x18] sm:$0xff]
        %2707 = vrot.lane.b32.xlu0 %v2102, 127
        %v2708 = vpop.permute.xlu0 %2707
        %2709 = vrot.lane.b32.xlu0 %v2103, 127
        %v2710 = vpop.permute.xlu0 %2709
        %2711 = vrot.lane.b32.xlu0 %v2104, 127
        %v2712 = vpop.permute.xlu0 %2711
        %2713 = vrot.lane.b32.xlu0 %v2105, 127
        %v2714 = vpop.permute.xlu0 %2713
        %2715 = vrot.lane.b32.xlu0 %v2106, 127
        %v2716 = vpop.permute.xlu0 %2715
        %2717 = vrot.lane.b32.xlu0 %v2107, 127
        %v2718 = vpop.permute.xlu0 %2717
        %2719 = vrot.lane.b32.xlu0 %v2108, 127
        %v2720 = vpop.permute.xlu0 %2719
        %2721 = vrot.lane.b32.xlu0 %v2109, 127
        %v2722 = vpop.permute.xlu0 %2721
        %2723 = vrot.lane.b32.xlu0 %v2110, 127
        %v2724 = vpop.permute.xlu0 %2723
        %2725 = vrot.lane.b32.xlu0 %v2111, 127
        %v2726 = vpop.permute.xlu0 %2725
        %2727 = vrot.lane.b32.xlu0 %v2112, 127
        %v2728 = vpop.permute.xlu0 %2727
        %2729 = vrot.lane.b32.xlu0 %v2113, 127
        %v2730 = vpop.permute.xlu0 %2729
        %v2731 = vsel %vm1292, %v2708, %v2710
        %v2732 = vsel %vm1292, %v2710, %v2712
        %v2733 = vsel %vm1292, %v2714, %v2716
        %v2734 = vsel %vm1292, %v2716, %v2718
        %v2735 = vsel %vm1292, %v2720, %v2722
        %v2736 = vsel %vm1292, %v2722, %v2724
        %v2737 = vsel %vm1292, %v2726, %v2728
        %v2738 = vsel %vm1292, %v2728, %v2730
        %v2748 = vsel %vm400, %v2703, 0
        %v2751 = vsel %vm400, %v2704, 0
        %v2754 = vsel %vm400, %v2705, 0
        %v2757 = vsel %vm400, %v2706, 0
        %2759 = vmatprep.subr.mxu0 0.0
        %2760 = vmatpush1.msra.mxu0 0.0
        %2761 = vmatprep.subr.mxu0 0.0
        %2762 = vmatpush1.msra.mxu0 0.0
        %2763 = vmatprep.subr.mxu0 0.0
        %2764 = vmatpush1.msra.mxu0 0.0
        %2765 = vmatprep.subr.mxu0 0.0
        %2766 = vmatpush1.msra.mxu0 0.0
        %2767 = vmatprep.subr.mxu0 0.0
        %2768 = vmatpush1.msra.mxu0 0.0
        %2769 = vmatprep.subr.mxu0 0.0
        %2770 = vmatpush1.msra.mxu0 0.0
        %2771 = vmatprep.subr.mxu0 0.0
        %2772 = vmatpush1.msra.mxu0 0.0
        %2773 = vmatprep.subr.mxu0 0.0
        %2774 = vmatpush1.msra.mxu0 0.0
        %2775 = vmatprep.subr.mxu0 0.0
        %2776 = vmatpush1.msra.mxu0 0.0
        %2777 = vmatprep.subr.mxu0 0.0
        %2778 = vmatpush1.msra.mxu0 0.0
        %2779 = vmatprep.subr.mxu0 0.0
        %2780 = vmatpush1.msra.mxu0 0.0
        %2781 = vmatprep.subr.mxu0 0.0
        %2782 = vmatpush1.msra.mxu0 0.0
        %2783 = vmatprep.subr.mxu0 %v2738
        %2784 = vmatpush1.msra.mxu0 %v2737
        %2785 = vmatprep.subr.mxu0 %v2736
        %2786 = vmatpush1.msra.mxu0 %v2735
        %2787 = vmatprep.subr.mxu0 %v2734
        %2788 = vmatpush1.msra.mxu0 %v2733
        %2789 = vmatprep.subr.mxu0 %v2732
        %2790 = vmatpush1.msra.mxu0 %v2731
        %2791 = vmatprep.subr.mxu0 0.0
        %2792 = vmatpush2.msra.mxu0 0.0
        %2793 = vmatprep.subr.mxu0 0.0
        %2794 = vmatpush2.msra.mxu0 0.0
        %2795 = vmatprep.subr.mxu0 0.0
        %2796 = vmatpush2.msra.mxu0 0.0
        %2797 = vmatprep.subr.mxu0 0.0
        %2798 = vmatpush2.msra.mxu0 0.0
        %2799 = vmatprep.subr.mxu0 0.0
        %2800 = vmatpush2.msra.mxu0 0.0
        %2801 = vmatprep.subr.mxu0 0.0
        %2802 = vmatpush2.msra.mxu0 0.0
        %2803 = vmatprep.subr.mxu0 0.0
        %2804 = vmatpush2.msra.mxu0 0.0
        %2805 = vmatprep.subr.mxu0 0.0
        %2806 = vmatpush2.msra.mxu0 0.0
        %2807 = vmatprep.subr.mxu0 0.0
        %2808 = vmatpush2.msra.mxu0 0.0
        %2809 = vmatprep.subr.mxu0 0.0
        %2810 = vmatpush2.msra.mxu0 0.0
        %2811 = vmatprep.subr.mxu0 0.0
        %2812 = vmatpush2.msra.mxu0 0.0
        %2813 = vmatprep.subr.mxu0 0.0
        %2814 = vmatpush2.msra.mxu0 0.0
        %2815 = vmatprep.subr.mxu0 0.0
        %2816 = vmatpush2.msra.mxu0 0.0
        %2817 = vmatprep.subr.mxu0 0.0
        %2818 = vmatpush2.msra.mxu0 0.0
        %2819 = vmatprep.subr.mxu0 0.0
        %2820 = vmatpush2.msra.mxu0 0.0
        %2821 = vmatprep.subr.mxu0 0.0
        %2822 = vmatpush2.msra.mxu0 0.0
        %2823 = vmatprep.mubr.f32.mxu0 0.0
        %2824 = vmatmul.mubr.f32.gmra.mxu0 %v2748
        %v2825 = vpop.f32.mrf.mxu0
        %v2826 = vadd.f32 0.0, %v2825
        %v2827 = vpop.f32.mrf.mxu0
        %v2828 = vadd.f32 0.0, %v2827
        %2829 = vmatprep.mubr.f32.mxu0 0.0
        %2830 = vmatmul.mubr.f32.gmra.mxu0 %v2751
        %v2831 = vpop.f32.mrf.mxu0
        %v2832 = vadd.f32 0.0, %v2831
        %v2833 = vpop.f32.mrf.mxu0
        %v2834 = vadd.f32 0.0, %v2833
        %2835 = vmatprep.mubr.f32.mxu0 0.0
        %2836 = vmatmul.mubr.f32.gmra.mxu0 %v2754
        %v2837 = vpop.f32.mrf.mxu0
        %v2838 = vadd.f32 0.0, %v2837
        %v2839 = vpop.f32.mrf.mxu0
        %v2840 = vadd.f32 0.0, %v2839
        %2841 = vmatprep.mubr.f32.mxu0 0.0
        %2842 = vmatmul.mubr.f32.gmra.mxu0 %v2757
        %v2843 = vpop.f32.mrf.mxu0
        %v2844 = vadd.f32 0.0, %v2843
        %v2845 = vpop.f32.mrf.mxu0
        %v2846 = vadd.f32 0.0, %v2845
        %2847 = vdwg.mxu0
        %2848 = vrot.lane.b32.xlu0 %v1786, 15
        %v2849 = vpop.permute.xlu0 %2848
        %2850 = vrot.lane.b32.xlu0 %v1787, 15
        %v2851 = vpop.permute.xlu0 %2850
        %2852 = vrot.lane.b32.xlu0 %v1788, 15
        %v2853 = vpop.permute.xlu0 %2852
        %2854 = vrot.lane.b32.xlu0 %v1789, 15
        %v2855 = vpop.permute.xlu0 %2854
        %2856 = vrot.lane.b32.xlu0 %v1790, 15
        %v2857 = vpop.permute.xlu0 %2856
        %2858 = vrot.lane.b32.xlu0 %v1791, 15
        %v2859 = vpop.permute.xlu0 %2858
        %2860 = vrot.lane.b32.xlu0 %v1792, 15
        %v2861 = vpop.permute.xlu0 %2860
        %2862 = vrot.lane.b32.xlu0 %v1793, 15
        %v2863 = vpop.permute.xlu0 %2862
        %2864 = vrot.lane.b32.xlu0 %v1794, 15
        %v2865 = vpop.permute.xlu0 %2864
        %2866 = vrot.lane.b32.xlu0 %v1795, 15
        %v2867 = vpop.permute.xlu0 %2866
        %2868 = vrot.lane.b32.xlu0 %v1796, 15
        %v2869 = vpop.permute.xlu0 %2868
        %2870 = vrot.lane.b32.xlu0 %v1797, 15
        %v2871 = vpop.permute.xlu0 %2870
        %v2872 = vsel %vm1434, %v2849, %v2851
        %v2873 = vsel %vm1434, %v2851, %v2853
        %v2874 = vsel %vm1434, %v2855, %v2857
        %v2875 = vsel %vm1434, %v2857, %v2859
        %v2876 = vsel %vm1434, %v2861, %v2863
        %v2877 = vsel %vm1434, %v2863, %v2865
        %v2878 = vsel %vm1434, %v2867, %v2869
        %v2879 = vsel %vm1434, %v2869, %v2871
        %v2889 = vsel %vm400, %v2698, 0
        %v2892 = vsel %vm400, %v2699, 0
        %v2895 = vsel %vm400, %v2700, 0
        %v2898 = vsel %vm400, %v2701, 0
        %2900 = vmatprep.subr.mxu0 0.0
        %2901 = vmatpush1.msra.mxu0 0.0
        %2902 = vmatprep.subr.mxu0 0.0
        %2903 = vmatpush1.msra.mxu0 0.0
        %2904 = vmatprep.subr.mxu0 0.0
        %2905 = vmatpush1.msra.mxu0 0.0
        %2906 = vmatprep.subr.mxu0 0.0
        %2907 = vmatpush1.msra.mxu0 0.0
        %2908 = vmatprep.subr.mxu0 0.0
        %2909 = vmatpush1.msra.mxu0 0.0
        %2910 = vmatprep.subr.mxu0 0.0
        %2911 = vmatpush1.msra.mxu0 0.0
        %2912 = vmatprep.subr.mxu0 0.0
        %2913 = vmatpush1.msra.mxu0 0.0
        %2914 = vmatprep.subr.mxu0 0.0
        %2915 = vmatpush1.msra.mxu0 0.0
        %2916 = vmatprep.subr.mxu0 0.0
        %2917 = vmatpush1.msra.mxu0 0.0
        %2918 = vmatprep.subr.mxu0 0.0
        %2919 = vmatpush1.msra.mxu0 0.0
        %2920 = vmatprep.subr.mxu0 0.0
        %2921 = vmatpush1.msra.mxu0 0.0
        %2922 = vmatprep.subr.mxu0 0.0
        %2923 = vmatpush1.msra.mxu0 0.0
        %2924 = vmatprep.subr.mxu0 %v2879
        %2925 = vmatpush1.msra.mxu0 %v2878
        %2926 = vmatprep.subr.mxu0 %v2877
        %2927 = vmatpush1.msra.mxu0 %v2876
        %2928 = vmatprep.subr.mxu0 %v2875
        %2929 = vmatpush1.msra.mxu0 %v2874
        %2930 = vmatprep.subr.mxu0 %v2873
        %2931 = vmatpush1.msra.mxu0 %v2872
        %2932 = vmatprep.subr.mxu0 0.0
        %2933 = vmatpush2.msra.mxu0 0.0
        %2934 = vmatprep.subr.mxu0 0.0
        %2935 = vmatpush2.msra.mxu0 0.0
        %2936 = vmatprep.subr.mxu0 0.0
        %2937 = vmatpush2.msra.mxu0 0.0
        %2938 = vmatprep.subr.mxu0 0.0
        %2939 = vmatpush2.msra.mxu0 0.0
        %2940 = vmatprep.subr.mxu0 0.0
        %2941 = vmatpush2.msra.mxu0 0.0
        %2942 = vmatprep.subr.mxu0 0.0
        %2943 = vmatpush2.msra.mxu0 0.0
        %2944 = vmatprep.subr.mxu0 0.0
        %2945 = vmatpush2.msra.mxu0 0.0
        %2946 = vmatprep.subr.mxu0 0.0
        %2947 = vmatpush2.msra.mxu0 0.0
        %2948 = vmatprep.subr.mxu0 0.0
        %2949 = vmatpush2.msra.mxu0 0.0
        %2950 = vmatprep.subr.mxu0 0.0
        %2951 = vmatpush2.msra.mxu0 0.0
        %2952 = vmatprep.subr.mxu0 0.0
        %2953 = vmatpush2.msra.mxu0 0.0
        %2954 = vmatprep.subr.mxu0 0.0
        %2955 = vmatpush2.msra.mxu0 0.0
        %2956 = vmatprep.subr.mxu0 0.0
        %2957 = vmatpush2.msra.mxu0 0.0
        %2958 = vmatprep.subr.mxu0 0.0
        %2959 = vmatpush2.msra.mxu0 0.0
        %2960 = vmatprep.subr.mxu0 0.0
        %2961 = vmatpush2.msra.mxu0 0.0
        %2962 = vmatprep.subr.mxu0 0.0
        %2963 = vmatpush2.msra.mxu0 0.0
        %2964 = vmatprep.mubr.f32.mxu0 0.0
        %2965 = vmatmul.mubr.f32.gmra.mxu0 %v2889
        %v2966 = vpop.f32.mrf.mxu0
        %v2967 = vadd.f32 %v2826, %v2966
        %v2968 = vpop.f32.mrf.mxu0
        %v2969 = vadd.f32 %v2828, %v2968
        %2970 = vmatprep.mubr.f32.mxu0 0.0
        %2971 = vmatmul.mubr.f32.gmra.mxu0 %v2892
        %v2972 = vpop.f32.mrf.mxu0
        %v2973 = vadd.f32 %v2832, %v2972
        %v2974 = vpop.f32.mrf.mxu0
        %v2975 = vadd.f32 %v2834, %v2974
        %2976 = vmatprep.mubr.f32.mxu0 0.0
        %2977 = vmatmul.mubr.f32.gmra.mxu0 %v2895
        %v2978 = vpop.f32.mrf.mxu0
        %v2979 = vadd.f32 %v2838, %v2978
        %v2980 = vpop.f32.mrf.mxu0
        %v2981 = vadd.f32 %v2840, %v2980
        %2982 = vmatprep.mubr.f32.mxu0 0.0
        %2983 = vmatmul.mubr.f32.gmra.mxu0 %v2898
        %v2984 = vpop.f32.mrf.mxu0
        %v2985 = vadd.f32 %v2844, %v2984
        %v2986 = vpop.f32.mrf.mxu0
        %v2987 = vadd.f32 %v2846, %v2986
        %2988 = vdwg.mxu0
        %s2989 = scalar_lea.vmem [#allocation8], 256
        %v2990 = vld [vmem:[%s2989] sm:$0xff]
        %v2991 = vld [vmem:[%s2989 + $0x8] sm:$0xff]
        %v2992 = vld [vmem:[%s2989 + $0x10] sm:$0xff]
        %v2993 = vld [vmem:[%s2989 + $0x18] sm:$0xff]
        %2994 = vrot.lane.b32.xlu0 %v2102, 111
        %v2995 = vpop.permute.xlu0 %2994
        %2996 = vrot.lane.b32.xlu0 %v2103, 111
        %v2997 = vpop.permute.xlu0 %2996
        %2998 = vrot.lane.b32.xlu0 %v2104, 111
        %v2999 = vpop.permute.xlu0 %2998
        %3000 = vrot.lane.b32.xlu0 %v2105, 111
        %v3001 = vpop.permute.xlu0 %3000
        %3002 = vrot.lane.b32.xlu0 %v2106, 111
        %v3003 = vpop.permute.xlu0 %3002
        %3004 = vrot.lane.b32.xlu0 %v2107, 111
        %v3005 = vpop.permute.xlu0 %3004
        %3006 = vrot.lane.b32.xlu0 %v2108, 111
        %v3007 = vpop.permute.xlu0 %3006
        %3008 = vrot.lane.b32.xlu0 %v2109, 111
        %v3009 = vpop.permute.xlu0 %3008
        %3010 = vrot.lane.b32.xlu0 %v2110, 111
        %v3011 = vpop.permute.xlu0 %3010
        %3012 = vrot.lane.b32.xlu0 %v2111, 111
        %v3013 = vpop.permute.xlu0 %3012
        %3014 = vrot.lane.b32.xlu0 %v2112, 111
        %v3015 = vpop.permute.xlu0 %3014
        %3016 = vrot.lane.b32.xlu0 %v2113, 111
        %v3017 = vpop.permute.xlu0 %3016
        %v3018 = vsel %vm1581, %v2995, %v2997
        %v3019 = vsel %vm1581, %v2997, %v2999
        %v3020 = vsel %vm1581, %v3001, %v3003
        %v3021 = vsel %vm1581, %v3003, %v3005
        %v3022 = vsel %vm1581, %v3007, %v3009
        %v3023 = vsel %vm1581, %v3009, %v3011
        %v3024 = vsel %vm1581, %v3013, %v3015
        %v3025 = vsel %vm1581, %v3015, %v3017
        %v3035 = vsel %vm400, %v2990, 0
        %v3038 = vsel %vm400, %v2991, 0
        %v3041 = vsel %vm400, %v2992, 0
        %v3044 = vsel %vm400, %v2993, 0
        %3046 = vmatprep.subr.mxu0 0.0
        %3047 = vmatpush1.msra.mxu0 0.0
        %3048 = vmatprep.subr.mxu0 0.0
        %3049 = vmatpush1.msra.mxu0 0.0
        %3050 = vmatprep.subr.mxu0 0.0
        %3051 = vmatpush1.msra.mxu0 0.0
        %3052 = vmatprep.subr.mxu0 0.0
        %3053 = vmatpush1.msra.mxu0 0.0
        %3054 = vmatprep.subr.mxu0 0.0
        %3055 = vmatpush1.msra.mxu0 0.0
        %3056 = vmatprep.subr.mxu0 0.0
        %3057 = vmatpush1.msra.mxu0 0.0
        %3058 = vmatprep.subr.mxu0 0.0
        %3059 = vmatpush1.msra.mxu0 0.0
        %3060 = vmatprep.subr.mxu0 0.0
        %3061 = vmatpush1.msra.mxu0 0.0
        %3062 = vmatprep.subr.mxu0 0.0
        %3063 = vmatpush1.msra.mxu0 0.0
        %3064 = vmatprep.subr.mxu0 0.0
        %3065 = vmatpush1.msra.mxu0 0.0
        %3066 = vmatprep.subr.mxu0 0.0
        %3067 = vmatpush1.msra.mxu0 0.0
        %3068 = vmatprep.subr.mxu0 0.0
        %3069 = vmatpush1.msra.mxu0 0.0
        %3070 = vmatprep.subr.mxu0 %v3025
        %3071 = vmatpush1.msra.mxu0 %v3024
        %3072 = vmatprep.subr.mxu0 %v3023
        %3073 = vmatpush1.msra.mxu0 %v3022
        %3074 = vmatprep.subr.mxu0 %v3021
        %3075 = vmatpush1.msra.mxu0 %v3020
        %3076 = vmatprep.subr.mxu0 %v3019
        %3077 = vmatpush1.msra.mxu0 %v3018
        %3078 = vmatprep.subr.mxu0 0.0
        %3079 = vmatpush2.msra.mxu0 0.0
        %3080 = vmatprep.subr.mxu0 0.0
        %3081 = vmatpush2.msra.mxu0 0.0
        %3082 = vmatprep.subr.mxu0 0.0
        %3083 = vmatpush2.msra.mxu0 0.0
        %3084 = vmatprep.subr.mxu0 0.0
        %3085 = vmatpush2.msra.mxu0 0.0
        %3086 = vmatprep.subr.mxu0 0.0
        %3087 = vmatpush2.msra.mxu0 0.0
        %3088 = vmatprep.subr.mxu0 0.0
        %3089 = vmatpush2.msra.mxu0 0.0
        %3090 = vmatprep.subr.mxu0 0.0
        %3091 = vmatpush2.msra.mxu0 0.0
        %3092 = vmatprep.subr.mxu0 0.0
        %3093 = vmatpush2.msra.mxu0 0.0
        %3094 = vmatprep.subr.mxu0 0.0
        %3095 = vmatpush2.msra.mxu0 0.0
        %3096 = vmatprep.subr.mxu0 0.0
        %3097 = vmatpush2.msra.mxu0 0.0
        %3098 = vmatprep.subr.mxu0 0.0
        %3099 = vmatpush2.msra.mxu0 0.0
        %3100 = vmatprep.subr.mxu0 0.0
        %3101 = vmatpush2.msra.mxu0 0.0
        %3102 = vmatprep.subr.mxu0 0.0
        %3103 = vmatpush2.msra.mxu0 0.0
        %3104 = vmatprep.subr.mxu0 0.0
        %3105 = vmatpush2.msra.mxu0 0.0
        %3106 = vmatprep.subr.mxu0 0.0
        %3107 = vmatpush2.msra.mxu0 0.0
        %3108 = vmatprep.subr.mxu0 0.0
        %3109 = vmatpush2.msra.mxu0 0.0
        %3110 = vmatprep.mubr.f32.mxu0 0.0
        %3111 = vmatmul.mubr.f32.gmra.mxu0 %v3035
        %v3112 = vpop.f32.mrf.mxu0
        %v3113 = vadd.f32 0.0, %v3112
        %v3114 = vpop.f32.mrf.mxu0
        %v3115 = vadd.f32 0.0, %v3114
        %3116 = vmatprep.mubr.f32.mxu0 0.0
        %3117 = vmatmul.mubr.f32.gmra.mxu0 %v3038
        %v3118 = vpop.f32.mrf.mxu0
        %v3119 = vadd.f32 0.0, %v3118
        %v3120 = vpop.f32.mrf.mxu0
        %v3121 = vadd.f32 0.0, %v3120
        %3122 = vmatprep.mubr.f32.mxu0 0.0
        %3123 = vmatmul.mubr.f32.gmra.mxu0 %v3041
        %v3124 = vpop.f32.mrf.mxu0
        %v3125 = vadd.f32 0.0, %v3124
        %v3126 = vpop.f32.mrf.mxu0
        %v3127 = vadd.f32 0.0, %v3126
        %3128 = vmatprep.mubr.f32.mxu0 0.0
        %3129 = vmatmul.mubr.f32.gmra.mxu0 %v3044
        %v3130 = vpop.f32.mrf.mxu0
        %v3131 = vadd.f32 0.0, %v3130
        %v3132 = vpop.f32.mrf.mxu0
        %v3133 = vadd.f32 0.0, %v3132
        %3134 = vdwg.mxu0
        %v3135 = vadd.f32 %v2967, %v3113
        %v3136 = vadd.f32 %v2969, %v3115
        %v3137 = vadd.f32 %v2973, %v3119
        %v3138 = vadd.f32 %v2975, %v3121
        %v3139 = vadd.f32 %v2979, %v3125
        %v3140 = vadd.f32 %v2981, %v3127
        %v3141 = vadd.f32 %v2985, %v3131
        %v3142 = vadd.f32 %v2987, %v3133
        %v3143 = vmul.f32 %v3135, %v1711
        %v3144 = vmul.f32 %v3136, %v1715
        %v3145 = vmul.f32 %v3137, %v1711
        %v3146 = vmul.f32 %v3138, %v1715
        %v3147 = vmul.f32 %v3139, %v1711
        %v3148 = vmul.f32 %v3140, %v1715
        %v3149 = vmul.f32 %v3141, %v1711
        %v3150 = vmul.f32 %v3142, %v1715
        %v3151 = vadd.f32 %v2689, %v3143
        %v3152 = vadd.f32 %v2690, %v3144
        %v3153 = vadd.f32 %v2691, %v3145
        %v3154 = vadd.f32 %v2692, %v3146
        %v3155 = vadd.f32 %v2693, %v3147
        %v3156 = vadd.f32 %v2694, %v3148
        %v3157 = vadd.f32 %v2695, %v3149
        %v3158 = vadd.f32 %v2696, %v3150
        %v3159 = vld [vmem:[%s4] sm:$0xff]
        %v3160 = vld [vmem:[%s4 + $0x8] sm:$0xff]
        %v3161 = vld [vmem:[%s4 + $0x10] sm:$0xff]
        %v3162 = vld [vmem:[%s4 + $0x18] sm:$0xff]
        %3164 = vset.pattern.permute.xlu0 0
        %3165 = vperm.xlu0 %3164, %v3159
        %v3166 = vpop.permute.xlu0 %3165
        %3169 = vset.pattern.permute.xlu0 0
        %3170 = vperm.xlu0 %3169, %v3160
        %v3171 = vpop.permute.xlu0 %3170
        %3174 = vset.pattern.permute.xlu0 0
        %3175 = vperm.xlu0 %3174, %v3161
        %v3176 = vpop.permute.xlu0 %3175
        %3179 = vset.pattern.permute.xlu0 0
        %3180 = vperm.xlu0 %3179, %v3162
        %v3181 = vpop.permute.xlu0 %3180
        %v3183 = vadd.f32 %v3151, %v3166
        %v3184 = vadd.f32 %v3152, %v3166
        %v3185 = vadd.f32 %v3153, %v3171
        %v3186 = vadd.f32 %v3154, %v3171
        %v3187 = vadd.f32 %v3155, %v3176
        %v3188 = vadd.f32 %v3156, %v3176
        %v3189 = vadd.f32 %v3157, %v3181
        %v3190 = vadd.f32 %v3158, %v3181
        %3191 = vst [vmem:[%s298] sm:$0xff] %v3183
        %3192 = vst [vmem:[%s298 + $0x8] sm:$0xff] %v3184
        %3193 = vst [vmem:[%s298 + $0x10] sm:$0xff] %v3185
        %3194 = vst [vmem:[%s298 + $0x18] sm:$0xff] %v3186
        %3195 = vst [vmem:[%s298 + $0x20] sm:$0xff] %v3187
        %3196 = vst [vmem:[%s298 + $0x28] sm:$0xff] %v3188
        %3197 = vst [vmem:[%s298 + $0x30] sm:$0xff] %v3189
        %3198 = vst [vmem:[%s298 + $0x38] sm:$0xff] %v3190
        %s3199 = sand.u32 %s163, 1
        %s3200 = scalar_lea.sflag [#allocation5], %s3199
        %s3201 = sand.u32 %s163, 1
        %s3202 = smul.addr %s3201, 64
        %s3203 = scalar_lea.vmem [#allocation9], %s3202
        // Predicated region
        $region57: #{tpu_custom_call.1} parent=43 // pred_check
          %p3204 = pneg %p173
        $region58: #{tpu_custom_call.1} parent=43 // pred_check_branch
          %3206 = sbr.rel (%p3204) target = $region60
        $region59: #{tpu_custom_call.1} parent=43 // pred_region
          %s3208 = ssub.s32 1024, 1024
          %3209 = vsyncadd %s3200, %s3208
          %s3210 = smul.addr %s24, 8
          %s3211 = smul.addr %s3210, 128
          %s3212 = scalar_lea.hbm %s6, %s3211
          %s3213 = sshll.u32 %s3203, 4
          %s3214 = int_to_ptr.vmem [resolvable:$true] %s3213
          %3219 = dma.vmem_to_hbm [thread:$0]  %s3214, 1024, %s3212, %s3200, 256, 256, 16
        $region60: #{tpu_custom_call.1} parent=43 // pred_fallthru
          _
      $region44: #{tpu_custom_call.1} parent=5 // pred_fallthru
        _
      %p3220 = scmp.le.s32.totalorder 2, %s19
      // Predicated region
      $region61: #{tpu_custom_call.1} parent=5 // pred_check
        %p3221 = pneg %p3220
      $region62: #{tpu_custom_call.1} parent=5 // pred_check_branch
        %3223 = sbr.rel (%p3221) target = $region64
      $region63: #{tpu_custom_call.1} parent=5 // pred_region
        %s3224 = ssub.s32 %s19, 2
        // Predicated region
        $region65: #{tpu_custom_call.1} parent=63 // pred_check
          %p3225 = pneg %p179
        $region66: #{tpu_custom_call.1} parent=63 // pred_check_branch
          %3227 = sbr.rel (%p3225) target = $region68
        $region67: #{tpu_custom_call.1} parent=63 // pred_region
          %s3228 = sand.u32 %s164, 1
          %s3229 = scalar_lea.sflag [#allocation5], %s3228
          %s3230 = sand.u32 %s164, 1
          %s3231 = smul.addr %s3230, 64
          %s3232 = scalar_lea.vmem [#allocation9], %s3231
          %3233 = dma.done %s3229, 1024
        $region68: #{tpu_custom_call.1} parent=63 // pred_fallthru
          _
      $region64: #{tpu_custom_call.1} parent=5 // pred_fallthru
        _
    $region6: #{tpu_custom_call.1} parent=1 // loop_footer
      %s23 = sadd.s32 1, %s19
    $region7: #{tpu_custom_call.1} parent=1 // loop_footer_branch
      %18 = sbr.rel target = $region3
    $region8: #{tpu_custom_call.1} parent=1 // loop_exit
      _
    %3234 = vsyncpa [#allocation4], 1
    %s3235 = scalar_lea.sflag [#allocation4], 1
    %3236 = vsyncpa %s3235, 1
    %3237 = vsyncpa [#allocation7], 1
    %3238 = vsyncpa [#allocation5], 1
    %s3239 = scalar_lea.sflag [#allocation5], 1
    %3240 = vsyncpa %s3239, 1

</llo_original>
